<compile_context>
chip_gen: v7x
topology: tpu7x:2x2x1
jax: 0.10.0
libtpu: 0.0.40
codegen_flags: <defaults>
</compile_context>

<pallas_src>
import math
import functools

import jax
import jax.numpy as jnp
from jax import lax
from jax.experimental import pallas as pl
from jax.experimental.pallas import tpu as pltpu


# ---------------------------------------------------------------------------
# DETR-style sine positional encoding (plain JAX glue, all-valid mask).
# It is identical for every batch element, so callers build it with N=1.
# ---------------------------------------------------------------------------
def build_sine_pos_embed(N, C, H, W):
    num_pos_feats = C // 2
    temperature = 10000.0
    scale = 2.0 * math.pi
    eps = 1e-6

    not_mask = jnp.ones((N, H, W), jnp.float32)
    y_embed = jnp.cumsum(not_mask, axis=1)
    x_embed = jnp.cumsum(not_mask, axis=2)
    y_embed = y_embed / (y_embed[:, -1:, :] + eps) * scale
    x_embed = x_embed / (x_embed[:, :, -1:] + eps) * scale

    dim_t = jnp.arange(num_pos_feats, dtype=jnp.float32)
    dim_t = temperature ** (2.0 * jnp.floor_divide(dim_t, 2.0) / num_pos_feats)

    pos_x = x_embed[:, :, :, None] / dim_t
    pos_y = y_embed[:, :, :, None] / dim_t
    pos_x = jnp.stack(
        (jnp.sin(pos_x[..., 0::2]), jnp.cos(pos_x[..., 1::2])), axis=4
    ).reshape(N, H, W, num_pos_feats)
    pos_y = jnp.stack(
        (jnp.sin(pos_y[..., 0::2]), jnp.cos(pos_y[..., 1::2])), axis=4
    ).reshape(N, H, W, num_pos_feats)
    pos = jnp.concatenate((pos_y, pos_x), axis=3)  # (N, H, W, C)
    return pos.transpose(0, 3, 1, 2)               # (N, C, H, W)


def _pick_q_tile(S):
    """Largest query tile that is a multiple of 128 (or the full S)."""
    if S <= 512:
        return S
    for cand in (512, 256, 128):
        if S % cand == 0:
            return cand
    return S


# ---------------------------------------------------------------------------
# Pallas kernel: one grid step = (batch element, query tile).
#   src_f / pos_f : (1, C, S)  full sequence (K / V inputs), S on lanes
#   src_q / pos_q : (1, C, TQ) query tile
#   w_attn        : (4, C, C)  stacked [Wq, Wk, Wv, Wo]
#   vec_c         : (9, C)     stacked [bq, bk, bv, bo, g1, beta1, b2, g2, beta2]
#   w1/b1/w2      : FFN params
#   out           : (1, C, TQ) lane-dense output tile
#   ctx_ref       : (TQ, C) f32 VMEM scratch gathering per-head contexts
# ---------------------------------------------------------------------------
def encoder_layer_kernel(srcf_ref, posf_ref, srcq_ref, posq_ref,
                         wattn_ref, vec_ref, w1_ref, b1_ref, w2_ref,
                         out_ref, ctx_ref, *, nhead):
    f32 = jnp.float32

    x_all = srcf_ref[0].astype(f32).T     # (S, C)
    p_all = posf_ref[0].astype(f32).T     # (S, C)
    x_q = srcq_ref[0].astype(f32).T       # (TQ, C)
    p_q = posq_ref[0].astype(f32).T       # (TQ, C)

    S, C = x_all.shape
    dh = C // nhead
    scale = 1.0 / math.sqrt(dh)

    wq = wattn_ref[0]
    wk = wattn_ref[1]
    wv = wattn_ref[2]
    wo = wattn_ref[3]
    bq = vec_ref[0:1, :]
    bk = vec_ref[1:2, :]
    bv = vec_ref[2:3, :]
    bo = vec_ref[3:4, :]
    g1 = vec_ref[4:5, :]
    be1 = vec_ref[5:6, :]
    b2 = vec_ref[6:7, :]
    g2 = vec_ref[7:8, :]
    be2 = vec_ref[8:9, :]

    # --- fused full-width projections (contraction and output width = C) ---
    q = jnp.dot(x_q + p_q, wq, preferred_element_type=f32) + bq       # (TQ, C)
    k = jnp.dot(x_all + p_all, wk, preferred_element_type=f32) + bk   # (S, C)
    v = jnp.dot(x_all, wv, preferred_element_type=f32) + bv           # (S, C)

    # --- per-head scores / softmax / context (dh contraction is inherent) ---
    for h in range(nhead):
        sl = slice(h * dh, (h + 1) * dh)
        qh = q[:, sl]                      # (TQ, dh)
        kh = k[:, sl]                      # (S, dh)
        vh = v[:, sl]                      # (S, dh)
        s = lax.dot_general(qh, kh, (((1,), (1,)), ((), ())),
                            preferred_element_type=f32) * scale       # (TQ, S)
        m = jnp.max(s, axis=-1, keepdims=True)
        p = jnp.exp(s - m)
        p = p * pl.reciprocal(jnp.sum(p, axis=-1, keepdims=True), approx=True)
        ctx_ref[:, sl] = jnp.dot(p, vh, preferred_element_type=f32)   # (TQ, dh)

    # --- single fused output projection on concatenated heads ---
    attn = jnp.dot(ctx_ref[...], wo, preferred_element_type=f32) + bo  # (TQ, C)

    # --- residual + LayerNorm1 (post-norm) ---
    y = x_q + attn
    mu = jnp.mean(y, axis=-1, keepdims=True)
    var = jnp.mean((y - mu) ** 2, axis=-1, keepdims=True)
    y = (y - mu) * lax.rsqrt(var + 1e-5) * g1 + be1

    # --- feed-forward (relu) ---
    h1 = jnp.dot(y, w1_ref[...], preferred_element_type=f32) + b1_ref[...]
    h1 = jnp.maximum(h1, 0.0)
    ff = jnp.dot(h1, w2_ref[...], preferred_element_type=f32) + b2

    # --- residual + LayerNorm2 ---
    y = y + ff
    mu = jnp.mean(y, axis=-1, keepdims=True)
    var = jnp.mean((y - mu) ** 2, axis=-1, keepdims=True)
    y = (y - mu) * lax.rsqrt(var + 1e-5) * g2 + be2

    # lane-dense store: S/TQ on the lane axis
    out_ref[0] = y.T.astype(out_ref.dtype)


def _full_spec(shape):
    zeros = (0,) * len(shape)
    return pl.BlockSpec(shape, lambda b, q: zeros)


def reasoning_forward(feature, params, nhead):
    """feature: (N, C, H, W) float32 -> (N, C, H, W) float32."""
    N, C, H, W = feature.shape
    S = H * W
    TQ = _pick_q_tile(S)
    n_q = S // TQ
    DFF = params["w1"].shape[1]

    # NCHW -> (N, C, S): pure reshape, no HBM transpose passes.
    src = feature.reshape(N, C, S)
    # Positional embedding is batch-independent: build once for one element.
    pos = build_sine_pos_embed(1, C, H, W).reshape(1, C, S)

    # Consolidated parameter slabs (fewer DMA streams, all resident).
    w_attn = jnp.stack(
        [params["wq"], params["wk"], params["wv"], params["wo"]], axis=0)  # (4,C,C)
    vec_c = jnp.stack(
        [params["bq"], params["bk"], params["bv"], params["bo"],
         params["g1"], params["beta1"], params["b2"],
         params["g2"], params["beta2"]], axis=0)                            # (9,C)
    w1 = params["w1"]                    # (C, DFF)
    b1 = params["b1"].reshape(1, DFF)
    w2 = params["w2"]                    # (DFF, C)

    in_specs = [
        pl.BlockSpec((1, C, S), lambda b, q: (b, 0, 0)),    # src, full sequence
        pl.BlockSpec((1, C, S), lambda b, q: (0, 0, 0)),    # pos, full (shared)
        pl.BlockSpec((1, C, TQ), lambda b, q: (b, 0, q)),   # src, query tile
        pl.BlockSpec((1, C, TQ), lambda b, q: (0, 0, q)),   # pos, query tile
        _full_spec(w_attn.shape),
        _full_spec(vec_c.shape),
        _full_spec(w1.shape),
        _full_spec(b1.shape),
        _full_spec(w2.shape),
    ]

    out = pl.pallas_call(
        functools.partial(encoder_layer_kernel, nhead=nhead),
        out_shape=jax.ShapeDtypeStruct((N, C, S), jnp.float32),
        grid=(N, n_q),
        in_specs=in_specs,
        out_specs=pl.BlockSpec((1, C, TQ), lambda b, q: (b, 0, q)),
        scratch_shapes=[pltpu.VMEM((TQ, C), jnp.float32)],
        compiler_params=pltpu.CompilerParams(
            dimension_semantics=("parallel", "parallel"),
            vmem_limit_bytes=64 * 1024 * 1024),
    )(src, pos, src, pos, w_attn, vec_c, w1, b1, w2)

    # (N, C, S) -> (N, C, H, W)  ==  rearrange('(h w) n c -> n c h w')
    return out.reshape(N, C, H, W)


# ---------------------------------------------------------------------------
# Pure-JAX reference (mirrors PyTorch eval-mode semantics)
# ---------------------------------------------------------------------------
def _layernorm(x, g, b, eps=1e-5):
    mu = jnp.mean(x, axis=-1, keepdims=True)
    var = jnp.mean((x - mu) ** 2, axis=-1, keepdims=True)
    return (x - mu) / jnp.sqrt(var + eps) * g + b


def reference_forward(feature, params, nhead):
    N, C, H, W = feature.shape
    S = H * W
    dh = C // nhead
    scale = 1.0 / math.sqrt(dh)

    x = feature.reshape(N, C, S).transpose(0, 2, 1)
    pos = build_sine_pos_embed(N, C, H, W).reshape(N, C, S).transpose(0, 2, 1)

    qk_in = x + pos
    q = qk_in @ params["wq"] + params["bq"]
    k = qk_in @ params["wk"] + params["bk"]
    v = x @ params["wv"] + params["bv"]

    def split(t):
        return t.reshape(N, S, nhead, dh).transpose(0, 2, 1, 3)

    qh, kh, vh = split(q), split(k), split(v)
    scores = jnp.einsum("nhqd,nhkd->nhqk", qh, kh) * scale
    p = jax.nn.softmax(scores, axis=-1)
    attn = jnp.einsum("nhqk,nhkd->nhqd", p, vh).transpose(0, 2, 1, 3).reshape(N, S, C)
    attn = attn @ params["wo"] + params["bo"]

    x = _layernorm(x + attn, params["g1"], params["beta1"])
    ff = jax.nn.relu(x @ params["w1"] + params["b1"]) @ params["w2"] + params["b2"]
    x = _layernorm(x + ff, params["g2"], params["beta2"])
    return x.transpose(0, 2, 1).reshape(N, C, H, W)


# ---------------------------------------------------------------------------
if __name__ == "__main__":
    # Small shapes consistent with the module: d_model == channel dim C.
    N, C, H, W = 2, 32, 8, 8
    NHEAD = 4
    DFF = 64

    key = jax.random.PRNGKey(0)
    keys = jax.random.split(key, 16)

    def w(k, shape, s=0.05):
        return jax.random.normal(k, shape, jnp.float32) * s

    params = {
        "wq": w(keys[0], (C, C)), "bq": w(keys[1], (C,), 0.01),
        "wk": w(keys[2], (C, C)), "bk": w(keys[3], (C,), 0.01),
        "wv": w(keys[4], (C, C)), "bv": w(keys[5], (C,), 0.01),
        "wo": w(keys[6], (C, C)), "bo": w(keys[7], (C,), 0.01),
        "g1": jnp.ones((C,), jnp.float32), "beta1": jnp.zeros((C,), jnp.float32),
        "w1": w(keys[8], (C, DFF)), "b1": w(keys[9], (DFF,), 0.01),
        "w2": w(keys[10], (DFF, C)), "b2": w(keys[11], (C,), 0.01),
        "g2": jnp.ones((C,), jnp.float32), "beta2": jnp.zeros((C,), jnp.float32),
    }

    feature = jax.random.normal(keys[12], (N, C, H, W), jnp.float32)

    out = reasoning_forward(feature, params, NHEAD)
    out = jax.block_until_ready(out)

    ref = reference_forward(feature, params, NHEAD)
    assert out.shape == (N, C, H, W)
    # Tolerance is slightly loosened vs f32 exact because the softmax
    # denominator uses the EUP approximate reciprocal (pl.reciprocal approx).
    assert jnp.allclose(out, ref, rtol=2e-3, atol=2e-3), (
        f"max abs err {float(jnp.max(jnp.abs(out - ref)))}")

    print("KERNEL_OK")
</pallas_src>

<mosaic_0001>
module attributes {stable_mosaic.version = 11 : i64} {
  func.func @encoder_layer_kernel(%arg0: i32, %arg1: i32, %arg2: memref<1x32x64xf32, #tpu.memory_space<vmem>>, %arg3: memref<1x32x64xf32, #tpu.memory_space<vmem>>, %arg4: memref<1x32x64xf32, #tpu.memory_space<vmem>>, %arg5: memref<1x32x64xf32, #tpu.memory_space<vmem>>, %arg6: memref<4x32x32xf32, #tpu.memory_space<vmem>>, %arg7: memref<9x32xf32, #tpu.memory_space<vmem>>, %arg8: memref<32x64xf32, #tpu.memory_space<vmem>>, %arg9: memref<1x64xf32, #tpu.memory_space<vmem>>, %arg10: memref<64x32xf32, #tpu.memory_space<vmem>>, %arg11: memref<1x32x64xf32, #tpu.memory_space<vmem>>, %arg12: memref<64x32xf32, #tpu.memory_space<vmem>>) attributes {dimension_semantics = [#tpu.dimension_semantics<parallel>, #tpu.dimension_semantics<parallel>], iteration_bounds = array<i64: 2, 1>, scalar_prefetch = 0 : i64, scratch_operands = 1 : i64, tpu.core_type = #tpu.core_type<tc>, window_params = [{transform_indices = @transform_0, window_bounds = array<i64: 1, 32, 64>}, {pipeline_mode = #tpu.pipeline_mode<synchronous>, transform_indices = @transform_1, window_bounds = array<i64: 1, 32, 64>}, {transform_indices = @transform_2, window_bounds = array<i64: 1, 32, 64>}, {transform_indices = @transform_3, window_bounds = array<i64: 1, 32, 64>}, {pipeline_mode = #tpu.pipeline_mode<synchronous>, transform_indices = @transform_4, window_bounds = array<i64: 4, 32, 32>}, {pipeline_mode = #tpu.pipeline_mode<synchronous>, transform_indices = @transform_5, window_bounds = array<i64: 9, 32>}, {pipeline_mode = #tpu.pipeline_mode<synchronous>, transform_indices = @transform_6, window_bounds = array<i64: 32, 64>}, {pipeline_mode = #tpu.pipeline_mode<synchronous>, transform_indices = @transform_7, window_bounds = array<i64: 1, 64>}, {pipeline_mode = #tpu.pipeline_mode<synchronous>, transform_indices = @transform_8, window_bounds = array<i64: 64, 32>}, {transform_indices = @transform_9, window_bounds = array<i64: 1, 32, 64>}]} {
    %c0 = arith.constant 0 : index
    %c0_0 = arith.constant 0 : index
    %c0_1 = arith.constant 0 : index
    %0 = vector.load %arg2[%c0, %c0_0, %c0_1] : memref<1x32x64xf32, #tpu.memory_space<vmem>>, vector<1x32x64xf32>
    %1 = vector.shape_cast %0 : vector<1x32x64xf32> to vector<32x64xf32>
    %2 = tpu.transpose %1, [1, 0] : vector<32x64xf32> -> vector<64x32xf32>
    %c0_2 = arith.constant 0 : index
    %c0_3 = arith.constant 0 : index
    %c0_4 = arith.constant 0 : index
    %3 = vector.load %arg3[%c0_2, %c0_3, %c0_4] : memref<1x32x64xf32, #tpu.memory_space<vmem>>, vector<1x32x64xf32>
    %4 = vector.shape_cast %3 : vector<1x32x64xf32> to vector<32x64xf32>
    %5 = tpu.transpose %4, [1, 0] : vector<32x64xf32> -> vector<64x32xf32>
    %c0_5 = arith.constant 0 : index
    %c0_6 = arith.constant 0 : index
    %c0_7 = arith.constant 0 : index
    %6 = vector.load %arg4[%c0_5, %c0_6, %c0_7] : memref<1x32x64xf32, #tpu.memory_space<vmem>>, vector<1x32x64xf32>
    %7 = vector.shape_cast %6 : vector<1x32x64xf32> to vector<32x64xf32>
    %8 = tpu.transpose %7, [1, 0] : vector<32x64xf32> -> vector<64x32xf32>
    %c0_8 = arith.constant 0 : index
    %c0_9 = arith.constant 0 : index
    %c0_10 = arith.constant 0 : index
    %9 = vector.load %arg5[%c0_8, %c0_9, %c0_10] : memref<1x32x64xf32, #tpu.memory_space<vmem>>, vector<1x32x64xf32>
    %10 = vector.shape_cast %9 : vector<1x32x64xf32> to vector<32x64xf32>
    %11 = tpu.transpose %10, [1, 0] : vector<32x64xf32> -> vector<64x32xf32>
    %c0_11 = arith.constant 0 : index
    %c0_12 = arith.constant 0 : index
    %c0_13 = arith.constant 0 : index
    %12 = vector.load %arg6[%c0_11, %c0_12, %c0_13] : memref<4x32x32xf32, #tpu.memory_space<vmem>>, vector<1x32x32xf32>
    %13 = vector.shape_cast %12 : vector<1x32x32xf32> to vector<32x32xf32>
    %c1 = arith.constant 1 : index
    %c0_14 = arith.constant 0 : index
    %c0_15 = arith.constant 0 : index
    %14 = vector.load %arg6[%c1, %c0_14, %c0_15] : memref<4x32x32xf32, #tpu.memory_space<vmem>>, vector<1x32x32xf32>
    %15 = vector.shape_cast %14 : vector<1x32x32xf32> to vector<32x32xf32>
    %c2 = arith.constant 2 : index
    %c0_16 = arith.constant 0 : index
    %c0_17 = arith.constant 0 : index
    %16 = vector.load %arg6[%c2, %c0_16, %c0_17] : memref<4x32x32xf32, #tpu.memory_space<vmem>>, vector<1x32x32xf32>
    %17 = vector.shape_cast %16 : vector<1x32x32xf32> to vector<32x32xf32>
    %c3 = arith.constant 3 : index
    %c0_18 = arith.constant 0 : index
    %c0_19 = arith.constant 0 : index
    %18 = vector.load %arg6[%c3, %c0_18, %c0_19] : memref<4x32x32xf32, #tpu.memory_space<vmem>>, vector<1x32x32xf32>
    %19 = vector.shape_cast %18 : vector<1x32x32xf32> to vector<32x32xf32>
    %c0_20 = arith.constant 0 : index
    %c0_21 = arith.constant 0 : index
    %20 = vector.load %arg7[%c0_20, %c0_21] : memref<9x32xf32, #tpu.memory_space<vmem>>, vector<1x32xf32>
    %c1_22 = arith.constant 1 : index
    %c0_23 = arith.constant 0 : index
    %21 = vector.load %arg7[%c1_22, %c0_23] : memref<9x32xf32, #tpu.memory_space<vmem>>, vector<1x32xf32>
    %c2_24 = arith.constant 2 : index
    %c0_25 = arith.constant 0 : index
    %22 = vector.load %arg7[%c2_24, %c0_25] : memref<9x32xf32, #tpu.memory_space<vmem>>, vector<1x32xf32>
    %c3_26 = arith.constant 3 : index
    %c0_27 = arith.constant 0 : index
    %23 = vector.load %arg7[%c3_26, %c0_27] : memref<9x32xf32, #tpu.memory_space<vmem>>, vector<1x32xf32>
    %c4 = arith.constant 4 : index
    %c0_28 = arith.constant 0 : index
    %24 = vector.load %arg7[%c4, %c0_28] : memref<9x32xf32, #tpu.memory_space<vmem>>, vector<1x32xf32>
    %c5 = arith.constant 5 : index
    %c0_29 = arith.constant 0 : index
    %25 = vector.load %arg7[%c5, %c0_29] : memref<9x32xf32, #tpu.memory_space<vmem>>, vector<1x32xf32>
    %c6 = arith.constant 6 : index
    %c0_30 = arith.constant 0 : index
    %26 = vector.load %arg7[%c6, %c0_30] : memref<9x32xf32, #tpu.memory_space<vmem>>, vector<1x32xf32>
    %c7 = arith.constant 7 : index
    %c0_31 = arith.constant 0 : index
    %27 = vector.load %arg7[%c7, %c0_31] : memref<9x32xf32, #tpu.memory_space<vmem>>, vector<1x32xf32>
    %c8 = arith.constant 8 : index
    %c0_32 = arith.constant 0 : index
    %28 = vector.load %arg7[%c8, %c0_32] : memref<9x32xf32, #tpu.memory_space<vmem>>, vector<1x32xf32>
    %29 = arith.addf %8, %11 : vector<64x32xf32>
    %cst = arith.constant dense<0.000000e+00> : vector<64x32xf32>
    %30 = tpu.matmul %29, %13, %cst {dimension_numbers = #tpu.dot_dimension_numbers<[1], [0], [0], [1], [0, 0, 1, 1], [], []>} : vector<64x32xf32>, vector<32x32xf32>, vector<64x32xf32> -> vector<64x32xf32>
    %31 = vector.broadcast %20 : vector<1x32xf32> to vector<64x32xf32>
    %32 = arith.addf %30, %31 : vector<64x32xf32>
    %33 = arith.addf %2, %5 : vector<64x32xf32>
    %cst_33 = arith.constant dense<0.000000e+00> : vector<64x32xf32>
    %34 = tpu.matmul %33, %15, %cst_33 {dimension_numbers = #tpu.dot_dimension_numbers<[1], [0], [0], [1], [0, 0, 1, 1], [], []>} : vector<64x32xf32>, vector<32x32xf32>, vector<64x32xf32> -> vector<64x32xf32>
    %35 = vector.broadcast %21 : vector<1x32xf32> to vector<64x32xf32>
    %36 = arith.addf %34, %35 : vector<64x32xf32>
    %cst_34 = arith.constant dense<0.000000e+00> : vector<64x32xf32>
    %37 = tpu.matmul %2, %17, %cst_34 {dimension_numbers = #tpu.dot_dimension_numbers<[1], [0], [0], [1], [0, 0, 1, 1], [], []>} : vector<64x32xf32>, vector<32x32xf32>, vector<64x32xf32> -> vector<64x32xf32>
    %38 = vector.broadcast %22 : vector<1x32xf32> to vector<64x32xf32>
    %39 = arith.addf %37, %38 : vector<64x32xf32>
    %40 = vector.extract_strided_slice %32 {offsets = [0, 0], sizes = [64, 8], strides = [1, 1]} : vector<64x32xf32> to vector<64x8xf32>
    %41 = vector.extract_strided_slice %36 {offsets = [0, 0], sizes = [64, 8], strides = [1, 1]} : vector<64x32xf32> to vector<64x8xf32>
    %42 = vector.extract_strided_slice %39 {offsets = [0, 0], sizes = [64, 8], strides = [1, 1]} : vector<64x32xf32> to vector<64x8xf32>
    %cst_35 = arith.constant dense<0.000000e+00> : vector<64x64xf32>
    %43 = tpu.matmul %40, %41, %cst_35 {dimension_numbers = #tpu.dot_dimension_numbers<[1], [1], [0], [0], [0, 0, 1, 0], [], []>} : vector<64x8xf32>, vector<64x8xf32>, vector<64x64xf32> -> vector<64x64xf32>
    %cst_36 = arith.constant 0.353553385 : f32
    %44 = vector.broadcast %cst_36 : f32 to vector<64x64xf32>
    %45 = arith.mulf %43, %44 : vector<64x64xf32>
    %cst_37 = arith.constant dense<0xFF800000> : vector<64xf32>
    %46 = vector.multi_reduction <maximumf>, %45, %cst_37 [1] : vector<64x64xf32> to vector<64xf32>
    %47 = vector.shape_cast %46 : vector<64xf32> to vector<64x1xf32>
    %48 = vector.broadcast %47 : vector<64x1xf32> to vector<64x64xf32>
    %49 = arith.subf %45, %48 : vector<64x64xf32>
    %50 = math.exp %49 : vector<64x64xf32>
    %cst_38 = arith.constant dense<0.000000e+00> : vector<64xf32>
    %51 = vector.multi_reduction <add>, %50, %cst_38 [1] : vector<64x64xf32> to vector<64xf32>
    %52 = vector.shape_cast %51 : vector<64xf32> to vector<64x1xf32>
    %53 = tpu.reciprocal %52 {approx = true} : vector<64x1xf32> -> vector<64x1xf32>
    %54 = vector.broadcast %53 : vector<64x1xf32> to vector<64x64xf32>
    %55 = arith.mulf %50, %54 : vector<64x64xf32>
    %cst_39 = arith.constant dense<0.000000e+00> : vector<64x8xf32>
    %56 = tpu.matmul %55, %42, %cst_39 {dimension_numbers = #tpu.dot_dimension_numbers<[1], [0], [0], [1], [0, 0, 1, 1], [], []>} : vector<64x64xf32>, vector<64x8xf32>, vector<64x8xf32> -> vector<64x8xf32>
    %c0_40 = arith.constant 0 : index
    %c0_41 = arith.constant 0 : index
    %57 = vector.load %arg12[%c0_40, %c0_41] : memref<64x32xf32, #tpu.memory_space<vmem>>, vector<64x8xf32>
    tpu.vector_store %arg12[%c0_40, %c0_41], %56 {strides = array<i32>} : memref<64x32xf32, #tpu.memory_space<vmem>>, vector<64x8xf32>,
    %58 = vector.extract_strided_slice %32 {offsets = [0, 8], sizes = [64, 8], strides = [1, 1]} : vector<64x32xf32> to vector<64x8xf32>
    %59 = vector.extract_strided_slice %36 {offsets = [0, 8], sizes = [64, 8], strides = [1, 1]} : vector<64x32xf32> to vector<64x8xf32>
    %60 = vector.extract_strided_slice %39 {offsets = [0, 8], sizes = [64, 8], strides = [1, 1]} : vector<64x32xf32> to vector<64x8xf32>
    %cst_42 = arith.constant dense<0.000000e+00> : vector<64x64xf32>
    %61 = tpu.matmul %58, %59, %cst_42 {dimension_numbers = #tpu.dot_dimension_numbers<[1], [1], [0], [0], [0, 0, 1, 0], [], []>} : vector<64x8xf32>, vector<64x8xf32>, vector<64x64xf32> -> vector<64x64xf32>
    %cst_43 = arith.constant 0.353553385 : f32
    %62 = vector.broadcast %cst_43 : f32 to vector<64x64xf32>
    %63 = arith.mulf %61, %62 : vector<64x64xf32>
    %cst_44 = arith.constant dense<0xFF800000> : vector<64xf32>
    %64 = vector.multi_reduction <maximumf>, %63, %cst_44 [1] : vector<64x64xf32> to vector<64xf32>
    %65 = vector.shape_cast %64 : vector<64xf32> to vector<64x1xf32>
    %66 = vector.broadcast %65 : vector<64x1xf32> to vector<64x64xf32>
    %67 = arith.subf %63, %66 : vector<64x64xf32>
    %68 = math.exp %67 : vector<64x64xf32>
    %cst_45 = arith.constant dense<0.000000e+00> : vector<64xf32>
    %69 = vector.multi_reduction <add>, %68, %cst_45 [1] : vector<64x64xf32> to vector<64xf32>
    %70 = vector.shape_cast %69 : vector<64xf32> to vector<64x1xf32>
    %71 = tpu.reciprocal %70 {approx = true} : vector<64x1xf32> -> vector<64x1xf32>
    %72 = vector.broadcast %71 : vector<64x1xf32> to vector<64x64xf32>
    %73 = arith.mulf %68, %72 : vector<64x64xf32>
    %cst_46 = arith.constant dense<0.000000e+00> : vector<64x8xf32>
    %74 = tpu.matmul %73, %60, %cst_46 {dimension_numbers = #tpu.dot_dimension_numbers<[1], [0], [0], [1], [0, 0, 1, 1], [], []>} : vector<64x64xf32>, vector<64x8xf32>, vector<64x8xf32> -> vector<64x8xf32>
    %c0_47 = arith.constant 0 : index
    %c8_48 = arith.constant 8 : index
    %75 = vector.load %arg12[%c0_47, %c8_48] : memref<64x32xf32, #tpu.memory_space<vmem>>, vector<64x8xf32>
    tpu.vector_store %arg12[%c0_47, %c8_48], %74 {strides = array<i32>} : memref<64x32xf32, #tpu.memory_space<vmem>>, vector<64x8xf32>,
    %76 = vector.extract_strided_slice %32 {offsets = [0, 16], sizes = [64, 8], strides = [1, 1]} : vector<64x32xf32> to vector<64x8xf32>
    %77 = vector.extract_strided_slice %36 {offsets = [0, 16], sizes = [64, 8], strides = [1, 1]} : vector<64x32xf32> to vector<64x8xf32>
    %78 = vector.extract_strided_slice %39 {offsets = [0, 16], sizes = [64, 8], strides = [1, 1]} : vector<64x32xf32> to vector<64x8xf32>
    %cst_49 = arith.constant dense<0.000000e+00> : vector<64x64xf32>
    %79 = tpu.matmul %76, %77, %cst_49 {dimension_numbers = #tpu.dot_dimension_numbers<[1], [1], [0], [0], [0, 0, 1, 0], [], []>} : vector<64x8xf32>, vector<64x8xf32>, vector<64x64xf32> -> vector<64x64xf32>
    %cst_50 = arith.constant 0.353553385 : f32
    %80 = vector.broadcast %cst_50 : f32 to vector<64x64xf32>
    %81 = arith.mulf %79, %80 : vector<64x64xf32>
    %cst_51 = arith.constant dense<0xFF800000> : vector<64xf32>
    %82 = vector.multi_reduction <maximumf>, %81, %cst_51 [1] : vector<64x64xf32> to vector<64xf32>
    %83 = vector.shape_cast %82 : vector<64xf32> to vector<64x1xf32>
    %84 = vector.broadcast %83 : vector<64x1xf32> to vector<64x64xf32>
    %85 = arith.subf %81, %84 : vector<64x64xf32>
    %86 = math.exp %85 : vector<64x64xf32>
    %cst_52 = arith.constant dense<0.000000e+00> : vector<64xf32>
    %87 = vector.multi_reduction <add>, %86, %cst_52 [1] : vector<64x64xf32> to vector<64xf32>
    %88 = vector.shape_cast %87 : vector<64xf32> to vector<64x1xf32>
    %89 = tpu.reciprocal %88 {approx = true} : vector<64x1xf32> -> vector<64x1xf32>
    %90 = vector.broadcast %89 : vector<64x1xf32> to vector<64x64xf32>
    %91 = arith.mulf %86, %90 : vector<64x64xf32>
    %cst_53 = arith.constant dense<0.000000e+00> : vector<64x8xf32>
    %92 = tpu.matmul %91, %78, %cst_53 {dimension_numbers = #tpu.dot_dimension_numbers<[1], [0], [0], [1], [0, 0, 1, 1], [], []>} : vector<64x64xf32>, vector<64x8xf32>, vector<64x8xf32> -> vector<64x8xf32>
    %c0_54 = arith.constant 0 : index
    %c16 = arith.constant 16 : index
    %93 = vector.load %arg12[%c0_54, %c16] : memref<64x32xf32, #tpu.memory_space<vmem>>, vector<64x8xf32>
    tpu.vector_store %arg12[%c0_54, %c16], %92 {strides = array<i32>} : memref<64x32xf32, #tpu.memory_space<vmem>>, vector<64x8xf32>,
    %94 = vector.extract_strided_slice %32 {offsets = [0, 24], sizes = [64, 8], strides = [1, 1]} : vector<64x32xf32> to vector<64x8xf32>
    %95 = vector.extract_strided_slice %36 {offsets = [0, 24], sizes = [64, 8], strides = [1, 1]} : vector<64x32xf32> to vector<64x8xf32>
    %96 = vector.extract_strided_slice %39 {offsets = [0, 24], sizes = [64, 8], strides = [1, 1]} : vector<64x32xf32> to vector<64x8xf32>
    %cst_55 = arith.constant dense<0.000000e+00> : vector<64x64xf32>
    %97 = tpu.matmul %94, %95, %cst_55 {dimension_numbers = #tpu.dot_dimension_numbers<[1], [1], [0], [0], [0, 0, 1, 0], [], []>} : vector<64x8xf32>, vector<64x8xf32>, vector<64x64xf32> -> vector<64x64xf32>
    %cst_56 = arith.constant 0.353553385 : f32
    %98 = vector.broadcast %cst_56 : f32 to vector<64x64xf32>
    %99 = arith.mulf %97, %98 : vector<64x64xf32>
    %cst_57 = arith.constant dense<0xFF800000> : vector<64xf32>
    %100 = vector.multi_reduction <maximumf>, %99, %cst_57 [1] : vector<64x64xf32> to vector<64xf32>
    %101 = vector.shape_cast %100 : vector<64xf32> to vector<64x1xf32>
    %102 = vector.broadcast %101 : vector<64x1xf32> to vector<64x64xf32>
    %103 = arith.subf %99, %102 : vector<64x64xf32>
    %104 = math.exp %103 : vector<64x64xf32>
    %cst_58 = arith.constant dense<0.000000e+00> : vector<64xf32>
    %105 = vector.multi_reduction <add>, %104, %cst_58 [1] : vector<64x64xf32> to vector<64xf32>
    %106 = vector.shape_cast %105 : vector<64xf32> to vector<64x1xf32>
    %107 = tpu.reciprocal %106 {approx = true} : vector<64x1xf32> -> vector<64x1xf32>
    %108 = vector.broadcast %107 : vector<64x1xf32> to vector<64x64xf32>
    %109 = arith.mulf %104, %108 : vector<64x64xf32>
    %cst_59 = arith.constant dense<0.000000e+00> : vector<64x8xf32>
    %110 = tpu.matmul %109, %96, %cst_59 {dimension_numbers = #tpu.dot_dimension_numbers<[1], [0], [0], [1], [0, 0, 1, 1], [], []>} : vector<64x64xf32>, vector<64x8xf32>, vector<64x8xf32> -> vector<64x8xf32>
    %c0_60 = arith.constant 0 : index
    %c24 = arith.constant 24 : index
    %111 = vector.load %arg12[%c0_60, %c24] : memref<64x32xf32, #tpu.memory_space<vmem>>, vector<64x8xf32>
    tpu.vector_store %arg12[%c0_60, %c24], %110 {strides = array<i32>} : memref<64x32xf32, #tpu.memory_space<vmem>>, vector<64x8xf32>,
    %c0_61 = arith.constant 0 : index
    %c0_62 = arith.constant 0 : index
    %112 = vector.load %arg12[%c0_61, %c0_62] : memref<64x32xf32, #tpu.memory_space<vmem>>, vector<64x32xf32>
    %cst_63 = arith.constant dense<0.000000e+00> : vector<64x32xf32>
    %113 = tpu.matmul %112, %19, %cst_63 {dimension_numbers = #tpu.dot_dimension_numbers<[1], [0], [0], [1], [0, 0, 1, 1], [], []>} : vector<64x32xf32>, vector<32x32xf32>, vector<64x32xf32> -> vector<64x32xf32>
    %114 = vector.broadcast %23 : vector<1x32xf32> to vector<64x32xf32>
    %115 = arith.addf %113, %114 : vector<64x32xf32>
    %116 = arith.addf %8, %115 : vector<64x32xf32>
    %cst_64 = arith.constant dense<0.000000e+00> : vector<64xf32>
    %117 = vector.multi_reduction <add>, %116, %cst_64 [1] : vector<64x32xf32> to vector<64xf32>
    %118 = vector.shape_cast %117 : vector<64xf32> to vector<64x1xf32>
    %cst_65 = arith.constant 3.200000e+01 : f32
    %119 = vector.broadcast %cst_65 : f32 to vector<64x1xf32>
    %120 = arith.divf %118, %119 : vector<64x1xf32>
    %121 = vector.broadcast %120 : vector<64x1xf32> to vector<64x32xf32>
    %122 = arith.subf %116, %121 : vector<64x32xf32>
    %123 = arith.mulf %122, %122 : vector<64x32xf32>
    %cst_66 = arith.constant dense<0.000000e+00> : vector<64xf32>
    %124 = vector.multi_reduction <add>, %123, %cst_66 [1] : vector<64x32xf32> to vector<64xf32>
    %125 = vector.shape_cast %124 : vector<64xf32> to vector<64x1xf32>
    %cst_67 = arith.constant 3.200000e+01 : f32
    %126 = vector.broadcast %cst_67 : f32 to vector<64x1xf32>
    %127 = arith.divf %125, %126 : vector<64x1xf32>
    %128 = vector.broadcast %120 : vector<64x1xf32> to vector<64x32xf32>
    %129 = arith.subf %116, %128 : vector<64x32xf32>
    %cst_68 = arith.constant 9.99999974E-6 : f32
    %130 = vector.broadcast %cst_68 : f32 to vector<64x1xf32>
    %131 = arith.addf %127, %130 : vector<64x1xf32>
    %132 = math.rsqrt %131 : vector<64x1xf32>
    %133 = vector.broadcast %132 : vector<64x1xf32> to vector<64x32xf32>
    %134 = arith.mulf %129, %133 : vector<64x32xf32>
    %135 = vector.broadcast %24 : vector<1x32xf32> to vector<64x32xf32>
    %136 = arith.mulf %134, %135 : vector<64x32xf32>
    %137 = vector.broadcast %25 : vector<1x32xf32> to vector<64x32xf32>
    %138 = arith.addf %136, %137 : vector<64x32xf32>
    %c0_69 = arith.constant 0 : index
    %c0_70 = arith.constant 0 : index
    %139 = vector.load %arg8[%c0_69, %c0_70] : memref<32x64xf32, #tpu.memory_space<vmem>>, vector<32x64xf32>
    %cst_71 = arith.constant dense<0.000000e+00> : vector<64x64xf32>
    %140 = tpu.matmul %138, %139, %cst_71 {dimension_numbers = #tpu.dot_dimension_numbers<[1], [0], [0], [1], [0, 0, 1, 1], [], []>} : vector<64x32xf32>, vector<32x64xf32>, vector<64x64xf32> -> vector<64x64xf32>
    %c0_72 = arith.constant 0 : index
    %c0_73 = arith.constant 0 : index
    %141 = vector.load %arg9[%c0_72, %c0_73] : memref<1x64xf32, #tpu.memory_space<vmem>>, vector<1x64xf32>
    %142 = vector.broadcast %141 : vector<1x64xf32> to vector<64x64xf32>
    %143 = arith.addf %140, %142 : vector<64x64xf32>
    %cst_74 = arith.constant 0.000000e+00 : f32
    %144 = vector.broadcast %cst_74 : f32 to vector<64x64xf32>
    %145 = arith.maximumf %143, %144 : vector<64x64xf32>
    %c0_75 = arith.constant 0 : index
    %c0_76 = arith.constant 0 : index
    %146 = vector.load %arg10[%c0_75, %c0_76] : memref<64x32xf32, #tpu.memory_space<vmem>>, vector<64x32xf32>
    %cst_77 = arith.constant dense<0.000000e+00> : vector<64x32xf32>
    %147 = tpu.matmul %145, %146, %cst_77 {dimension_numbers = #tpu.dot_dimension_numbers<[1], [0], [0], [1], [0, 0, 1, 1], [], []>} : vector<64x64xf32>, vector<64x32xf32>, vector<64x32xf32> -> vector<64x32xf32>
    %148 = vector.broadcast %26 : vector<1x32xf32> to vector<64x32xf32>
    %149 = arith.addf %147, %148 : vector<64x32xf32>
    %150 = arith.addf %138, %149 : vector<64x32xf32>
    %cst_78 = arith.constant dense<0.000000e+00> : vector<64xf32>
    %151 = vector.multi_reduction <add>, %150, %cst_78 [1] : vector<64x32xf32> to vector<64xf32>
    %152 = vector.shape_cast %151 : vector<64xf32> to vector<64x1xf32>
    %cst_79 = arith.constant 3.200000e+01 : f32
    %153 = vector.broadcast %cst_79 : f32 to vector<64x1xf32>
    %154 = arith.divf %152, %153 : vector<64x1xf32>
    %155 = vector.broadcast %154 : vector<64x1xf32> to vector<64x32xf32>
    %156 = arith.subf %150, %155 : vector<64x32xf32>
    %157 = arith.mulf %156, %156 : vector<64x32xf32>
    %cst_80 = arith.constant dense<0.000000e+00> : vector<64xf32>
    %158 = vector.multi_reduction <add>, %157, %cst_80 [1] : vector<64x32xf32> to vector<64xf32>
    %159 = vector.shape_cast %158 : vector<64xf32> to vector<64x1xf32>
    %cst_81 = arith.constant 3.200000e+01 : f32
    %160 = vector.broadcast %cst_81 : f32 to vector<64x1xf32>
    %161 = arith.divf %159, %160 : vector<64x1xf32>
    %162 = vector.broadcast %154 : vector<64x1xf32> to vector<64x32xf32>
    %163 = arith.subf %150, %162 : vector<64x32xf32>
    %cst_82 = arith.constant 9.99999974E-6 : f32
    %164 = vector.broadcast %cst_82 : f32 to vector<64x1xf32>
    %165 = arith.addf %161, %164 : vector<64x1xf32>
    %166 = math.rsqrt %165 : vector<64x1xf32>
    %167 = vector.broadcast %166 : vector<64x1xf32> to vector<64x32xf32>
    %168 = arith.mulf %163, %167 : vector<64x32xf32>
    %169 = vector.broadcast %27 : vector<1x32xf32> to vector<64x32xf32>
    %170 = arith.mulf %168, %169 : vector<64x32xf32>
    %171 = vector.broadcast %28 : vector<1x32xf32> to vector<64x32xf32>
    %172 = arith.addf %170, %171 : vector<64x32xf32>
    %173 = tpu.transpose %172, [1, 0] : vector<64x32xf32> -> vector<32x64xf32>
    %c0_83 = arith.constant 0 : index
    %c0_84 = arith.constant 0 : index
    %c0_85 = arith.constant 0 : index
    %174 = vector.load %arg11[%c0_83, %c0_84, %c0_85] : memref<1x32x64xf32, #tpu.memory_space<vmem>>, vector<1x32x64xf32>
    %175 = vector.shape_cast %174 : vector<1x32x64xf32> to vector<32x64xf32>
    %176 = vector.shape_cast %173 : vector<32x64xf32> to vector<1x32x64xf32>
    tpu.vector_store %arg11[%c0_83, %c0_84, %c0_85], %176 {strides = array<i32>} : memref<1x32x64xf32, #tpu.memory_space<vmem>>, vector<1x32x64xf32>,
    return
  }
  func.func @transform_0(%arg0: i32, %arg1: i32) -> (i32, i32, i32) {
    %c0_i32 = arith.constant 0 : i32
    %c0_i32_0 = arith.constant 0 : i32
    %c0_i32_1 = arith.constant 0 : i32
    return %arg0, %c0_i32, %c0_i32_0 : i32, i32, i32
  }
  func.func @transform_1(%arg0: i32, %arg1: i32) -> (i32, i32, i32) {
    %c0_i32 = arith.constant 0 : i32
    %c0_i32_0 = arith.constant 0 : i32
    %c0_i32_1 = arith.constant 0 : i32
    %c0_i32_2 = arith.constant 0 : i32
    return %c0_i32, %c0_i32_0, %c0_i32_1 : i32, i32, i32
  }
  func.func @transform_2(%arg0: i32, %arg1: i32) -> (i32, i32, i32) {
    %c0_i32 = arith.constant 0 : i32
    %c0_i32_0 = arith.constant 0 : i32
    return %arg0, %c0_i32, %arg1 : i32, i32, i32
  }
  func.func @transform_3(%arg0: i32, %arg1: i32) -> (i32, i32, i32) {
    %c0_i32 = arith.constant 0 : i32
    %c0_i32_0 = arith.constant 0 : i32
    %c0_i32_1 = arith.constant 0 : i32
    return %c0_i32, %c0_i32_0, %arg1 : i32, i32, i32
  }
  func.func @transform_4(%arg0: i32, %arg1: i32) -> (i32, i32, i32) {
    %c0_i32 = arith.constant 0 : i32
    %c0_i32_0 = arith.constant 0 : i32
    %c0_i32_1 = arith.constant 0 : i32
    %c0_i32_2 = arith.constant 0 : i32
    return %c0_i32, %c0_i32_0, %c0_i32_1 : i32, i32, i32
  }
  func.func @transform_5(%arg0: i32, %arg1: i32) -> (i32, i32) {
    %c0_i32 = arith.constant 0 : i32
    %c0_i32_0 = arith.constant 0 : i32
    %c0_i32_1 = arith.constant 0 : i32
    return %c0_i32, %c0_i32_0 : i32, i32
  }
  func.func @transform_6(%arg0: i32, %arg1: i32) -> (i32, i32) {
    %c0_i32 = arith.constant 0 : i32
    %c0_i32_0 = arith.constant 0 : i32
    %c0_i32_1 = arith.constant 0 : i32
    return %c0_i32, %c0_i32_0 : i32, i32
  }
  func.func @transform_7(%arg0: i32, %arg1: i32) -> (i32, i32) {
    %c0_i32 = arith.constant 0 : i32
    %c0_i32_0 = arith.constant 0 : i32
    %c0_i32_1 = arith.constant 0 : i32
    return %c0_i32, %c0_i32_0 : i32, i32
  }
  func.func @transform_8(%arg0: i32, %arg1: i32) -> (i32, i32) {
    %c0_i32 = arith.constant 0 : i32
    %c0_i32_0 = arith.constant 0 : i32
    %c0_i32_1 = arith.constant 0 : i32
    return %c0_i32, %c0_i32_0 : i32, i32
  }
  func.func @transform_9(%arg0: i32, %arg1: i32) -> (i32, i32, i32) {
    %c0_i32 = arith.constant 0 : i32
    %c0_i32_0 = arith.constant 0 : i32
    return %arg0, %c0_i32, %arg1 : i32, i32, i32
  }
}

</mosaic_0001>

<llo_original>
// kernel: tpu_custom_call.1
$region0: #{tpu_custom_call.1}
  #allocation0 [shape = 'u32[]', space=smem, size = 0x4, offset = 0x4, fixed_abs, tag = 'smem constant byte address 0x4 - core index']
  #allocation1 [shape = 'u32[144,128]{1,0:T(1,128)}', space=vmem, size = 0x12000, scoped, tag = 'internal scratch']
  #allocation2 [shape = 'f32[64,32]{1,0:T(8,128)}', space=vmem, size = 0x8000, scoped, tag = 'scratch operand']
  %s0 = inlined_call_operand.hbm [shape: f32[2,32,64], index: 0, kind: input, shape index: {}]
  %s1 = inlined_call_operand.hbm [shape: f32[1,32,64], index: 1, kind: input, shape index: {}]
  %s2 = inlined_call_operand.hbm [shape: f32[2,32,64], index: 2, kind: input, shape index: {}]
  %s3 = inlined_call_operand.hbm [shape: f32[1,32,64], index: 3, kind: input, shape index: {}]
  %s4 = inlined_call_operand.hbm [shape: f32[4,32,32], index: 4, kind: input, shape index: {}]
  %s5 = inlined_call_operand.hbm [shape: f32[9,32], index: 5, kind: input, shape index: {}]
  %s6 = inlined_call_operand.hbm [shape: f32[32,64], index: 6, kind: input, shape index: {}]
  %s7 = inlined_call_operand.hbm [shape: f32[1,64], index: 7, kind: input, shape index: {}]
  %s8 = inlined_call_operand.hbm [shape: f32[64,32], index: 8, kind: input, shape index: {}]
  %s9 = inlined_call_operand.hbm [shape: f32[2,32,64], index: 9, kind: output, shape index: {}]
  %s10 = sld [smem:[#allocation0]]
  $region105: #{tpu_custom_call.1} parent=0
    _
  %s12 = ssub.s32 1, %s10
  %s13 = scalar_select 0, %s12, %s10
  $region1: #{tpu_custom_call.1} parent=0
    #allocation3 [shape = 'u8[32768]{0}', space=vmem, size = 0x8000, scoped, tag = 'input window, operand 0']
    #allocation4 [shape = 's32[2]{0}', space=sflag, size = 0x8, scoped, tag = 'scoped memory for tpu_custom_call.1']
    #allocation5 [shape = 's32[2]{0}', space=sflag, size = 0x8, scoped, tag = 'scoped memory for tpu_custom_call.1']
    #allocation6 [shape = 'u8[16384]{0}', space=vmem, size = 0x4000, scoped, tag = 'input window, operand 1, single buffered']
    #allocation7 [shape = 's32[1]{0}', space=sflag, size = 0x4, scoped, tag = 'scoped memory for tpu_custom_call.1']
    #allocation8 [shape = 'u8[32768]{0}', space=vmem, size = 0x8000, scoped, tag = 'input window, operand 2']
    #allocation9 [shape = 'u8[16384]{0}', space=vmem, size = 0x4000, scoped, tag = 'input window, operand 3, single buffered']
    #allocation10 [shape = 'u8[65536]{0}', space=vmem, size = 0x10000, scoped, tag = 'input window, operand 4, single buffered']
    #allocation11 [shape = 's32[1]{0}', space=sflag, size = 0x4, scoped, tag = 'scoped memory for tpu_custom_call.1']
    #allocation12 [shape = 'u8[8192]{0}', space=vmem, size = 0x2000, scoped, tag = 'input window, operand 5, single buffered']
    #allocation13 [shape = 'u8[16384]{0}', space=vmem, size = 0x4000, scoped, tag = 'input window, operand 6, single buffered']
    #allocation14 [shape = 's32[1]{0}', space=sflag, size = 0x4, scoped, tag = 'scoped memory for tpu_custom_call.1']
    #allocation15 [shape = 'u8[512]{0}', space=vmem, size = 0x400, scoped, tag = 'input window, operand 7, single buffered']
    #allocation16 [shape = 'u8[32768]{0}', space=vmem, size = 0x8000, scoped, tag = 'input window, operand 8, single buffered']
    #allocation17 [shape = 's32[1]{0}', space=sflag, size = 0x4, scoped, tag = 'scoped memory for tpu_custom_call.1']
    #allocation18 [shape = 'u8[32768]{0}', space=vmem, size = 0x8000, scoped, tag = 'output window, operand 0']
    %14 = vsyncpa [#allocation4], 0
    %s15 = scalar_lea.sflag [#allocation4], 1
    %16 = vsyncpa %s15, 0
    %17 = vsyncpa [#allocation7], 0
    %18 = vsyncpa [#allocation11], 0
    %19 = vsyncpa [#allocation14], 0
    %20 = vsyncpa [#allocation17], 0
    %21 = vsyncpa [#allocation5], 0
    %s22 = scalar_lea.sflag [#allocation5], 1
    %23 = vsyncpa %s22, 0
    loop: start=0, step=1, limit=4
    $region2: #{tpu_custom_call.1} parent=1 // loop_pre_header
      _
    $region3: #{tpu_custom_call.1} parent=1 // loop_header
      %s25 = sphi 0, %s29
      %p26 = scmp.ge.s32.totalorder %s25, 4
      %s32 = sphi 0, %s44
      %s33 = sphi 0, %s40
      %s34 = sphi 0, %s32
      %s35 = sphi 0, %s33
      %s36 = sphi 0, %s34
      %s37 = sphi 0, %s35
      %s47 = sphi 0, %s49
      %s50 = sphi 0, %s47
      %s51 = sphi 0, %s50
      %s67 = sphi 0, %s51
      %s71 = sphi 0, %s71
      %s73 = sphi 0, %s71
      %s74 = sphi 0, %s73
      %s88 = sphi 0, %s74
      %s96 = sphi 0, %s98
      %s99 = sphi 0, %s96
      %s100 = sphi 0, %s99
      %s116 = sphi 0, %s100
      %s122 = sphi 0, %s124
      %s125 = sphi 0, %s122
      %s126 = sphi 0, %s125
      %s142 = sphi 0, %s126
      %s146 = sphi 0, %s146
      %s148 = sphi 0, %s146
      %s149 = sphi 0, %s148
      %s163 = sphi 0, %s149
      %s167 = sphi 0, %s167
      %s169 = sphi 0, %s167
      %s170 = sphi 0, %s169
      %s184 = sphi 0, %s170
      %s188 = sphi 0, %s188
      %s190 = sphi 0, %s188
      %s191 = sphi 0, %s190
      %s205 = sphi 0, %s191
      %s209 = sphi 0, %s209
      %s211 = sphi 0, %s209
      %s212 = sphi 0, %s211
      %s226 = sphi 0, %s212
      %s230 = sphi 0, %s230
      %s232 = sphi 0, %s230
      %s233 = sphi 0, %s232
      %s247 = sphi 0, %s233
      %s255 = sphi 0, %s257
      %s258 = sphi 0, %s255
      %s259 = sphi 0, %s258
      %s275 = sphi 0, %s259
    $region4: #{tpu_custom_call.1} parent=1 // loop_header_branch
      %28 = sbr.rel (%p26) target = $region8
    $region5: #{tpu_custom_call.1} parent=1 // loop_body
      %s30 = ssub.s32 %s25, 1
      %s31 = ssub.s32 %s25, 2
      %s38 = sadd.s32 1, %s33
      %p39 = scmp.ge.s32.totalorder %s38, 1
      %s40 = scalar_select %p39, 0, %s38
      %s41 = sadd.s32 1, %s32
      %s42 = scalar_select %p39, %s41, %s32
      %p43 = scmp.ge.s32.totalorder %s42, 2
      %s44 = scalar_select %p43, 0, %s42
      %s45 = ssub.s32 %s32, %s44
      %p46 = scmp.eq.s32.totalorder %s45, 0
      %s48 = sadd.s32 %s47, 1
      %s49 = scalar_select %p46, %s47, %s48
      %p52 = pneg %p46
      %p53 = scmp.eq.s32.totalorder %s25, 1
      %p54 = por %p52, %p53
      %p55 = scmp.ne.s32.totalorder %s47, %s50
      %p56 = scmp.eq.s32.totalorder %s25, 0
      %p57 = por %p55, %p56
      %p58 = scmp.ne.s32.totalorder %s47, %s50
      %p59 = scmp.eq.s32.totalorder %s30, 1
      %p60 = por %p58, %p59
      %p61 = scmp.ne.s32.totalorder %s50, %s51
      %p62 = scmp.eq.s32.totalorder %s30, 0
      %p63 = por %p61, %p62
      %p64 = scmp.ne.s32.totalorder %s50, %s51
      %p65 = scmp.eq.s32.totalorder %s31, 1
      %p66 = por %p64, %p65
      %p68 = scmp.ne.s32.totalorder %s51, %s67
      %p69 = scmp.eq.s32.totalorder %s31, 0
      %p70 = por %p68, %p69
      %s72 = sadd.s32 %s71, 1
      %p75 = scmp.eq.s32.totalorder %s25, 1
      %p76 = scmp.ne.s32.totalorder %s71, %s73
      %p77 = scmp.eq.s32.totalorder %s25, 0
      %p78 = por %p76, %p77
      %p79 = scmp.ne.s32.totalorder %s71, %s73
      %p80 = scmp.eq.s32.totalorder %s30, 1
      %p81 = por %p79, %p80
      %p82 = scmp.ne.s32.totalorder %s73, %s74
      %p83 = scmp.eq.s32.totalorder %s30, 0
      %p84 = por %p82, %p83
      %p85 = scmp.ne.s32.totalorder %s73, %s74
      %p86 = scmp.eq.s32.totalorder %s31, 1
      %p87 = por %p85, %p86
      %p89 = scmp.ne.s32.totalorder %s74, %s88
      %p90 = scmp.eq.s32.totalorder %s31, 0
      %p91 = por %p89, %p90
      %s92 = ssub.s32 %s32, %s44
      %s93 = ssub.s32 %s33, %s40
      %s94 = sor.u32 %s92, %s93
      %p95 = scmp.eq.s32.totalorder %s94, 0
      %s97 = sadd.s32 %s96, 1
      %s98 = scalar_select %p95, %s96, %s97
      %p101 = pneg %p95
      %p102 = scmp.eq.s32.totalorder %s25, 1
      %p103 = por %p101, %p102
      %p104 = scmp.ne.s32.totalorder %s96, %s99
      %p105 = scmp.eq.s32.totalorder %s25, 0
      %p106 = por %p104, %p105
      %p107 = scmp.ne.s32.totalorder %s96, %s99
      %p108 = scmp.eq.s32.totalorder %s30, 1
      %p109 = por %p107, %p108
      %p110 = scmp.ne.s32.totalorder %s99, %s100
      %p111 = scmp.eq.s32.totalorder %s30, 0
      %p112 = por %p110, %p111
      %p113 = scmp.ne.s32.totalorder %s99, %s100
      %p114 = scmp.eq.s32.totalorder %s31, 1
      %p115 = por %p113, %p114
      %p117 = scmp.ne.s32.totalorder %s100, %s116
      %p118 = scmp.eq.s32.totalorder %s31, 0
      %p119 = por %p117, %p118
      %s120 = ssub.s32 %s33, %s40
      %p121 = scmp.eq.s32.totalorder %s120, 0
      %s123 = sadd.s32 %s122, 1
      %s124 = scalar_select %p121, %s122, %s123
      %p127 = pneg %p121
      %p128 = scmp.eq.s32.totalorder %s25, 1
      %p129 = por %p127, %p128
      %p130 = scmp.ne.s32.totalorder %s122, %s125
      %p131 = scmp.eq.s32.totalorder %s25, 0
      %p132 = por %p130, %p131
      %p133 = scmp.ne.s32.totalorder %s122, %s125
      %p134 = scmp.eq.s32.totalorder %s30, 1
      %p135 = por %p133, %p134
      %p136 = scmp.ne.s32.totalorder %s125, %s126
      %p137 = scmp.eq.s32.totalorder %s30, 0
      %p138 = por %p136, %p137
      %p139 = scmp.ne.s32.totalorder %s125, %s126
      %p140 = scmp.eq.s32.totalorder %s31, 1
      %p141 = por %p139, %p140
      %p143 = scmp.ne.s32.totalorder %s126, %s142
      %p144 = scmp.eq.s32.totalorder %s31, 0
      %p145 = por %p143, %p144
      %s147 = sadd.s32 %s146, 1
      %p150 = scmp.eq.s32.totalorder %s25, 1
      %p151 = scmp.ne.s32.totalorder %s146, %s148
      %p152 = scmp.eq.s32.totalorder %s25, 0
      %p153 = por %p151, %p152
      %p154 = scmp.ne.s32.totalorder %s146, %s148
      %p155 = scmp.eq.s32.totalorder %s30, 1
      %p156 = por %p154, %p155
      %p157 = scmp.ne.s32.totalorder %s148, %s149
      %p158 = scmp.eq.s32.totalorder %s30, 0
      %p159 = por %p157, %p158
      %p160 = scmp.ne.s32.totalorder %s148, %s149
      %p161 = scmp.eq.s32.totalorder %s31, 1
      %p162 = por %p160, %p161
      %p164 = scmp.ne.s32.totalorder %s149, %s163
      %p165 = scmp.eq.s32.totalorder %s31, 0
      %p166 = por %p164, %p165
      %s168 = sadd.s32 %s167, 1
      %p171 = scmp.eq.s32.totalorder %s25, 1
      %p172 = scmp.ne.s32.totalorder %s167, %s169
      %p173 = scmp.eq.s32.totalorder %s25, 0
      %p174 = por %p172, %p173
      %p175 = scmp.ne.s32.totalorder %s167, %s169
      %p176 = scmp.eq.s32.totalorder %s30, 1
      %p177 = por %p175, %p176
      %p178 = scmp.ne.s32.totalorder %s169, %s170
      %p179 = scmp.eq.s32.totalorder %s30, 0
      %p180 = por %p178, %p179
      %p181 = scmp.ne.s32.totalorder %s169, %s170
      %p182 = scmp.eq.s32.totalorder %s31, 1
      %p183 = por %p181, %p182
      %p185 = scmp.ne.s32.totalorder %s170, %s184
      %p186 = scmp.eq.s32.totalorder %s31, 0
      %p187 = por %p185, %p186
      %s189 = sadd.s32 %s188, 1
      %p192 = scmp.eq.s32.totalorder %s25, 1
      %p193 = scmp.ne.s32.totalorder %s188, %s190
      %p194 = scmp.eq.s32.totalorder %s25, 0
      %p195 = por %p193, %p194
      %p196 = scmp.ne.s32.totalorder %s188, %s190
      %p197 = scmp.eq.s32.totalorder %s30, 1
      %p198 = por %p196, %p197
      %p199 = scmp.ne.s32.totalorder %s190, %s191
      %p200 = scmp.eq.s32.totalorder %s30, 0
      %p201 = por %p199, %p200
      %p202 = scmp.ne.s32.totalorder %s190, %s191
      %p203 = scmp.eq.s32.totalorder %s31, 1
      %p204 = por %p202, %p203
      %p206 = scmp.ne.s32.totalorder %s191, %s205
      %p207 = scmp.eq.s32.totalorder %s31, 0
      %p208 = por %p206, %p207
      %s210 = sadd.s32 %s209, 1
      %p213 = scmp.eq.s32.totalorder %s25, 1
      %p214 = scmp.ne.s32.totalorder %s209, %s211
      %p215 = scmp.eq.s32.totalorder %s25, 0
      %p216 = por %p214, %p215
      %p217 = scmp.ne.s32.totalorder %s209, %s211
      %p218 = scmp.eq.s32.totalorder %s30, 1
      %p219 = por %p217, %p218
      %p220 = scmp.ne.s32.totalorder %s211, %s212
      %p221 = scmp.eq.s32.totalorder %s30, 0
      %p222 = por %p220, %p221
      %p223 = scmp.ne.s32.totalorder %s211, %s212
      %p224 = scmp.eq.s32.totalorder %s31, 1
      %p225 = por %p223, %p224
      %p227 = scmp.ne.s32.totalorder %s212, %s226
      %p228 = scmp.eq.s32.totalorder %s31, 0
      %p229 = por %p227, %p228
      %s231 = sadd.s32 %s230, 1
      %p234 = scmp.eq.s32.totalorder %s25, 1
      %p235 = scmp.ne.s32.totalorder %s230, %s232
      %p236 = scmp.eq.s32.totalorder %s25, 0
      %p237 = por %p235, %p236
      %p238 = scmp.ne.s32.totalorder %s230, %s232
      %p239 = scmp.eq.s32.totalorder %s30, 1
      %p240 = por %p238, %p239
      %p241 = scmp.ne.s32.totalorder %s232, %s233
      %p242 = scmp.eq.s32.totalorder %s30, 0
      %p243 = por %p241, %p242
      %p244 = scmp.ne.s32.totalorder %s232, %s233
      %p245 = scmp.eq.s32.totalorder %s31, 1
      %p246 = por %p244, %p245
      %p248 = scmp.ne.s32.totalorder %s233, %s247
      %p249 = scmp.eq.s32.totalorder %s31, 0
      %p250 = por %p248, %p249
      %s251 = ssub.s32 %s32, %s44
      %s252 = ssub.s32 %s33, %s40
      %s253 = sor.u32 %s251, %s252
      %p254 = scmp.eq.s32.totalorder %s253, 0
      %s256 = sadd.s32 %s255, 1
      %s257 = scalar_select %p254, %s255, %s256
      %p260 = pneg %p254
      %p261 = scmp.eq.s32.totalorder %s25, 1
      %p262 = por %p260, %p261
      %p263 = scmp.ne.s32.totalorder %s255, %s258
      %p264 = scmp.eq.s32.totalorder %s25, 0
      %p265 = por %p263, %p264
      %p266 = scmp.ne.s32.totalorder %s255, %s258
      %p267 = scmp.eq.s32.totalorder %s30, 1
      %p268 = por %p266, %p267
      %p269 = scmp.ne.s32.totalorder %s258, %s259
      %p270 = scmp.eq.s32.totalorder %s30, 0
      %p271 = por %p269, %p270
      %p272 = scmp.ne.s32.totalorder %s258, %s259
      %p273 = scmp.eq.s32.totalorder %s31, 1
      %p274 = por %p272, %p273
      %p276 = scmp.ne.s32.totalorder %s259, %s275
      %p277 = scmp.eq.s32.totalorder %s31, 0
      %p278 = por %p276, %p277
      %p279 = scmp.le.s32.totalorder 1, %s25
      %p280 = scmp.lt.s32.totalorder %s25, 3
      %p281 = pnand %p279, %p280
      %p282 = pneg %p281
      // Predicated region
      $region9: #{tpu_custom_call.1} parent=5 // pred_check
        _
      $region10: #{tpu_custom_call.1} parent=5 // pred_check_branch
        %284 = sbr.rel (%p281) target = $region12
      $region11: #{tpu_custom_call.1} parent=5 // pred_region
        %s285 = ssub.s32 %s25, 1
        // Predicated region
        $region13: #{tpu_custom_call.1} parent=11 // pred_check
          %p286 = pneg %p84
        $region14: #{tpu_custom_call.1} parent=11 // pred_check_branch
          %288 = sbr.rel (%p286) target = $region16
        $region15: #{tpu_custom_call.1} parent=11 // pred_region
          %s290 = ssub.s32 512, 512
          %291 = vsyncadd [#allocation7], %s290
          %s292 = sshll.u32 [#allocation6], 4
          %s293 = int_to_ptr.vmem [resolvable:$true] %s292
          %298 = dma.hbm_to_vmem [thread:$0]  %s1, 512, %s293, [#allocation7], 128, 128, 8
        $region16: #{tpu_custom_call.1} parent=11 // pred_fallthru
          _
        // Predicated region
        $region17: #{tpu_custom_call.1} parent=11 // pred_check
          %p299 = pneg %p138
        $region18: #{tpu_custom_call.1} parent=11 // pred_check_branch
          %301 = sbr.rel (%p299) target = $region20
        $region19: #{tpu_custom_call.1} parent=11 // pred_region
          %s303 = ssub.s32 512, 512
          %304 = vsyncadd [#allocation7], %s303
          %s305 = smul.addr %s35, 128
          %s306 = scalar_lea.hbm %s3, %s305
          %s307 = sshll.u32 [#allocation9], 4
          %s308 = int_to_ptr.vmem [resolvable:$true] %s307
          %313 = dma.hbm_to_vmem [thread:$0]  %s306, 512, %s308, [#allocation7], 128, 128, 8
        $region20: #{tpu_custom_call.1} parent=11 // pred_fallthru
          _
        // Predicated region
        $region21: #{tpu_custom_call.1} parent=11 // pred_check
          %p314 = pneg %p159
        $region22: #{tpu_custom_call.1} parent=11 // pred_check_branch
          %316 = sbr.rel (%p314) target = $region24
        $region23: #{tpu_custom_call.1} parent=11 // pred_region
          %s318 = ssub.s32 2048, 2048
          %319 = vsyncadd [#allocation11], %s318
          %s320 = sshll.u32 [#allocation10], 4
          %s321 = int_to_ptr.vmem [resolvable:$true] %s320
          %326 = dma.hbm_to_vmem [thread:$0]  %s4, 2048, %s321, [#allocation11], 128, 128, 8
        $region24: #{tpu_custom_call.1} parent=11 // pred_fallthru
          _
        // Predicated region
        $region25: #{tpu_custom_call.1} parent=11 // pred_check
          %p327 = pneg %p180
        $region26: #{tpu_custom_call.1} parent=11 // pred_check_branch
          %329 = sbr.rel (%p327) target = $region28
        $region27: #{tpu_custom_call.1} parent=11 // pred_region
          %s331 = ssub.s32 256, 256
          %332 = vsyncadd [#allocation11], %s331
          %s333 = sshll.u32 [#allocation12], 4
          %s334 = int_to_ptr.vmem [resolvable:$true] %s333
          %339 = dma.hbm_to_vmem [thread:$0]  %s5, 256, %s334, [#allocation11], 128, 128, 8
        $region28: #{tpu_custom_call.1} parent=11 // pred_fallthru
          _
        // Predicated region
        $region29: #{tpu_custom_call.1} parent=11 // pred_check
          %p340 = pneg %p201
        $region30: #{tpu_custom_call.1} parent=11 // pred_check_branch
          %342 = sbr.rel (%p340) target = $region32
        $region31: #{tpu_custom_call.1} parent=11 // pred_region
          %s344 = ssub.s32 512, 512
          %345 = vsyncadd [#allocation14], %s344
          %s346 = sshll.u32 [#allocation13], 4
          %s347 = int_to_ptr.vmem [resolvable:$true] %s346
          %352 = dma.hbm_to_vmem [thread:$0]  %s6, 512, %s347, [#allocation14], 128, 128, 8
        $region32: #{tpu_custom_call.1} parent=11 // pred_fallthru
          _
        // Predicated region
        $region33: #{tpu_custom_call.1} parent=11 // pred_check
          %p353 = pneg %p222
        $region34: #{tpu_custom_call.1} parent=11 // pred_check_branch
          %355 = sbr.rel (%p353) target = $region36
        $region35: #{tpu_custom_call.1} parent=11 // pred_region
          %s357 = ssub.s32 16, 16
          %358 = vsyncadd [#allocation14], %s357
          %s360 = sshll.u32 [#allocation15], 4
          %s361 = int_to_ptr.vmem [resolvable:$true] %s360
          %363 = dma.hbm_to_vmem [thread:$0]  %s7, 16, %s361, [#allocation14]
        $region36: #{tpu_custom_call.1} parent=11 // pred_fallthru
          _
        // Predicated region
        $region37: #{tpu_custom_call.1} parent=11 // pred_check
          %p364 = pneg %p243
        $region38: #{tpu_custom_call.1} parent=11 // pred_check_branch
          %366 = sbr.rel (%p364) target = $region40
        $region39: #{tpu_custom_call.1} parent=11 // pred_region
          %s368 = ssub.s32 1024, 1024
          %369 = vsyncadd [#allocation17], %s368
          %s370 = sshll.u32 [#allocation16], 4
          %s371 = int_to_ptr.vmem [resolvable:$true] %s370
          %376 = dma.hbm_to_vmem [thread:$0]  %s8, 1024, %s371, [#allocation17], 128, 128, 8
        $region40: #{tpu_custom_call.1} parent=11 // pred_fallthru
          _
      $region12: #{tpu_custom_call.1} parent=5 // pred_fallthru
        _
      %p377 = scmp.lt.s32.totalorder %s25, 2
      // Predicated region
      $region41: #{tpu_custom_call.1} parent=5 // pred_check
        %p378 = pneg %p377
      $region42: #{tpu_custom_call.1} parent=5 // pred_check_branch
        %380 = sbr.rel (%p378) target = $region44
      $region43: #{tpu_custom_call.1} parent=5 // pred_region
        // Predicated region
        $region45: #{tpu_custom_call.1} parent=43 // pred_check
          %p381 = pneg %p57
        $region46: #{tpu_custom_call.1} parent=43 // pred_check_branch
          %383 = sbr.rel (%p381) target = $region48
        $region47: #{tpu_custom_call.1} parent=43 // pred_region
          %s384 = sand.u32 %s25, 1
          %s385 = scalar_lea.sflag [#allocation4], %s384
          %s386 = sand.u32 %s47, 1
          %s387 = smul.addr %s386, 32
          %s388 = scalar_lea.vmem [#allocation3], %s387
          %s390 = ssub.s32 512, 512
          %391 = vsyncadd %s385, %s390
          %s392 = smul.addr %s32, 4
          %s393 = smul.addr %s392, 128
          %s394 = scalar_lea.hbm %s0, %s393
          %s395 = sshll.u32 %s388, 4
          %s396 = int_to_ptr.vmem [resolvable:$true] %s395
          %401 = dma.hbm_to_vmem [thread:$0]  %s394, 512, %s396, %s385, 128, 128, 8
        $region48: #{tpu_custom_call.1} parent=43 // pred_fallthru
          _
        // Predicated region
        $region49: #{tpu_custom_call.1} parent=43 // pred_check
          %p402 = pneg %p106
        $region50: #{tpu_custom_call.1} parent=43 // pred_check_branch
          %404 = sbr.rel (%p402) target = $region52
        $region51: #{tpu_custom_call.1} parent=43 // pred_region
          %s405 = sand.u32 %s25, 1
          %s406 = scalar_lea.sflag [#allocation4], %s405
          %s407 = sand.u32 %s96, 1
          %s408 = smul.addr %s407, 32
          %s409 = scalar_lea.vmem [#allocation8], %s408
          %s411 = ssub.s32 512, 512
          %412 = vsyncadd %s406, %s411
          %s413 = smul.addr %s32, 4
          %s414 = sadd.s32 %s33, %s413
          %s415 = smul.addr %s414, 128
          %s416 = scalar_lea.hbm %s2, %s415
          %s417 = sshll.u32 %s409, 4
          %s418 = int_to_ptr.vmem [resolvable:$true] %s417
          %423 = dma.hbm_to_vmem [thread:$0]  %s416, 512, %s418, %s406, 128, 128, 8
        $region52: #{tpu_custom_call.1} parent=43 // pred_fallthru
          _
      $region44: #{tpu_custom_call.1} parent=5 // pred_fallthru
        _
      %p424 = scmp.le.s32.totalorder 1, %s25
      %p425 = scmp.lt.s32.totalorder %s25, 3
      %p426 = pnand %p424, %p425
      %p427 = pneg %p426
      // Predicated region
      $region53: #{tpu_custom_call.1} parent=5 // pred_check
        _
      $region54: #{tpu_custom_call.1} parent=5 // pred_check_branch
        %429 = sbr.rel (%p426) target = $region56
      $region55: #{tpu_custom_call.1} parent=5 // pred_region
        %s430 = ssub.s32 %s25, 1
        %s431 = sand.u32 %s30, 1
        %s432 = scalar_lea.sflag [#allocation4], %s431
        %s433 = sand.u32 %s50, 1
        %s434 = smul.addr %s433, 32
        %s435 = scalar_lea.vmem [#allocation3], %s434
        // Predicated region
        $region57: #{tpu_custom_call.1} parent=55 // pred_check
          %p436 = pneg %p63
        $region58: #{tpu_custom_call.1} parent=55 // pred_check_branch
          %438 = sbr.rel (%p436) target = $region60
        $region59: #{tpu_custom_call.1} parent=55 // pred_region
          %439 = dma.done %s432, 512
        $region60: #{tpu_custom_call.1} parent=55 // pred_fallthru
          _
        // Predicated region
        $region61: #{tpu_custom_call.1} parent=55 // pred_check
          %p440 = pneg %p84
        $region62: #{tpu_custom_call.1} parent=55 // pred_check_branch
          %442 = sbr.rel (%p440) target = $region64
        $region63: #{tpu_custom_call.1} parent=55 // pred_region
          %443 = dma.done [#allocation7], 512
        $region64: #{tpu_custom_call.1} parent=55 // pred_fallthru
          _
        %s444 = sand.u32 %s30, 1
        %s445 = scalar_lea.sflag [#allocation4], %s444
        %s446 = sand.u32 %s99, 1
        %s447 = smul.addr %s446, 32
        %s448 = scalar_lea.vmem [#allocation8], %s447
        // Predicated region
        $region65: #{tpu_custom_call.1} parent=55 // pred_check
          %p449 = pneg %p112
        $region66: #{tpu_custom_call.1} parent=55 // pred_check_branch
          %451 = sbr.rel (%p449) target = $region68
        $region67: #{tpu_custom_call.1} parent=55 // pred_region
          %452 = dma.done %s445, 512
        $region68: #{tpu_custom_call.1} parent=55 // pred_fallthru
          _
        // Predicated region
        $region69: #{tpu_custom_call.1} parent=55 // pred_check
          %p453 = pneg %p138
        $region70: #{tpu_custom_call.1} parent=55 // pred_check_branch
          %455 = sbr.rel (%p453) target = $region72
        $region71: #{tpu_custom_call.1} parent=55 // pred_region
          %456 = dma.done [#allocation7], 512
        $region72: #{tpu_custom_call.1} parent=55 // pred_fallthru
          _
        // Predicated region
        $region73: #{tpu_custom_call.1} parent=55 // pred_check
          %p457 = pneg %p159
        $region74: #{tpu_custom_call.1} parent=55 // pred_check_branch
          %459 = sbr.rel (%p457) target = $region76
        $region75: #{tpu_custom_call.1} parent=55 // pred_region
          %460 = dma.done [#allocation11], 2048
        $region76: #{tpu_custom_call.1} parent=55 // pred_fallthru
          _
        // Predicated region
        $region77: #{tpu_custom_call.1} parent=55 // pred_check
          %p461 = pneg %p180
        $region78: #{tpu_custom_call.1} parent=55 // pred_check_branch
          %463 = sbr.rel (%p461) target = $region80
        $region79: #{tpu_custom_call.1} parent=55 // pred_region
          %464 = dma.done [#allocation11], 256
        $region80: #{tpu_custom_call.1} parent=55 // pred_fallthru
          _
        // Predicated region
        $region81: #{tpu_custom_call.1} parent=55 // pred_check
          %p465 = pneg %p201
        $region82: #{tpu_custom_call.1} parent=55 // pred_check_branch
          %467 = sbr.rel (%p465) target = $region84
        $region83: #{tpu_custom_call.1} parent=55 // pred_region
          %468 = dma.done [#allocation14], 512
        $region84: #{tpu_custom_call.1} parent=55 // pred_fallthru
          _
        // Predicated region
        $region85: #{tpu_custom_call.1} parent=55 // pred_check
          %p469 = pneg %p222
        $region86: #{tpu_custom_call.1} parent=55 // pred_check_branch
          %471 = sbr.rel (%p469) target = $region88
        $region87: #{tpu_custom_call.1} parent=55 // pred_region
          %472 = dma.done [#allocation14], 16
        $region88: #{tpu_custom_call.1} parent=55 // pred_fallthru
          _
        // Predicated region
        $region89: #{tpu_custom_call.1} parent=55 // pred_check
          %p473 = pneg %p243
        $region90: #{tpu_custom_call.1} parent=55 // pred_check_branch
          %475 = sbr.rel (%p473) target = $region92
        $region91: #{tpu_custom_call.1} parent=55 // pred_region
          %476 = dma.done [#allocation17], 1024
        $region92: #{tpu_custom_call.1} parent=55 // pred_fallthru
          _
        %s477 = sand.u32 %s30, 1
        %s478 = scalar_lea.sflag [#allocation4], %s477
        %s479 = sand.u32 %s50, 1
        %s480 = smul.addr %s479, 32
        %s481 = scalar_lea.vmem [#allocation3], %s480
        %p482 = pneg %p63
        %p483 = pneg %p60
        %p484 = pneg %p84
        %p485 = pneg %p81
        %s486 = sand.u32 %s30, 1
        %s487 = scalar_lea.sflag [#allocation4], %s486
        %s488 = sand.u32 %s99, 1
        %s489 = smul.addr %s488, 32
        %s490 = scalar_lea.vmem [#allocation8], %s489
        %p491 = pneg %p112
        %p492 = pneg %p109
        %p493 = pneg %p138
        %p494 = pneg %p135
        %p495 = pneg %p159
        %p496 = pneg %p156
        %p497 = pneg %p180
        %p498 = pneg %p177
        %p499 = pneg %p201
        %p500 = pneg %p198
        %p501 = pneg %p222
        %p502 = pneg %p219
        %p503 = pneg %p243
        %p504 = pneg %p240
        %p505 = pneg %p271
        %p506 = pneg %p268
        %s507 = sand.u32 %s258, 1
        %s508 = scalar_lea.sflag [#allocation5], %s507
        %s509 = sand.u32 %s258, 1
        %s510 = smul.addr %s509, 32
        %s511 = scalar_lea.vmem [#allocation18], %s510
        %v512 = vld [vmem:[%s435] sm:$0xff]
        %v513 = vld [vmem:[%s435 + $0x8] sm:$0xff]
        %v514 = vld [vmem:[%s435 + $0x10] sm:$0xff]
        %v515 = vld [vmem:[%s435 + $0x18] sm:$0xff]
        %516 = vxpose.xlu0.b32.start [1/16] %v512, 128
        %517 = vxpose.xlu0.b32.cont [2/16] %v513, 128
        %518 = vxpose.xlu0.b32.cont [3/16] %v514, 128
        %519 = vxpose.xlu0.b32.cont [4/16] %v515, 128
        %520 = vxpose.xlu0.b32.cont [5/16] 0.0, 128
        %521 = vxpose.xlu0.b32.cont [6/16] 0.0, 128
        %522 = vxpose.xlu0.b32.cont [7/16] 0.0, 128
        %523 = vxpose.xlu0.b32.cont [8/16] 0.0, 128
        %524 = vxpose.xlu0.b32.cont [9/16] 0.0, 128
        %525 = vxpose.xlu0.b32.cont [10/16] 0.0, 128
        %526 = vxpose.xlu0.b32.cont [11/16] 0.0, 128
        %527 = vxpose.xlu0.b32.cont [12/16] 0.0, 128
        %528 = vxpose.xlu0.b32.cont [13/16] 0.0, 128
        %529 = vxpose.xlu0.b32.cont [14/16] 0.0, 128
        %530 = vxpose.xlu0.b32.cont [15/16] 0.0, 128
        %531 = vxpose.xlu0.b32.end [16/16] 0.0, 128
        %v532 = vpop.trf.xlu0
        %v533 = vpop.trf.xlu0
        %v534 = vpop.trf.xlu0
        %v535 = vpop.trf.xlu0
        %v536 = vpop.trf.xlu0
        %v537 = vpop.trf.xlu0
        %v538 = vpop.trf.xlu0
        %v539 = vpop.trf.xlu0
        %v540 = vpop.trf.xlu0
        %v541 = vpop.trf.xlu0
        %v542 = vpop.trf.xlu0
        %v543 = vpop.trf.xlu0
        %v544 = vpop.trf.xlu0
        %v545 = vpop.trf.xlu0
        %v546 = vpop.trf.xlu0
        %v547 = vpop.trf.xlu0
        %v548 = vld [vmem:[#allocation6] sm:$0xff]
        %v549 = vld [vmem:[#allocation6 + $0x8] sm:$0xff]
        %v550 = vld [vmem:[#allocation6 + $0x10] sm:$0xff]
        %v551 = vld [vmem:[#allocation6 + $0x18] sm:$0xff]
        %552 = vxpose.xlu0.b32.start [1/16] %v548, 128
        %553 = vxpose.xlu0.b32.cont [2/16] %v549, 128
        %554 = vxpose.xlu0.b32.cont [3/16] %v550, 128
        %555 = vxpose.xlu0.b32.cont [4/16] %v551, 128
        %556 = vxpose.xlu0.b32.cont [5/16] 0.0, 128
        %557 = vxpose.xlu0.b32.cont [6/16] 0.0, 128
        %558 = vxpose.xlu0.b32.cont [7/16] 0.0, 128
        %559 = vxpose.xlu0.b32.cont [8/16] 0.0, 128
        %560 = vxpose.xlu0.b32.cont [9/16] 0.0, 128
        %561 = vxpose.xlu0.b32.cont [10/16] 0.0, 128
        %562 = vxpose.xlu0.b32.cont [11/16] 0.0, 128
        %563 = vxpose.xlu0.b32.cont [12/16] 0.0, 128
        %564 = vxpose.xlu0.b32.cont [13/16] 0.0, 128
        %565 = vxpose.xlu0.b32.cont [14/16] 0.0, 128
        %566 = vxpose.xlu0.b32.cont [15/16] 0.0, 128
        %567 = vxpose.xlu0.b32.end [16/16] 0.0, 128
        %v568 = vpop.trf.xlu0
        %v569 = vpop.trf.xlu0
        %v570 = vpop.trf.xlu0
        %v571 = vpop.trf.xlu0
        %v572 = vpop.trf.xlu0
        %v573 = vpop.trf.xlu0
        %v574 = vpop.trf.xlu0
        %v575 = vpop.trf.xlu0
        %v576 = vpop.trf.xlu0
        %v577 = vpop.trf.xlu0
        %v578 = vpop.trf.xlu0
        %v579 = vpop.trf.xlu0
        %v580 = vpop.trf.xlu0
        %v581 = vpop.trf.xlu0
        %v582 = vpop.trf.xlu0
        %v583 = vpop.trf.xlu0
        %v584 = vld [vmem:[%s448] sm:$0xff]
        %v585 = vld [vmem:[%s448 + $0x8] sm:$0xff]
        %v586 = vld [vmem:[%s448 + $0x10] sm:$0xff]
        %v587 = vld [vmem:[%s448 + $0x18] sm:$0xff]
        %588 = vxpose.xlu0.b32.start [1/16] %v584, 128
        %589 = vxpose.xlu0.b32.cont [2/16] %v585, 128
        %590 = vxpose.xlu0.b32.cont [3/16] %v586, 128
        %591 = vxpose.xlu0.b32.cont [4/16] %v587, 128
        %592 = vxpose.xlu0.b32.cont [5/16] 0.0, 128
        %593 = vxpose.xlu0.b32.cont [6/16] 0.0, 128
        %594 = vxpose.xlu0.b32.cont [7/16] 0.0, 128
        %595 = vxpose.xlu0.b32.cont [8/16] 0.0, 128
        %596 = vxpose.xlu0.b32.cont [9/16] 0.0, 128
        %597 = vxpose.xlu0.b32.cont [10/16] 0.0, 128
        %598 = vxpose.xlu0.b32.cont [11/16] 0.0, 128
        %599 = vxpose.xlu0.b32.cont [12/16] 0.0, 128
        %600 = vxpose.xlu0.b32.cont [13/16] 0.0, 128
        %601 = vxpose.xlu0.b32.cont [14/16] 0.0, 128
        %602 = vxpose.xlu0.b32.cont [15/16] 0.0, 128
        %603 = vxpose.xlu0.b32.end [16/16] 0.0, 128
        %v604 = vpop.trf.xlu0
        %v605 = vpop.trf.xlu0
        %v606 = vpop.trf.xlu0
        %v607 = vpop.trf.xlu0
        %v608 = vpop.trf.xlu0
        %v609 = vpop.trf.xlu0
        %v610 = vpop.trf.xlu0
        %v611 = vpop.trf.xlu0
        %v612 = vpop.trf.xlu0
        %v613 = vpop.trf.xlu0
        %v614 = vpop.trf.xlu0
        %v615 = vpop.trf.xlu0
        %v616 = vpop.trf.xlu0
        %v617 = vpop.trf.xlu0
        %v618 = vpop.trf.xlu0
        %v619 = vpop.trf.xlu0
        %v620 = vld [vmem:[#allocation9] sm:$0xff]
        %v621 = vld [vmem:[#allocation9 + $0x8] sm:$0xff]
        %v622 = vld [vmem:[#allocation9 + $0x10] sm:$0xff]
        %v623 = vld [vmem:[#allocation9 + $0x18] sm:$0xff]
        %624 = vxpose.xlu0.b32.start [1/16] %v620, 128
        %625 = vxpose.xlu0.b32.cont [2/16] %v621, 128
        %626 = vxpose.xlu0.b32.cont [3/16] %v622, 128
        %627 = vxpose.xlu0.b32.cont [4/16] %v623, 128
        %628 = vxpose.xlu0.b32.cont [5/16] 0.0, 128
        %629 = vxpose.xlu0.b32.cont [6/16] 0.0, 128
        %630 = vxpose.xlu0.b32.cont [7/16] 0.0, 128
        %631 = vxpose.xlu0.b32.cont [8/16] 0.0, 128
        %632 = vxpose.xlu0.b32.cont [9/16] 0.0, 128
        %633 = vxpose.xlu0.b32.cont [10/16] 0.0, 128
        %634 = vxpose.xlu0.b32.cont [11/16] 0.0, 128
        %635 = vxpose.xlu0.b32.cont [12/16] 0.0, 128
        %636 = vxpose.xlu0.b32.cont [13/16] 0.0, 128
        %637 = vxpose.xlu0.b32.cont [14/16] 0.0, 128
        %638 = vxpose.xlu0.b32.cont [15/16] 0.0, 128
        %639 = vxpose.xlu0.b32.end [16/16] 0.0, 128
        %v640 = vpop.trf.xlu0
        %v641 = vpop.trf.xlu0
        %v642 = vpop.trf.xlu0
        %v643 = vpop.trf.xlu0
        %v644 = vpop.trf.xlu0
        %v645 = vpop.trf.xlu0
        %v646 = vpop.trf.xlu0
        %v647 = vpop.trf.xlu0
        %v648 = vpop.trf.xlu0
        %v649 = vpop.trf.xlu0
        %v650 = vpop.trf.xlu0
        %v651 = vpop.trf.xlu0
        %v652 = vpop.trf.xlu0
        %v653 = vpop.trf.xlu0
        %v654 = vpop.trf.xlu0
        %v655 = vpop.trf.xlu0
        %v656 = vld [vmem:[#allocation10] sm:$0xff]
        %v657 = vld [vmem:[#allocation10 + $0x8] sm:$0xff]
        %v658 = vld [vmem:[#allocation10 + $0x10] sm:$0xff]
        %v659 = vld [vmem:[#allocation10 + $0x18] sm:$0xff]
        %s660 = scalar_lea.vmem [#allocation10], 32
        %v661 = vld [vmem:[%s660] sm:$0xff]
        %v662 = vld [vmem:[%s660 + $0x8] sm:$0xff]
        %v663 = vld [vmem:[%s660 + $0x10] sm:$0xff]
        %v664 = vld [vmem:[%s660 + $0x18] sm:$0xff]
        %s665 = scalar_lea.vmem [#allocation10], 64
        %v666 = vld [vmem:[%s665] sm:$0xff]
        %v667 = vld [vmem:[%s665 + $0x8] sm:$0xff]
        %v668 = vld [vmem:[%s665 + $0x10] sm:$0xff]
        %v669 = vld [vmem:[%s665 + $0x18] sm:$0xff]
        %s670 = scalar_lea.vmem [#allocation10], 96
        %v671 = vld [vmem:[%s670] sm:$0xff]
        %v672 = vld [vmem:[%s670 + $0x8] sm:$0xff]
        %v673 = vld [vmem:[%s670 + $0x10] sm:$0xff]
        %v674 = vld [vmem:[%s670 + $0x18] sm:$0xff]
        %v675 = vld [vmem:[#allocation12] sm:$0x1]
        %v676 = vld [vmem:[#allocation12 + $0x1] sm:$0x1]
        %v677 = vld [vmem:[#allocation12 + $0x2] sm:$0x1]
        %v678 = vld [vmem:[#allocation12 + $0x3] sm:$0x1]
        %v679 = vld [vmem:[#allocation12 + $0x4] sm:$0x1]
        %v680 = vld [vmem:[#allocation12 + $0x5] sm:$0x1]
        %v681 = vld [vmem:[#allocation12 + $0x6] sm:$0x1]
        %v682 = vld [vmem:[#allocation12 + $0x7] sm:$0x1]
        %v683 = vld [vmem:[#allocation12 + $0x8] sm:$0x1]
        %v684 = vadd.f32 %v604, %v640
        %v685 = vadd.f32 %v605, %v641
        %v686 = vadd.f32 %v606, %v642
        %v687 = vadd.f32 %v607, %v643
        %v688 = vadd.f32 %v608, %v644
        %v689 = vadd.f32 %v609, %v645
        %v690 = vadd.f32 %v610, %v646
        %v691 = vadd.f32 %v611, %v647
        %v692 = vlaneseq
        %v693 = vshrl.u32 %v692, 7
        %v694 = vsub.s32 0, %v693
        %v695 = vrot.slane %v675, %v694
        %vm696 = vcmask 261120
        %v698 = vsel %vm696, %v684, 0
        %v701 = vsel %vm696, %v685, 0
        %v704 = vsel %vm696, %v686, 0
        %v707 = vsel %vm696, %v687, 0
        %v710 = vsel %vm696, %v688, 0
        %v713 = vsel %vm696, %v689, 0
        %v716 = vsel %vm696, %v690, 0
        %v719 = vsel %vm696, %v691, 0
        %721 = vmatprep.subr.mxu0 0.0
        %722 = vmatpush1.msra.mxu0 %v656
        %723 = vmatprep.subr.mxu0 0.0
        %724 = vmatpush1.msra.mxu0 %v657
        %725 = vmatprep.subr.mxu0 0.0
        %726 = vmatpush1.msra.mxu0 %v658
        %727 = vmatprep.subr.mxu0 0.0
        %728 = vmatpush1.msra.mxu0 %v659
        %729 = vmatprep.subr.mxu0 0.0
        %730 = vmatpush1.msra.mxu0 0.0
        %731 = vmatprep.subr.mxu0 0.0
        %732 = vmatpush1.msra.mxu0 0.0
        %733 = vmatprep.subr.mxu0 0.0
        %734 = vmatpush1.msra.mxu0 0.0
        %735 = vmatprep.subr.mxu0 0.0
        %736 = vmatpush1.msra.mxu0 0.0
        %737 = vmatprep.subr.mxu0 0.0
        %738 = vmatpush1.msra.mxu0 0.0
        %739 = vmatprep.subr.mxu0 0.0
        %740 = vmatpush1.msra.mxu0 0.0
        %741 = vmatprep.subr.mxu0 0.0
        %742 = vmatpush1.msra.mxu0 0.0
        %743 = vmatprep.subr.mxu0 0.0
        %744 = vmatpush1.msra.mxu0 0.0
        %745 = vmatprep.subr.mxu0 0.0
        %746 = vmatpush1.msra.mxu0 0.0
        %747 = vmatprep.subr.mxu0 0.0
        %748 = vmatpush1.msra.mxu0 0.0
        %749 = vmatprep.subr.mxu0 0.0
        %750 = vmatpush1.msra.mxu0 0.0
        %751 = vmatprep.subr.mxu0 0.0
        %752 = vmatpush1.msra.mxu0 0.0
        %753 = vmatprep.subr.mxu0 0.0
        %754 = vmatpush1.msra.mxu0 0.0
        %755 = vmatprep.subr.mxu0 0.0
        %756 = vmatpush1.msra.mxu0 0.0
        %757 = vmatprep.subr.mxu0 0.0
        %758 = vmatpush1.msra.mxu0 0.0
        %759 = vmatprep.subr.mxu0 0.0
        %760 = vmatpush1.msra.mxu0 0.0
        %761 = vmatprep.subr.mxu0 0.0
        %762 = vmatpush1.msra.mxu0 0.0
        %763 = vmatprep.subr.mxu0 0.0
        %764 = vmatpush1.msra.mxu0 0.0
        %765 = vmatprep.subr.mxu0 0.0
        %766 = vmatpush1.msra.mxu0 0.0
        %767 = vmatprep.subr.mxu0 0.0
        %768 = vmatpush1.msra.mxu0 0.0
        %769 = vmatprep.subr.mxu0 0.0
        %770 = vmatpush1.msra.mxu0 0.0
        %771 = vmatprep.subr.mxu0 0.0
        %772 = vmatpush1.msra.mxu0 0.0
        %773 = vmatprep.subr.mxu0 0.0
        %774 = vmatpush1.msra.mxu0 0.0
        %775 = vmatprep.subr.mxu0 0.0
        %776 = vmatpush1.msra.mxu0 0.0
        %777 = vmatprep.subr.mxu0 0.0
        %778 = vmatpush1.msra.mxu0 0.0
        %779 = vmatprep.subr.mxu0 0.0
        %780 = vmatpush1.msra.mxu0 0.0
        %781 = vmatprep.subr.mxu0 0.0
        %782 = vmatpush1.msra.mxu0 0.0
        %783 = vmatprep.subr.mxu0 0.0
        %784 = vmatpush1.msra.mxu0 0.0
        %785 = vmatprep.mubr.f32.mxu0 0.0
        %786 = vmatmul.mubr.f32.gmra.mrb[0].mxu0 %v698
        %v787 = vpop.f32.mrb[0].mxu0
        %v788 = vadd.f32 %v695, %v787
        %v789 = vpop.f32.mrb[0].mxu0
        %790 = vmatprep.mubr.f32.mxu0 0.0
        %791 = vmatmul.mubr.f32.gmra.mrb[0].mxu0 %v701
        %v792 = vpop.f32.mrb[0].mxu0
        %v793 = vadd.f32 %v695, %v792
        %v794 = vpop.f32.mrb[0].mxu0
        %795 = vmatprep.mubr.f32.mxu0 0.0
        %796 = vmatmul.mubr.f32.gmra.mrb[0].mxu0 %v704
        %v797 = vpop.f32.mrb[0].mxu0
        %v798 = vadd.f32 %v695, %v797
        %v799 = vpop.f32.mrb[0].mxu0
        %800 = vmatprep.mubr.f32.mxu0 0.0
        %801 = vmatmul.mubr.f32.gmra.mrb[0].mxu0 %v707
        %v802 = vpop.f32.mrb[0].mxu0
        %v803 = vadd.f32 %v695, %v802
        %v804 = vpop.f32.mrb[0].mxu0
        %805 = vmatprep.mubr.f32.mxu0 0.0
        %806 = vmatmul.mubr.f32.gmra.mrb[0].mxu0 %v710
        %v807 = vpop.f32.mrb[0].mxu0
        %v808 = vadd.f32 %v695, %v807
        %v809 = vpop.f32.mrb[0].mxu0
        %810 = vmatprep.mubr.f32.mxu0 0.0
        %811 = vmatmul.mubr.f32.gmra.mrb[0].mxu0 %v713
        %v812 = vpop.f32.mrb[0].mxu0
        %v813 = vadd.f32 %v695, %v812
        %v814 = vpop.f32.mrb[0].mxu0
        %815 = vmatprep.mubr.f32.mxu0 0.0
        %816 = vmatmul.mubr.f32.gmra.mrb[0].mxu0 %v716
        %v817 = vpop.f32.mrb[0].mxu0
        %v818 = vadd.f32 %v695, %v817
        %v819 = vpop.f32.mrb[0].mxu0
        %820 = vmatprep.mubr.f32.mxu0 0.0
        %821 = vmatmul.mubr.f32.gmra.mrb[0].mxu0 %v719
        %v822 = vpop.f32.mrb[0].mxu0
        %v823 = vadd.f32 %v695, %v822
        %v824 = vpop.f32.mrb[0].mxu0
        %825 = vdwg.mxu0
        %v826 = vadd.f32 %v532, %v568
        %v827 = vadd.f32 %v533, %v569
        %v828 = vadd.f32 %v534, %v570
        %v829 = vadd.f32 %v535, %v571
        %v830 = vadd.f32 %v536, %v572
        %v831 = vadd.f32 %v537, %v573
        %v832 = vadd.f32 %v538, %v574
        %v833 = vadd.f32 %v539, %v575
        %v834 = vlaneseq
        %v835 = vshrl.u32 %v834, 7
        %v836 = vsub.s32 0, %v835
        %v837 = vrot.slane %v676, %v836
        %v839 = vsel %vm696, %v826, 0
        %v842 = vsel %vm696, %v827, 0
        %v845 = vsel %vm696, %v828, 0
        %v848 = vsel %vm696, %v829, 0
        %v851 = vsel %vm696, %v830, 0
        %v854 = vsel %vm696, %v831, 0
        %v857 = vsel %vm696, %v832, 0
        %v860 = vsel %vm696, %v833, 0
        %862 = vmatprep.subr.mxu0 0.0
        %863 = vmatpush1.msra.mxu0 %v661
        %864 = vmatprep.subr.mxu0 0.0
        %865 = vmatpush1.msra.mxu0 %v662
        %866 = vmatprep.subr.mxu0 0.0
        %867 = vmatpush1.msra.mxu0 %v663
        %868 = vmatprep.subr.mxu0 0.0
        %869 = vmatpush1.msra.mxu0 %v664
        %870 = vmatprep.subr.mxu0 0.0
        %871 = vmatpush1.msra.mxu0 0.0
        %872 = vmatprep.subr.mxu0 0.0
        %873 = vmatpush1.msra.mxu0 0.0
        %874 = vmatprep.subr.mxu0 0.0
        %875 = vmatpush1.msra.mxu0 0.0
        %876 = vmatprep.subr.mxu0 0.0
        %877 = vmatpush1.msra.mxu0 0.0
        %878 = vmatprep.subr.mxu0 0.0
        %879 = vmatpush1.msra.mxu0 0.0
        %880 = vmatprep.subr.mxu0 0.0
        %881 = vmatpush1.msra.mxu0 0.0
        %882 = vmatprep.subr.mxu0 0.0
        %883 = vmatpush1.msra.mxu0 0.0
        %884 = vmatprep.subr.mxu0 0.0
        %885 = vmatpush1.msra.mxu0 0.0
        %886 = vmatprep.subr.mxu0 0.0
        %887 = vmatpush1.msra.mxu0 0.0
        %888 = vmatprep.subr.mxu0 0.0
        %889 = vmatpush1.msra.mxu0 0.0
        %890 = vmatprep.subr.mxu0 0.0
        %891 = vmatpush1.msra.mxu0 0.0
        %892 = vmatprep.subr.mxu0 0.0
        %893 = vmatpush1.msra.mxu0 0.0
        %894 = vmatprep.subr.mxu0 0.0
        %895 = vmatpush1.msra.mxu0 0.0
        %896 = vmatprep.subr.mxu0 0.0
        %897 = vmatpush1.msra.mxu0 0.0
        %898 = vmatprep.subr.mxu0 0.0
        %899 = vmatpush1.msra.mxu0 0.0
        %900 = vmatprep.subr.mxu0 0.0
        %901 = vmatpush1.msra.mxu0 0.0
        %902 = vmatprep.subr.mxu0 0.0
        %903 = vmatpush1.msra.mxu0 0.0
        %904 = vmatprep.subr.mxu0 0.0
        %905 = vmatpush1.msra.mxu0 0.0
        %906 = vmatprep.subr.mxu0 0.0
        %907 = vmatpush1.msra.mxu0 0.0
        %908 = vmatprep.subr.mxu0 0.0
        %909 = vmatpush1.msra.mxu0 0.0
        %910 = vmatprep.subr.mxu0 0.0
        %911 = vmatpush1.msra.mxu0 0.0
        %912 = vmatprep.subr.mxu0 0.0
        %913 = vmatpush1.msra.mxu0 0.0
        %914 = vmatprep.subr.mxu0 0.0
        %915 = vmatpush1.msra.mxu0 0.0
        %916 = vmatprep.subr.mxu0 0.0
        %917 = vmatpush1.msra.mxu0 0.0
        %918 = vmatprep.subr.mxu0 0.0
        %919 = vmatpush1.msra.mxu0 0.0
        %920 = vmatprep.subr.mxu0 0.0
        %921 = vmatpush1.msra.mxu0 0.0
        %922 = vmatprep.subr.mxu0 0.0
        %923 = vmatpush1.msra.mxu0 0.0
        %924 = vmatprep.subr.mxu0 0.0
        %925 = vmatpush1.msra.mxu0 0.0
        %926 = vmatprep.mubr.f32.mxu0 0.0
        %927 = vmatmul.mubr.f32.gmra.mrb[0].mxu0 %v839
        %v928 = vpop.f32.mrb[0].mxu0
        %v929 = vadd.f32 %v837, %v928
        %v930 = vpop.f32.mrb[0].mxu0
        %931 = vmatprep.mubr.f32.mxu0 0.0
        %932 = vmatmul.mubr.f32.gmra.mrb[0].mxu0 %v842
        %v933 = vpop.f32.mrb[0].mxu0
        %v934 = vadd.f32 %v837, %v933
        %v935 = vpop.f32.mrb[0].mxu0
        %936 = vmatprep.mubr.f32.mxu0 0.0
        %937 = vmatmul.mubr.f32.gmra.mrb[0].mxu0 %v845
        %v938 = vpop.f32.mrb[0].mxu0
        %v939 = vadd.f32 %v837, %v938
        %v940 = vpop.f32.mrb[0].mxu0
        %941 = vmatprep.mubr.f32.mxu0 0.0
        %942 = vmatmul.mubr.f32.gmra.mrb[0].mxu0 %v848
        %v943 = vpop.f32.mrb[0].mxu0
        %v944 = vadd.f32 %v837, %v943
        %v945 = vpop.f32.mrb[0].mxu0
        %946 = vmatprep.mubr.f32.mxu0 0.0
        %947 = vmatmul.mubr.f32.gmra.mrb[0].mxu0 %v851
        %v948 = vpop.f32.mrb[0].mxu0
        %v949 = vadd.f32 %v837, %v948
        %v950 = vpop.f32.mrb[0].mxu0
        %951 = vmatprep.mubr.f32.mxu0 0.0
        %952 = vmatmul.mubr.f32.gmra.mrb[0].mxu0 %v854
        %v953 = vpop.f32.mrb[0].mxu0
        %v954 = vadd.f32 %v837, %v953
        %v955 = vpop.f32.mrb[0].mxu0
        %956 = vmatprep.mubr.f32.mxu0 0.0
        %957 = vmatmul.mubr.f32.gmra.mrb[0].mxu0 %v857
        %v958 = vpop.f32.mrb[0].mxu0
        %v959 = vadd.f32 %v837, %v958
        %v960 = vpop.f32.mrb[0].mxu0
        %961 = vmatprep.mubr.f32.mxu0 0.0
        %962 = vmatmul.mubr.f32.gmra.mrb[0].mxu0 %v860
        %v963 = vpop.f32.mrb[0].mxu0
        %v964 = vadd.f32 %v837, %v963
        %v965 = vpop.f32.mrb[0].mxu0
        %966 = vdwg.mxu0
        %v967 = vlaneseq
        %v968 = vshrl.u32 %v967, 7
        %v969 = vsub.s32 0, %v968
        %v970 = vrot.slane %v677, %v969
        %v972 = vsel %vm696, %v532, 0
        %v975 = vsel %vm696, %v533, 0
        %v978 = vsel %vm696, %v534, 0
        %v981 = vsel %vm696, %v535, 0
        %v984 = vsel %vm696, %v536, 0
        %v987 = vsel %vm696, %v537, 0
        %v990 = vsel %vm696, %v538, 0
        %v993 = vsel %vm696, %v539, 0
        %995 = vmatprep.subr.mxu0 0.0
        %996 = vmatpush1.msra.mxu0 %v666
        %997 = vmatprep.subr.mxu0 0.0
        %998 = vmatpush1.msra.mxu0 %v667
        %999 = vmatprep.subr.mxu0 0.0
        %1000 = vmatpush1.msra.mxu0 %v668
        %1001 = vmatprep.subr.mxu0 0.0
        %1002 = vmatpush1.msra.mxu0 %v669
        %1003 = vmatprep.subr.mxu0 0.0
        %1004 = vmatpush1.msra.mxu0 0.0
        %1005 = vmatprep.subr.mxu0 0.0
        %1006 = vmatpush1.msra.mxu0 0.0
        %1007 = vmatprep.subr.mxu0 0.0
        %1008 = vmatpush1.msra.mxu0 0.0
        %1009 = vmatprep.subr.mxu0 0.0
        %1010 = vmatpush1.msra.mxu0 0.0
        %1011 = vmatprep.subr.mxu0 0.0
        %1012 = vmatpush1.msra.mxu0 0.0
        %1013 = vmatprep.subr.mxu0 0.0
        %1014 = vmatpush1.msra.mxu0 0.0
        %1015 = vmatprep.subr.mxu0 0.0
        %1016 = vmatpush1.msra.mxu0 0.0
        %1017 = vmatprep.subr.mxu0 0.0
        %1018 = vmatpush1.msra.mxu0 0.0
        %1019 = vmatprep.subr.mxu0 0.0
        %1020 = vmatpush1.msra.mxu0 0.0
        %1021 = vmatprep.subr.mxu0 0.0
        %1022 = vmatpush1.msra.mxu0 0.0
        %1023 = vmatprep.subr.mxu0 0.0
        %1024 = vmatpush1.msra.mxu0 0.0
        %1025 = vmatprep.subr.mxu0 0.0
        %1026 = vmatpush1.msra.mxu0 0.0
        %1027 = vmatprep.subr.mxu0 0.0
        %1028 = vmatpush1.msra.mxu0 0.0
        %1029 = vmatprep.subr.mxu0 0.0
        %1030 = vmatpush1.msra.mxu0 0.0
        %1031 = vmatprep.subr.mxu0 0.0
        %1032 = vmatpush1.msra.mxu0 0.0
        %1033 = vmatprep.subr.mxu0 0.0
        %1034 = vmatpush1.msra.mxu0 0.0
        %1035 = vmatprep.subr.mxu0 0.0
        %1036 = vmatpush1.msra.mxu0 0.0
        %1037 = vmatprep.subr.mxu0 0.0
        %1038 = vmatpush1.msra.mxu0 0.0
        %1039 = vmatprep.subr.mxu0 0.0
        %1040 = vmatpush1.msra.mxu0 0.0
        %1041 = vmatprep.subr.mxu0 0.0
        %1042 = vmatpush1.msra.mxu0 0.0
        %1043 = vmatprep.subr.mxu0 0.0
        %1044 = vmatpush1.msra.mxu0 0.0
        %1045 = vmatprep.subr.mxu0 0.0
        %1046 = vmatpush1.msra.mxu0 0.0
        %1047 = vmatprep.subr.mxu0 0.0
        %1048 = vmatpush1.msra.mxu0 0.0
        %1049 = vmatprep.subr.mxu0 0.0
        %1050 = vmatpush1.msra.mxu0 0.0
        %1051 = vmatprep.subr.mxu0 0.0
        %1052 = vmatpush1.msra.mxu0 0.0
        %1053 = vmatprep.subr.mxu0 0.0
        %1054 = vmatpush1.msra.mxu0 0.0
        %1055 = vmatprep.subr.mxu0 0.0
        %1056 = vmatpush1.msra.mxu0 0.0
        %1057 = vmatprep.subr.mxu0 0.0
        %1058 = vmatpush1.msra.mxu0 0.0
        %1059 = vmatprep.mubr.f32.mxu0 0.0
        %1060 = vmatmul.mubr.f32.gmra.mrb[0].mxu0 %v972
        %v1061 = vpop.f32.mrb[0].mxu0
        %v1062 = vadd.f32 %v970, %v1061
        %v1063 = vpop.f32.mrb[0].mxu0
        %1064 = vmatprep.mubr.f32.mxu0 0.0
        %1065 = vmatmul.mubr.f32.gmra.mrb[0].mxu0 %v975
        %v1066 = vpop.f32.mrb[0].mxu0
        %v1067 = vadd.f32 %v970, %v1066
        %v1068 = vpop.f32.mrb[0].mxu0
        %1069 = vmatprep.mubr.f32.mxu0 0.0
        %1070 = vmatmul.mubr.f32.gmra.mrb[0].mxu0 %v978
        %v1071 = vpop.f32.mrb[0].mxu0
        %v1072 = vadd.f32 %v970, %v1071
        %v1073 = vpop.f32.mrb[0].mxu0
        %1074 = vmatprep.mubr.f32.mxu0 0.0
        %1075 = vmatmul.mubr.f32.gmra.mrb[0].mxu0 %v981
        %v1076 = vpop.f32.mrb[0].mxu0
        %v1077 = vadd.f32 %v970, %v1076
        %v1078 = vpop.f32.mrb[0].mxu0
        %1079 = vmatprep.mubr.f32.mxu0 0.0
        %1080 = vmatmul.mubr.f32.gmra.mrb[0].mxu0 %v984
        %v1081 = vpop.f32.mrb[0].mxu0
        %v1082 = vadd.f32 %v970, %v1081
        %v1083 = vpop.f32.mrb[0].mxu0
        %1084 = vmatprep.mubr.f32.mxu0 0.0
        %1085 = vmatmul.mubr.f32.gmra.mrb[0].mxu0 %v987
        %v1086 = vpop.f32.mrb[0].mxu0
        %v1087 = vadd.f32 %v970, %v1086
        %v1088 = vpop.f32.mrb[0].mxu0
        %1089 = vmatprep.mubr.f32.mxu0 0.0
        %1090 = vmatmul.mubr.f32.gmra.mrb[0].mxu0 %v990
        %v1091 = vpop.f32.mrb[0].mxu0
        %v1092 = vadd.f32 %v970, %v1091
        %v1093 = vpop.f32.mrb[0].mxu0
        %1094 = vmatprep.mubr.f32.mxu0 0.0
        %1095 = vmatmul.mubr.f32.gmra.mrb[0].mxu0 %v993
        %v1096 = vpop.f32.mrb[0].mxu0
        %v1097 = vadd.f32 %v970, %v1096
        %v1098 = vpop.f32.mrb[0].mxu0
        %1099 = vdwg.mxu0
        %vm1100 = vcmask 64512
        %v1102 = vsel %vm1100, %v788, 0
        %v1105 = vsel %vm1100, %v793, 0
        %v1108 = vsel %vm1100, %v798, 0
        %v1111 = vsel %vm1100, %v803, 0
        %v1114 = vsel %vm1100, %v808, 0
        %v1117 = vsel %vm1100, %v813, 0
        %v1120 = vsel %vm1100, %v818, 0
        %v1123 = vsel %vm1100, %v823, 0
        %v1126 = vsel %vm1100, %v929, 0
        %v1129 = vsel %vm1100, %v934, 0
        %v1132 = vsel %vm1100, %v939, 0
        %v1135 = vsel %vm1100, %v944, 0
        %v1138 = vsel %vm1100, %v949, 0
        %v1141 = vsel %vm1100, %v954, 0
        %v1144 = vsel %vm1100, %v959, 0
        %v1147 = vsel %vm1100, %v964, 0
        %1149 = vmatprep.subr.mxu0 0.0
        %1150 = vmatpush1.xpose.msra.mxu0 %v1126
        %1151 = vmatprep.subr.mxu0 0.0
        %1152 = vmatpush1.xpose.msra.mxu0 %v1129
        %1153 = vmatprep.subr.mxu0 0.0
        %1154 = vmatpush1.xpose.msra.mxu0 %v1132
        %1155 = vmatprep.subr.mxu0 0.0
        %1156 = vmatpush1.xpose.msra.mxu0 %v1135
        %1157 = vmatprep.subr.mxu0 0.0
        %1158 = vmatpush1.xpose.msra.mxu0 %v1138
        %1159 = vmatprep.subr.mxu0 0.0
        %1160 = vmatpush1.xpose.msra.mxu0 %v1141
        %1161 = vmatprep.subr.mxu0 0.0
        %1162 = vmatpush1.xpose.msra.mxu0 %v1144
        %1163 = vmatprep.subr.mxu0 0.0
        %1164 = vmatpush1.xpose.msra.mxu0 %v1147
        %1165 = vmatprep.subr.mxu0 0.0
        %1166 = vmatpush1.xpose.msra.mxu0 0.0
        %1167 = vmatprep.subr.mxu0 0.0
        %1168 = vmatpush1.xpose.msra.mxu0 0.0
        %1169 = vmatprep.subr.mxu0 0.0
        %1170 = vmatpush1.xpose.msra.mxu0 0.0
        %1171 = vmatprep.subr.mxu0 0.0
        %1172 = vmatpush1.xpose.msra.mxu0 0.0
        %1173 = vmatprep.subr.mxu0 0.0
        %1174 = vmatpush1.xpose.msra.mxu0 0.0
        %1175 = vmatprep.subr.mxu0 0.0
        %1176 = vmatpush1.xpose.msra.mxu0 0.0
        %1177 = vmatprep.subr.mxu0 0.0
        %1178 = vmatpush1.xpose.msra.mxu0 0.0
        %1179 = vmatprep.subr.mxu0 0.0
        %1180 = vmatpush1.xpose.msra.mxu0 0.0
        %1181 = vmatprep.subr.mxu0 0.0
        %1182 = vmatpush1.xpose.msra.mxu0 0.0
        %1183 = vmatprep.subr.mxu0 0.0
        %1184 = vmatpush1.xpose.msra.mxu0 0.0
        %1185 = vmatprep.subr.mxu0 0.0
        %1186 = vmatpush1.xpose.msra.mxu0 0.0
        %1187 = vmatprep.subr.mxu0 0.0
        %1188 = vmatpush1.xpose.msra.mxu0 0.0
        %1189 = vmatprep.subr.mxu0 0.0
        %1190 = vmatpush1.xpose.msra.mxu0 0.0
        %1191 = vmatprep.subr.mxu0 0.0
        %1192 = vmatpush1.xpose.msra.mxu0 0.0
        %1193 = vmatprep.subr.mxu0 0.0
        %1194 = vmatpush1.xpose.msra.mxu0 0.0
        %1195 = vmatprep.subr.mxu0 0.0
        %1196 = vmatpush1.xpose.msra.mxu0 0.0
        %1197 = vmatprep.subr.mxu0 0.0
        %1198 = vmatpush1.xpose.msra.mxu0 0.0
        %1199 = vmatprep.subr.mxu0 0.0
        %1200 = vmatpush1.xpose.msra.mxu0 0.0
        %1201 = vmatprep.subr.mxu0 0.0
        %1202 = vmatpush1.xpose.msra.mxu0 0.0
        %1203 = vmatprep.subr.mxu0 0.0
        %1204 = vmatpush1.xpose.msra.mxu0 0.0
        %1205 = vmatprep.subr.mxu0 0.0
        %1206 = vmatpush1.xpose.msra.mxu0 0.0
        %1207 = vmatprep.subr.mxu0 0.0
        %1208 = vmatpush1.xpose.msra.mxu0 0.0
        %1209 = vmatprep.subr.mxu0 0.0
        %1210 = vmatpush1.xpose.msra.mxu0 0.0
        %1211 = vmatprep.subr.mxu0 0.0
        %1212 = vmatpush1.xpose.msra.mxu0 0.0
        %1213 = vmatprep.mubr.f32.mxu0 0.0
        %1214 = vmatmul.mubr.f32.gmra.mrb[0].mxu0 %v1102
        %v1215 = vpop.f32.mrb[0].mxu0
        %v1216 = vadd.f32 0.0, %v1215
        %v1217 = vpop.f32.mrb[0].mxu0
        %1218 = vmatprep.mubr.f32.mxu0 0.0
        %1219 = vmatmul.mubr.f32.gmra.mrb[0].mxu0 %v1105
        %v1220 = vpop.f32.mrb[0].mxu0
        %v1221 = vadd.f32 0.0, %v1220
        %v1222 = vpop.f32.mrb[0].mxu0
        %1223 = vmatprep.mubr.f32.mxu0 0.0
        %1224 = vmatmul.mubr.f32.gmra.mrb[0].mxu0 %v1108
        %v1225 = vpop.f32.mrb[0].mxu0
        %v1226 = vadd.f32 0.0, %v1225
        %v1227 = vpop.f32.mrb[0].mxu0
        %1228 = vmatprep.mubr.f32.mxu0 0.0
        %1229 = vmatmul.mubr.f32.gmra.mrb[0].mxu0 %v1111
        %v1230 = vpop.f32.mrb[0].mxu0
        %v1231 = vadd.f32 0.0, %v1230
        %v1232 = vpop.f32.mrb[0].mxu0
        %1233 = vmatprep.mubr.f32.mxu0 0.0
        %1234 = vmatmul.mubr.f32.gmra.mrb[0].mxu0 %v1114
        %v1235 = vpop.f32.mrb[0].mxu0
        %v1236 = vadd.f32 0.0, %v1235
        %v1237 = vpop.f32.mrb[0].mxu0
        %1238 = vmatprep.mubr.f32.mxu0 0.0
        %1239 = vmatmul.mubr.f32.gmra.mrb[0].mxu0 %v1117
        %v1240 = vpop.f32.mrb[0].mxu0
        %v1241 = vadd.f32 0.0, %v1240
        %v1242 = vpop.f32.mrb[0].mxu0
        %1243 = vmatprep.mubr.f32.mxu0 0.0
        %1244 = vmatmul.mubr.f32.gmra.mrb[0].mxu0 %v1120
        %v1245 = vpop.f32.mrb[0].mxu0
        %v1246 = vadd.f32 0.0, %v1245
        %v1247 = vpop.f32.mrb[0].mxu0
        %1248 = vmatprep.mubr.f32.mxu0 0.0
        %1249 = vmatmul.mubr.f32.gmra.mrb[0].mxu0 %v1123
        %v1250 = vpop.f32.mrb[0].mxu0
        %v1251 = vadd.f32 0.0, %v1250
        %v1252 = vpop.f32.mrb[0].mxu0
        %1253 = vdwg.mxu0
        %v1254 = vmul.f32 %v1216, 0.35355338
        %v1255 = vmul.f32 %v1221, 0.35355338
        %v1256 = vmul.f32 %v1226, 0.35355338
        %v1257 = vmul.f32 %v1231, 0.35355338
        %v1258 = vmul.f32 %v1236, 0.35355338
        %v1259 = vmul.f32 %v1241, 0.35355338
        %v1260 = vmul.f32 %v1246, 0.35355338
        %v1261 = vmul.f32 %v1251, 0.35355338
        %vm1262 = vcmask 523264
        %v1263 = vsel %vm1262, %v1254, -inf
        %1264 = vmax.xlane.f32.xlu0 %v1263
        %v1265 = vpop.xlane.xlu0 %1264
        %v1266 = vsel %vm1262, %v1255, -inf
        %1267 = vmax.xlane.f32.xlu0 %v1266
        %v1268 = vpop.xlane.xlu0 %1267
        %v1269 = vsel %vm1262, %v1256, -inf
        %1270 = vmax.xlane.f32.xlu0 %v1269
        %v1271 = vpop.xlane.xlu0 %1270
        %v1272 = vsel %vm1262, %v1257, -inf
        %1273 = vmax.xlane.f32.xlu0 %v1272
        %v1274 = vpop.xlane.xlu0 %1273
        %v1275 = vsel %vm1262, %v1258, -inf
        %1276 = vmax.xlane.f32.xlu0 %v1275
        %v1277 = vpop.xlane.xlu0 %1276
        %v1278 = vsel %vm1262, %v1259, -inf
        %1279 = vmax.xlane.f32.xlu0 %v1278
        %v1280 = vpop.xlane.xlu0 %1279
        %v1281 = vsel %vm1262, %v1260, -inf
        %1282 = vmax.xlane.f32.xlu0 %v1281
        %v1283 = vpop.xlane.xlu0 %1282
        %v1284 = vsel %vm1262, %v1261, -inf
        %1285 = vmax.xlane.f32.xlu0 %v1284
        %v1286 = vpop.xlane.xlu0 %1285
        %v1287 = vsub.f32 %v1254, %v1265
        %v1288 = vsub.f32 %v1255, %v1268
        %v1289 = vsub.f32 %v1256, %v1271
        %v1290 = vsub.f32 %v1257, %v1274
        %v1291 = vsub.f32 %v1258, %v1277
        %v1292 = vsub.f32 %v1259, %v1280
        %v1293 = vsub.f32 %v1260, %v1283
        %v1294 = vsub.f32 %v1261, %v1286
        %v1295 = vmul.f32 %v1287, 1.442695
        %v1296 = vpow.pop %v1295
        %v1297 = vmul.f32 %v1288, 1.442695
        %v1298 = vpow.pop %v1297
        %v1299 = vmul.f32 %v1289, 1.442695
        %v1300 = vpow.pop %v1299
        %v1301 = vmul.f32 %v1290, 1.442695
        %v1302 = vpow.pop %v1301
        %v1303 = vmul.f32 %v1291, 1.442695
        %v1304 = vpow.pop %v1303
        %v1305 = vmul.f32 %v1292, 1.442695
        %v1306 = vpow.pop %v1305
        %v1307 = vmul.f32 %v1293, 1.442695
        %v1308 = vpow.pop %v1307
        %v1309 = vmul.f32 %v1294, 1.442695
        %v1310 = vpow.pop %v1309
        %v1311 = vsel %vm1262, %v1296, 0.0
        %1312 = vadd.xlane.f32.xlu0 %v1311
        %v1313 = vpop.xlane.xlu0 %1312
        %v1314 = vsel %vm1262, %v1298, 0.0
        %1315 = vadd.xlane.f32.xlu0 %v1314
        %v1316 = vpop.xlane.xlu0 %1315
        %v1317 = vsel %vm1262, %v1300, 0.0
        %1318 = vadd.xlane.f32.xlu0 %v1317
        %v1319 = vpop.xlane.xlu0 %1318
        %v1320 = vsel %vm1262, %v1302, 0.0
        %1321 = vadd.xlane.f32.xlu0 %v1320
        %v1322 = vpop.xlane.xlu0 %1321
        %v1323 = vsel %vm1262, %v1304, 0.0
        %1324 = vadd.xlane.f32.xlu0 %v1323
        %v1325 = vpop.xlane.xlu0 %1324
        %v1326 = vsel %vm1262, %v1306, 0.0
        %1327 = vadd.xlane.f32.xlu0 %v1326
        %v1328 = vpop.xlane.xlu0 %1327
        %v1329 = vsel %vm1262, %v1308, 0.0
        %1330 = vadd.xlane.f32.xlu0 %v1329
        %v1331 = vpop.xlane.xlu0 %1330
        %v1332 = vsel %vm1262, %v1310, 0.0
        %1333 = vadd.xlane.f32.xlu0 %v1332
        %v1334 = vpop.xlane.xlu0 %1333
        %v1335 = vrcp.pop %v1313
        %v1336 = vrcp.pop %v1316
        %v1337 = vrcp.pop %v1319
        %v1338 = vrcp.pop %v1322
        %v1339 = vrcp.pop %v1325
        %v1340 = vrcp.pop %v1328
        %v1341 = vrcp.pop %v1331
        %v1342 = vrcp.pop %v1334
        %v1343 = vmul.f32 %v1296, %v1335
        %v1344 = vmul.f32 %v1298, %v1336
        %v1345 = vmul.f32 %v1300, %v1337
        %v1346 = vmul.f32 %v1302, %v1338
        %v1347 = vmul.f32 %v1304, %v1339
        %v1348 = vmul.f32 %v1306, %v1340
        %v1349 = vmul.f32 %v1308, %v1341
        %v1350 = vmul.f32 %v1310, %v1342
        %v1352 = vsel %vm1262, %v1343, 0
        %v1355 = vsel %vm1262, %v1344, 0
        %v1358 = vsel %vm1262, %v1345, 0
        %v1361 = vsel %vm1262, %v1346, 0
        %v1364 = vsel %vm1262, %v1347, 0
        %v1367 = vsel %vm1262, %v1348, 0
        %v1370 = vsel %vm1262, %v1349, 0
        %v1373 = vsel %vm1262, %v1350, 0
        %1375 = vmatprep.subr.mxu0 0.0
        %1376 = vmatpush1.msra.mxu0 %v1062
        %1377 = vmatprep.subr.mxu0 0.0
        %1378 = vmatpush1.msra.mxu0 %v1067
        %1379 = vmatprep.subr.mxu0 0.0
        %1380 = vmatpush1.msra.mxu0 %v1072
        %1381 = vmatprep.subr.mxu0 0.0
        %1382 = vmatpush1.msra.mxu0 %v1077
        %1383 = vmatprep.subr.mxu0 0.0
        %1384 = vmatpush1.msra.mxu0 %v1082
        %1385 = vmatprep.subr.mxu0 0.0
        %1386 = vmatpush1.msra.mxu0 %v1087
        %1387 = vmatprep.subr.mxu0 0.0
        %1388 = vmatpush1.msra.mxu0 %v1092
        %1389 = vmatprep.subr.mxu0 0.0
        %1390 = vmatpush1.msra.mxu0 %v1097
        %1391 = vmatprep.subr.mxu0 0.0
        %1392 = vmatpush1.msra.mxu0 0.0
        %1393 = vmatprep.subr.mxu0 0.0
        %1394 = vmatpush1.msra.mxu0 0.0
        %1395 = vmatprep.subr.mxu0 0.0
        %1396 = vmatpush1.msra.mxu0 0.0
        %1397 = vmatprep.subr.mxu0 0.0
        %1398 = vmatpush1.msra.mxu0 0.0
        %1399 = vmatprep.subr.mxu0 0.0
        %1400 = vmatpush1.msra.mxu0 0.0
        %1401 = vmatprep.subr.mxu0 0.0
        %1402 = vmatpush1.msra.mxu0 0.0
        %1403 = vmatprep.subr.mxu0 0.0
        %1404 = vmatpush1.msra.mxu0 0.0
        %1405 = vmatprep.subr.mxu0 0.0
        %1406 = vmatpush1.msra.mxu0 0.0
        %1407 = vmatprep.subr.mxu0 0.0
        %1408 = vmatpush1.msra.mxu0 0.0
        %1409 = vmatprep.subr.mxu0 0.0
        %1410 = vmatpush1.msra.mxu0 0.0
        %1411 = vmatprep.subr.mxu0 0.0
        %1412 = vmatpush1.msra.mxu0 0.0
        %1413 = vmatprep.subr.mxu0 0.0
        %1414 = vmatpush1.msra.mxu0 0.0
        %1415 = vmatprep.subr.mxu0 0.0
        %1416 = vmatpush1.msra.mxu0 0.0
        %1417 = vmatprep.subr.mxu0 0.0
        %1418 = vmatpush1.msra.mxu0 0.0
        %1419 = vmatprep.subr.mxu0 0.0
        %1420 = vmatpush1.msra.mxu0 0.0
        %1421 = vmatprep.subr.mxu0 0.0
        %1422 = vmatpush1.msra.mxu0 0.0
        %1423 = vmatprep.subr.mxu0 0.0
        %1424 = vmatpush1.msra.mxu0 0.0
        %1425 = vmatprep.subr.mxu0 0.0
        %1426 = vmatpush1.msra.mxu0 0.0
        %1427 = vmatprep.subr.mxu0 0.0
        %1428 = vmatpush1.msra.mxu0 0.0
        %1429 = vmatprep.subr.mxu0 0.0
        %1430 = vmatpush1.msra.mxu0 0.0
        %1431 = vmatprep.subr.mxu0 0.0
        %1432 = vmatpush1.msra.mxu0 0.0
        %1433 = vmatprep.subr.mxu0 0.0
        %1434 = vmatpush1.msra.mxu0 0.0
        %1435 = vmatprep.subr.mxu0 0.0
        %1436 = vmatpush1.msra.mxu0 0.0
        %1437 = vmatprep.subr.mxu0 0.0
        %1438 = vmatpush1.msra.mxu0 0.0
        %1439 = vmatprep.mubr.f32.mxu0 0.0
        %1440 = vmatmul.mubr.f32.gmra.mrb[0].mxu0 %v1352
        %v1441 = vpop.f32.mrb[0].mxu0
        %v1442 = vadd.f32 0.0, %v1441
        %v1443 = vpop.f32.mrb[0].mxu0
        %1444 = vmatprep.mubr.f32.mxu0 0.0
        %1445 = vmatmul.mubr.f32.gmra.mrb[0].mxu0 %v1355
        %v1446 = vpop.f32.mrb[0].mxu0
        %v1447 = vadd.f32 0.0, %v1446
        %v1448 = vpop.f32.mrb[0].mxu0
        %1449 = vmatprep.mubr.f32.mxu0 0.0
        %1450 = vmatmul.mubr.f32.gmra.mrb[0].mxu0 %v1358
        %v1451 = vpop.f32.mrb[0].mxu0
        %v1452 = vadd.f32 0.0, %v1451
        %v1453 = vpop.f32.mrb[0].mxu0
        %1454 = vmatprep.mubr.f32.mxu0 0.0
        %1455 = vmatmul.mubr.f32.gmra.mrb[0].mxu0 %v1361
        %v1456 = vpop.f32.mrb[0].mxu0
        %v1457 = vadd.f32 0.0, %v1456
        %v1458 = vpop.f32.mrb[0].mxu0
        %1459 = vmatprep.mubr.f32.mxu0 0.0
        %1460 = vmatmul.mubr.f32.gmra.mrb[0].mxu0 %v1364
        %v1461 = vpop.f32.mrb[0].mxu0
        %v1462 = vadd.f32 0.0, %v1461
        %v1463 = vpop.f32.mrb[0].mxu0
        %1464 = vmatprep.mubr.f32.mxu0 0.0
        %1465 = vmatmul.mubr.f32.gmra.mrb[0].mxu0 %v1367
        %v1466 = vpop.f32.mrb[0].mxu0
        %v1467 = vadd.f32 0.0, %v1466
        %v1468 = vpop.f32.mrb[0].mxu0
        %1469 = vmatprep.mubr.f32.mxu0 0.0
        %1470 = vmatmul.mubr.f32.gmra.mrb[0].mxu0 %v1370
        %v1471 = vpop.f32.mrb[0].mxu0
        %v1472 = vadd.f32 0.0, %v1471
        %v1473 = vpop.f32.mrb[0].mxu0
        %1474 = vmatprep.mubr.f32.mxu0 0.0
        %1475 = vmatmul.mubr.f32.gmra.mrb[0].mxu0 %v1373
        %v1476 = vpop.f32.mrb[0].mxu0
        %v1477 = vadd.f32 0.0, %v1476
        %v1478 = vpop.f32.mrb[0].mxu0
        %1479 = vdwg.mxu0
        %1480 = vst.msk [vmem:[#allocation2] sm:$0xff] %vm1100, %v1442
        %1481 = vst.msk [vmem:[#allocation2 + $0x8] sm:$0xff] %vm1100, %v1447
        %1482 = vst.msk [vmem:[#allocation2 + $0x10] sm:$0xff] %vm1100, %v1452
        %1483 = vst.msk [vmem:[#allocation2 + $0x18] sm:$0xff] %vm1100, %v1457
        %1484 = vst.msk [vmem:[#allocation2 + $0x20] sm:$0xff] %vm1100, %v1462
        %1485 = vst.msk [vmem:[#allocation2 + $0x28] sm:$0xff] %vm1100, %v1467
        %1486 = vst.msk [vmem:[#allocation2 + $0x30] sm:$0xff] %vm1100, %v1472
        %1487 = vst.msk [vmem:[#allocation2 + $0x38] sm:$0xff] %vm1100, %v1477
        %1488 = vrot.lane.b32.xlu0 %v788, 120
        %v1489 = vpop.permute.xlu0 %1488
        %1490 = vrot.lane.b32.xlu0 %v793, 120
        %v1491 = vpop.permute.xlu0 %1490
        %1492 = vrot.lane.b32.xlu0 %v798, 120
        %v1493 = vpop.permute.xlu0 %1492
        %1494 = vrot.lane.b32.xlu0 %v803, 120
        %v1495 = vpop.permute.xlu0 %1494
        %1496 = vrot.lane.b32.xlu0 %v808, 120
        %v1497 = vpop.permute.xlu0 %1496
        %1498 = vrot.lane.b32.xlu0 %v813, 120
        %v1499 = vpop.permute.xlu0 %1498
        %1500 = vrot.lane.b32.xlu0 %v818, 120
        %v1501 = vpop.permute.xlu0 %1500
        %1502 = vrot.lane.b32.xlu0 %v823, 120
        %v1503 = vpop.permute.xlu0 %1502
        %1504 = vrot.lane.b32.xlu0 %v929, 120
        %v1505 = vpop.permute.xlu0 %1504
        %1506 = vrot.lane.b32.xlu0 %v934, 120
        %v1507 = vpop.permute.xlu0 %1506
        %1508 = vrot.lane.b32.xlu0 %v939, 120
        %v1509 = vpop.permute.xlu0 %1508
        %1510 = vrot.lane.b32.xlu0 %v944, 120
        %v1511 = vpop.permute.xlu0 %1510
        %1512 = vrot.lane.b32.xlu0 %v949, 120
        %v1513 = vpop.permute.xlu0 %1512
        %1514 = vrot.lane.b32.xlu0 %v954, 120
        %v1515 = vpop.permute.xlu0 %1514
        %1516 = vrot.lane.b32.xlu0 %v959, 120
        %v1517 = vpop.permute.xlu0 %1516
        %1518 = vrot.lane.b32.xlu0 %v964, 120
        %v1519 = vpop.permute.xlu0 %1518
        %v1520 = vsel %vm1100, %v1489, 0
        %v1522 = vsel %vm1100, %v1491, 0
        %v1524 = vsel %vm1100, %v1493, 0
        %v1526 = vsel %vm1100, %v1495, 0
        %v1528 = vsel %vm1100, %v1497, 0
        %v1530 = vsel %vm1100, %v1499, 0
        %v1532 = vsel %vm1100, %v1501, 0
        %v1534 = vsel %vm1100, %v1503, 0
        %v1536 = vsel %vm1100, %v1505, 0
        %v1538 = vsel %vm1100, %v1507, 0
        %v1540 = vsel %vm1100, %v1509, 0
        %v1542 = vsel %vm1100, %v1511, 0
        %v1544 = vsel %vm1100, %v1513, 0
        %v1546 = vsel %vm1100, %v1515, 0
        %v1548 = vsel %vm1100, %v1517, 0
        %v1550 = vsel %vm1100, %v1519, 0
        %1552 = vmatprep.subr.mxu0 0.0
        %1553 = vmatpush1.xpose.msra.mxu0 %v1536
        %1554 = vmatprep.subr.mxu0 0.0
        %1555 = vmatpush1.xpose.msra.mxu0 %v1538
        %1556 = vmatprep.subr.mxu0 0.0
        %1557 = vmatpush1.xpose.msra.mxu0 %v1540
        %1558 = vmatprep.subr.mxu0 0.0
        %1559 = vmatpush1.xpose.msra.mxu0 %v1542
        %1560 = vmatprep.subr.mxu0 0.0
        %1561 = vmatpush1.xpose.msra.mxu0 %v1544
        %1562 = vmatprep.subr.mxu0 0.0
        %1563 = vmatpush1.xpose.msra.mxu0 %v1546
        %1564 = vmatprep.subr.mxu0 0.0
        %1565 = vmatpush1.xpose.msra.mxu0 %v1548
        %1566 = vmatprep.subr.mxu0 0.0
        %1567 = vmatpush1.xpose.msra.mxu0 %v1550
        %1568 = vmatprep.subr.mxu0 0.0
        %1569 = vmatpush1.xpose.msra.mxu0 0.0
        %1570 = vmatprep.subr.mxu0 0.0
        %1571 = vmatpush1.xpose.msra.mxu0 0.0
        %1572 = vmatprep.subr.mxu0 0.0
        %1573 = vmatpush1.xpose.msra.mxu0 0.0
        %1574 = vmatprep.subr.mxu0 0.0
        %1575 = vmatpush1.xpose.msra.mxu0 0.0
        %1576 = vmatprep.subr.mxu0 0.0
        %1577 = vmatpush1.xpose.msra.mxu0 0.0
        %1578 = vmatprep.subr.mxu0 0.0
        %1579 = vmatpush1.xpose.msra.mxu0 0.0
        %1580 = vmatprep.subr.mxu0 0.0
        %1581 = vmatpush1.xpose.msra.mxu0 0.0
        %1582 = vmatprep.subr.mxu0 0.0
        %1583 = vmatpush1.xpose.msra.mxu0 0.0
        %1584 = vmatprep.subr.mxu0 0.0
        %1585 = vmatpush1.xpose.msra.mxu0 0.0
        %1586 = vmatprep.subr.mxu0 0.0
        %1587 = vmatpush1.xpose.msra.mxu0 0.0
        %1588 = vmatprep.subr.mxu0 0.0
        %1589 = vmatpush1.xpose.msra.mxu0 0.0
        %1590 = vmatprep.subr.mxu0 0.0
        %1591 = vmatpush1.xpose.msra.mxu0 0.0
        %1592 = vmatprep.subr.mxu0 0.0
        %1593 = vmatpush1.xpose.msra.mxu0 0.0
        %1594 = vmatprep.subr.mxu0 0.0
        %1595 = vmatpush1.xpose.msra.mxu0 0.0
        %1596 = vmatprep.subr.mxu0 0.0
        %1597 = vmatpush1.xpose.msra.mxu0 0.0
        %1598 = vmatprep.subr.mxu0 0.0
        %1599 = vmatpush1.xpose.msra.mxu0 0.0
        %1600 = vmatprep.subr.mxu0 0.0
        %1601 = vmatpush1.xpose.msra.mxu0 0.0
        %1602 = vmatprep.subr.mxu0 0.0
        %1603 = vmatpush1.xpose.msra.mxu0 0.0
        %1604 = vmatprep.subr.mxu0 0.0
        %1605 = vmatpush1.xpose.msra.mxu0 0.0
        %1606 = vmatprep.subr.mxu0 0.0
        %1607 = vmatpush1.xpose.msra.mxu0 0.0
        %1608 = vmatprep.subr.mxu0 0.0
        %1609 = vmatpush1.xpose.msra.mxu0 0.0
        %1610 = vmatprep.subr.mxu0 0.0
        %1611 = vmatpush1.xpose.msra.mxu0 0.0
        %1612 = vmatprep.subr.mxu0 0.0
        %1613 = vmatpush1.xpose.msra.mxu0 0.0
        %1614 = vmatprep.subr.mxu0 0.0
        %1615 = vmatpush1.xpose.msra.mxu0 0.0
        %1616 = vmatprep.mubr.f32.mxu0 0.0
        %1617 = vmatmul.mubr.f32.gmra.mrb[0].mxu0 %v1520
        %v1618 = vpop.f32.mrb[0].mxu0
        %v1619 = vadd.f32 0.0, %v1618
        %v1620 = vpop.f32.mrb[0].mxu0
        %1621 = vmatprep.mubr.f32.mxu0 0.0
        %1622 = vmatmul.mubr.f32.gmra.mrb[0].mxu0 %v1522
        %v1623 = vpop.f32.mrb[0].mxu0
        %v1624 = vadd.f32 0.0, %v1623
        %v1625 = vpop.f32.mrb[0].mxu0
        %1626 = vmatprep.mubr.f32.mxu0 0.0
        %1627 = vmatmul.mubr.f32.gmra.mrb[0].mxu0 %v1524
        %v1628 = vpop.f32.mrb[0].mxu0
        %v1629 = vadd.f32 0.0, %v1628
        %v1630 = vpop.f32.mrb[0].mxu0
        %1631 = vmatprep.mubr.f32.mxu0 0.0
        %1632 = vmatmul.mubr.f32.gmra.mrb[0].mxu0 %v1526
        %v1633 = vpop.f32.mrb[0].mxu0
        %v1634 = vadd.f32 0.0, %v1633
        %v1635 = vpop.f32.mrb[0].mxu0
        %1636 = vmatprep.mubr.f32.mxu0 0.0
        %1637 = vmatmul.mubr.f32.gmra.mrb[0].mxu0 %v1528
        %v1638 = vpop.f32.mrb[0].mxu0
        %v1639 = vadd.f32 0.0, %v1638
        %v1640 = vpop.f32.mrb[0].mxu0
        %1641 = vmatprep.mubr.f32.mxu0 0.0
        %1642 = vmatmul.mubr.f32.gmra.mrb[0].mxu0 %v1530
        %v1643 = vpop.f32.mrb[0].mxu0
        %v1644 = vadd.f32 0.0, %v1643
        %v1645 = vpop.f32.mrb[0].mxu0
        %1646 = vmatprep.mubr.f32.mxu0 0.0
        %1647 = vmatmul.mubr.f32.gmra.mrb[0].mxu0 %v1532
        %v1648 = vpop.f32.mrb[0].mxu0
        %v1649 = vadd.f32 0.0, %v1648
        %v1650 = vpop.f32.mrb[0].mxu0
        %1651 = vmatprep.mubr.f32.mxu0 0.0
        %1652 = vmatmul.mubr.f32.gmra.mrb[0].mxu0 %v1534
        %v1653 = vpop.f32.mrb[0].mxu0
        %v1654 = vadd.f32 0.0, %v1653
        %v1655 = vpop.f32.mrb[0].mxu0
        %1656 = vdwg.mxu0
        %v1657 = vmul.f32 %v1619, 0.35355338
        %v1658 = vmul.f32 %v1624, 0.35355338
        %v1659 = vmul.f32 %v1629, 0.35355338
        %v1660 = vmul.f32 %v1634, 0.35355338
        %v1661 = vmul.f32 %v1639, 0.35355338
        %v1662 = vmul.f32 %v1644, 0.35355338
        %v1663 = vmul.f32 %v1649, 0.35355338
        %v1664 = vmul.f32 %v1654, 0.35355338
        %v1665 = vsel %vm1262, %v1657, -inf
        %1666 = vmax.xlane.f32.xlu0 %v1665
        %v1667 = vpop.xlane.xlu0 %1666
        %v1668 = vsel %vm1262, %v1658, -inf
        %1669 = vmax.xlane.f32.xlu0 %v1668
        %v1670 = vpop.xlane.xlu0 %1669
        %v1671 = vsel %vm1262, %v1659, -inf
        %1672 = vmax.xlane.f32.xlu0 %v1671
        %v1673 = vpop.xlane.xlu0 %1672
        %v1674 = vsel %vm1262, %v1660, -inf
        %1675 = vmax.xlane.f32.xlu0 %v1674
        %v1676 = vpop.xlane.xlu0 %1675
        %v1677 = vsel %vm1262, %v1661, -inf
        %1678 = vmax.xlane.f32.xlu0 %v1677
        %v1679 = vpop.xlane.xlu0 %1678
        %v1680 = vsel %vm1262, %v1662, -inf
        %1681 = vmax.xlane.f32.xlu0 %v1680
        %v1682 = vpop.xlane.xlu0 %1681
        %v1683 = vsel %vm1262, %v1663, -inf
        %1684 = vmax.xlane.f32.xlu0 %v1683
        %v1685 = vpop.xlane.xlu0 %1684
        %v1686 = vsel %vm1262, %v1664, -inf
        %1687 = vmax.xlane.f32.xlu0 %v1686
        %v1688 = vpop.xlane.xlu0 %1687
        %v1689 = vsub.f32 %v1657, %v1667
        %v1690 = vsub.f32 %v1658, %v1670
        %v1691 = vsub.f32 %v1659, %v1673
        %v1692 = vsub.f32 %v1660, %v1676
        %v1693 = vsub.f32 %v1661, %v1679
        %v1694 = vsub.f32 %v1662, %v1682
        %v1695 = vsub.f32 %v1663, %v1685
        %v1696 = vsub.f32 %v1664, %v1688
        %v1697 = vmul.f32 %v1689, 1.442695
        %v1698 = vpow.pop %v1697
        %v1699 = vmul.f32 %v1690, 1.442695
        %v1700 = vpow.pop %v1699
        %v1701 = vmul.f32 %v1691, 1.442695
        %v1702 = vpow.pop %v1701
        %v1703 = vmul.f32 %v1692, 1.442695
        %v1704 = vpow.pop %v1703
        %v1705 = vmul.f32 %v1693, 1.442695
        %v1706 = vpow.pop %v1705
        %v1707 = vmul.f32 %v1694, 1.442695
        %v1708 = vpow.pop %v1707
        %v1709 = vmul.f32 %v1695, 1.442695
        %v1710 = vpow.pop %v1709
        %v1711 = vmul.f32 %v1696, 1.442695
        %v1712 = vpow.pop %v1711
        %v1713 = vsel %vm1262, %v1698, 0.0
        %1714 = vadd.xlane.f32.xlu0 %v1713
        %v1715 = vpop.xlane.xlu0 %1714
        %v1716 = vsel %vm1262, %v1700, 0.0
        %1717 = vadd.xlane.f32.xlu0 %v1716
        %v1718 = vpop.xlane.xlu0 %1717
        %v1719 = vsel %vm1262, %v1702, 0.0
        %1720 = vadd.xlane.f32.xlu0 %v1719
        %v1721 = vpop.xlane.xlu0 %1720
        %v1722 = vsel %vm1262, %v1704, 0.0
        %1723 = vadd.xlane.f32.xlu0 %v1722
        %v1724 = vpop.xlane.xlu0 %1723
        %v1725 = vsel %vm1262, %v1706, 0.0
        %1726 = vadd.xlane.f32.xlu0 %v1725
        %v1727 = vpop.xlane.xlu0 %1726
        %v1728 = vsel %vm1262, %v1708, 0.0
        %1729 = vadd.xlane.f32.xlu0 %v1728
        %v1730 = vpop.xlane.xlu0 %1729
        %v1731 = vsel %vm1262, %v1710, 0.0
        %1732 = vadd.xlane.f32.xlu0 %v1731
        %v1733 = vpop.xlane.xlu0 %1732
        %v1734 = vsel %vm1262, %v1712, 0.0
        %1735 = vadd.xlane.f32.xlu0 %v1734
        %v1736 = vpop.xlane.xlu0 %1735
        %v1737 = vrcp.pop %v1715
        %v1738 = vrcp.pop %v1718
        %v1739 = vrcp.pop %v1721
        %v1740 = vrcp.pop %v1724
        %v1741 = vrcp.pop %v1727
        %v1742 = vrcp.pop %v1730
        %v1743 = vrcp.pop %v1733
        %v1744 = vrcp.pop %v1736
        %v1745 = vmul.f32 %v1698, %v1737
        %v1746 = vmul.f32 %v1700, %v1738
        %v1747 = vmul.f32 %v1702, %v1739
        %v1748 = vmul.f32 %v1704, %v1740
        %v1749 = vmul.f32 %v1706, %v1741
        %v1750 = vmul.f32 %v1708, %v1742
        %v1751 = vmul.f32 %v1710, %v1743
        %v1752 = vmul.f32 %v1712, %v1744
        %1761 = vrot.lane.b32.xlu0 %v1062, 120
        %v1762 = vpop.permute.xlu0 %1761
        %1763 = vrot.lane.b32.xlu0 %v1067, 120
        %v1764 = vpop.permute.xlu0 %1763
        %1765 = vrot.lane.b32.xlu0 %v1072, 120
        %v1766 = vpop.permute.xlu0 %1765
        %1767 = vrot.lane.b32.xlu0 %v1077, 120
        %v1768 = vpop.permute.xlu0 %1767
        %1769 = vrot.lane.b32.xlu0 %v1082, 120
        %v1770 = vpop.permute.xlu0 %1769
        %1771 = vrot.lane.b32.xlu0 %v1087, 120
        %v1772 = vpop.permute.xlu0 %1771
        %1773 = vrot.lane.b32.xlu0 %v1092, 120
        %v1774 = vpop.permute.xlu0 %1773
        %1775 = vrot.lane.b32.xlu0 %v1097, 120
        %v1776 = vpop.permute.xlu0 %1775
        %v1786 = vsel %vm1262, %v1745, 0
        %v1789 = vsel %vm1262, %v1746, 0
        %v1792 = vsel %vm1262, %v1747, 0
        %v1795 = vsel %vm1262, %v1748, 0
        %v1798 = vsel %vm1262, %v1749, 0
        %v1801 = vsel %vm1262, %v1750, 0
        %v1804 = vsel %vm1262, %v1751, 0
        %v1807 = vsel %vm1262, %v1752, 0
        %1809 = vmatprep.subr.mxu0 0.0
        %1810 = vmatpush1.msra.mxu0 %v1762
        %1811 = vmatprep.subr.mxu0 0.0
        %1812 = vmatpush1.msra.mxu0 %v1764
        %1813 = vmatprep.subr.mxu0 0.0
        %1814 = vmatpush1.msra.mxu0 %v1766
        %1815 = vmatprep.subr.mxu0 0.0
        %1816 = vmatpush1.msra.mxu0 %v1768
        %1817 = vmatprep.subr.mxu0 0.0
        %1818 = vmatpush1.msra.mxu0 %v1770
        %1819 = vmatprep.subr.mxu0 0.0
        %1820 = vmatpush1.msra.mxu0 %v1772
        %1821 = vmatprep.subr.mxu0 0.0
        %1822 = vmatpush1.msra.mxu0 %v1774
        %1823 = vmatprep.subr.mxu0 0.0
        %1824 = vmatpush1.msra.mxu0 %v1776
        %1825 = vmatprep.subr.mxu0 0.0
        %1826 = vmatpush1.msra.mxu0 0.0
        %1827 = vmatprep.subr.mxu0 0.0
        %1828 = vmatpush1.msra.mxu0 0.0
        %1829 = vmatprep.subr.mxu0 0.0
        %1830 = vmatpush1.msra.mxu0 0.0
        %1831 = vmatprep.subr.mxu0 0.0
        %1832 = vmatpush1.msra.mxu0 0.0
        %1833 = vmatprep.subr.mxu0 0.0
        %1834 = vmatpush1.msra.mxu0 0.0
        %1835 = vmatprep.subr.mxu0 0.0
        %1836 = vmatpush1.msra.mxu0 0.0
        %1837 = vmatprep.subr.mxu0 0.0
        %1838 = vmatpush1.msra.mxu0 0.0
        %1839 = vmatprep.subr.mxu0 0.0
        %1840 = vmatpush1.msra.mxu0 0.0
        %1841 = vmatprep.subr.mxu0 0.0
        %1842 = vmatpush1.msra.mxu0 0.0
        %1843 = vmatprep.subr.mxu0 0.0
        %1844 = vmatpush1.msra.mxu0 0.0
        %1845 = vmatprep.subr.mxu0 0.0
        %1846 = vmatpush1.msra.mxu0 0.0
        %1847 = vmatprep.subr.mxu0 0.0
        %1848 = vmatpush1.msra.mxu0 0.0
        %1849 = vmatprep.subr.mxu0 0.0
        %1850 = vmatpush1.msra.mxu0 0.0
        %1851 = vmatprep.subr.mxu0 0.0
        %1852 = vmatpush1.msra.mxu0 0.0
        %1853 = vmatprep.subr.mxu0 0.0
        %1854 = vmatpush1.msra.mxu0 0.0
        %1855 = vmatprep.subr.mxu0 0.0
        %1856 = vmatpush1.msra.mxu0 0.0
        %1857 = vmatprep.subr.mxu0 0.0
        %1858 = vmatpush1.msra.mxu0 0.0
        %1859 = vmatprep.subr.mxu0 0.0
        %1860 = vmatpush1.msra.mxu0 0.0
        %1861 = vmatprep.subr.mxu0 0.0
        %1862 = vmatpush1.msra.mxu0 0.0
        %1863 = vmatprep.subr.mxu0 0.0
        %1864 = vmatpush1.msra.mxu0 0.0
        %1865 = vmatprep.subr.mxu0 0.0
        %1866 = vmatpush1.msra.mxu0 0.0
        %1867 = vmatprep.subr.mxu0 0.0
        %1868 = vmatpush1.msra.mxu0 0.0
        %1869 = vmatprep.subr.mxu0 0.0
        %1870 = vmatpush1.msra.mxu0 0.0
        %1871 = vmatprep.subr.mxu0 0.0
        %1872 = vmatpush1.msra.mxu0 0.0
        %1873 = vmatprep.mubr.f32.mxu0 0.0
        %1874 = vmatmul.mubr.f32.gmra.mrb[0].mxu0 %v1786
        %v1875 = vpop.f32.mrb[0].mxu0
        %v1876 = vadd.f32 0.0, %v1875
        %v1877 = vpop.f32.mrb[0].mxu0
        %1878 = vmatprep.mubr.f32.mxu0 0.0
        %1879 = vmatmul.mubr.f32.gmra.mrb[0].mxu0 %v1789
        %v1880 = vpop.f32.mrb[0].mxu0
        %v1881 = vadd.f32 0.0, %v1880
        %v1882 = vpop.f32.mrb[0].mxu0
        %1883 = vmatprep.mubr.f32.mxu0 0.0
        %1884 = vmatmul.mubr.f32.gmra.mrb[0].mxu0 %v1792
        %v1885 = vpop.f32.mrb[0].mxu0
        %v1886 = vadd.f32 0.0, %v1885
        %v1887 = vpop.f32.mrb[0].mxu0
        %1888 = vmatprep.mubr.f32.mxu0 0.0
        %1889 = vmatmul.mubr.f32.gmra.mrb[0].mxu0 %v1795
        %v1890 = vpop.f32.mrb[0].mxu0
        %v1891 = vadd.f32 0.0, %v1890
        %v1892 = vpop.f32.mrb[0].mxu0
        %1893 = vmatprep.mubr.f32.mxu0 0.0
        %1894 = vmatmul.mubr.f32.gmra.mrb[0].mxu0 %v1798
        %v1895 = vpop.f32.mrb[0].mxu0
        %v1896 = vadd.f32 0.0, %v1895
        %v1897 = vpop.f32.mrb[0].mxu0
        %1898 = vmatprep.mubr.f32.mxu0 0.0
        %1899 = vmatmul.mubr.f32.gmra.mrb[0].mxu0 %v1801
        %v1900 = vpop.f32.mrb[0].mxu0
        %v1901 = vadd.f32 0.0, %v1900
        %v1902 = vpop.f32.mrb[0].mxu0
        %1903 = vmatprep.mubr.f32.mxu0 0.0
        %1904 = vmatmul.mubr.f32.gmra.mrb[0].mxu0 %v1804
        %v1905 = vpop.f32.mrb[0].mxu0
        %v1906 = vadd.f32 0.0, %v1905
        %v1907 = vpop.f32.mrb[0].mxu0
        %1908 = vmatprep.mubr.f32.mxu0 0.0
        %1909 = vmatmul.mubr.f32.gmra.mrb[0].mxu0 %v1807
        %v1910 = vpop.f32.mrb[0].mxu0
        %v1911 = vadd.f32 0.0, %v1910
        %v1912 = vpop.f32.mrb[0].mxu0
        %1913 = vdwg.mxu0
        %1922 = vrot.lane.b32.xlu0 %v1876, 8
        %v1923 = vpop.permute.xlu0 %1922
        %1924 = vrot.lane.b32.xlu0 %v1881, 8
        %v1925 = vpop.permute.xlu0 %1924
        %1926 = vrot.lane.b32.xlu0 %v1886, 8
        %v1927 = vpop.permute.xlu0 %1926
        %1928 = vrot.lane.b32.xlu0 %v1891, 8
        %v1929 = vpop.permute.xlu0 %1928
        %1930 = vrot.lane.b32.xlu0 %v1896, 8
        %v1931 = vpop.permute.xlu0 %1930
        %1932 = vrot.lane.b32.xlu0 %v1901, 8
        %v1933 = vpop.permute.xlu0 %1932
        %1934 = vrot.lane.b32.xlu0 %v1906, 8
        %v1935 = vpop.permute.xlu0 %1934
        %1936 = vrot.lane.b32.xlu0 %v1911, 8
        %v1937 = vpop.permute.xlu0 %1936
        %vm1946 = vcmask 130112
        %1947 = vst.msk [vmem:[#allocation2] sm:$0xff] %vm1946, %v1923
        %1948 = vst.msk [vmem:[#allocation2 + $0x8] sm:$0xff] %vm1946, %v1925
        %1949 = vst.msk [vmem:[#allocation2 + $0x10] sm:$0xff] %vm1946, %v1927
        %1950 = vst.msk [vmem:[#allocation2 + $0x18] sm:$0xff] %vm1946, %v1929
        %1951 = vst.msk [vmem:[#allocation2 + $0x20] sm:$0xff] %vm1946, %v1931
        %1952 = vst.msk [vmem:[#allocation2 + $0x28] sm:$0xff] %vm1946, %v1933
        %1953 = vst.msk [vmem:[#allocation2 + $0x30] sm:$0xff] %vm1946, %v1935
        %1954 = vst.msk [vmem:[#allocation2 + $0x38] sm:$0xff] %vm1946, %v1937
        %1955 = vrot.lane.b32.xlu0 %v788, 112
        %v1956 = vpop.permute.xlu0 %1955
        %1957 = vrot.lane.b32.xlu0 %v793, 112
        %v1958 = vpop.permute.xlu0 %1957
        %1959 = vrot.lane.b32.xlu0 %v798, 112
        %v1960 = vpop.permute.xlu0 %1959
        %1961 = vrot.lane.b32.xlu0 %v803, 112
        %v1962 = vpop.permute.xlu0 %1961
        %1963 = vrot.lane.b32.xlu0 %v808, 112
        %v1964 = vpop.permute.xlu0 %1963
        %1965 = vrot.lane.b32.xlu0 %v813, 112
        %v1966 = vpop.permute.xlu0 %1965
        %1967 = vrot.lane.b32.xlu0 %v818, 112
        %v1968 = vpop.permute.xlu0 %1967
        %1969 = vrot.lane.b32.xlu0 %v823, 112
        %v1970 = vpop.permute.xlu0 %1969
        %1971 = vrot.lane.b32.xlu0 %v929, 112
        %v1972 = vpop.permute.xlu0 %1971
        %1973 = vrot.lane.b32.xlu0 %v934, 112
        %v1974 = vpop.permute.xlu0 %1973
        %1975 = vrot.lane.b32.xlu0 %v939, 112
        %v1976 = vpop.permute.xlu0 %1975
        %1977 = vrot.lane.b32.xlu0 %v944, 112
        %v1978 = vpop.permute.xlu0 %1977
        %1979 = vrot.lane.b32.xlu0 %v949, 112
        %v1980 = vpop.permute.xlu0 %1979
        %1981 = vrot.lane.b32.xlu0 %v954, 112
        %v1982 = vpop.permute.xlu0 %1981
        %1983 = vrot.lane.b32.xlu0 %v959, 112
        %v1984 = vpop.permute.xlu0 %1983
        %1985 = vrot.lane.b32.xlu0 %v964, 112
        %v1986 = vpop.permute.xlu0 %1985
        %v1987 = vsel %vm1100, %v1956, 0
        %v1989 = vsel %vm1100, %v1958, 0
        %v1991 = vsel %vm1100, %v1960, 0
        %v1993 = vsel %vm1100, %v1962, 0
        %v1995 = vsel %vm1100, %v1964, 0
        %v1997 = vsel %vm1100, %v1966, 0
        %v1999 = vsel %vm1100, %v1968, 0
        %v2001 = vsel %vm1100, %v1970, 0
        %v2003 = vsel %vm1100, %v1972, 0
        %v2005 = vsel %vm1100, %v1974, 0
        %v2007 = vsel %vm1100, %v1976, 0
        %v2009 = vsel %vm1100, %v1978, 0
        %v2011 = vsel %vm1100, %v1980, 0
        %v2013 = vsel %vm1100, %v1982, 0
        %v2015 = vsel %vm1100, %v1984, 0
        %v2017 = vsel %vm1100, %v1986, 0
        %2019 = vmatprep.subr.mxu0 0.0
        %2020 = vmatpush1.xpose.msra.mxu0 %v2003
        %2021 = vmatprep.subr.mxu0 0.0
        %2022 = vmatpush1.xpose.msra.mxu0 %v2005
        %2023 = vmatprep.subr.mxu0 0.0
        %2024 = vmatpush1.xpose.msra.mxu0 %v2007
        %2025 = vmatprep.subr.mxu0 0.0
        %2026 = vmatpush1.xpose.msra.mxu0 %v2009
        %2027 = vmatprep.subr.mxu0 0.0
        %2028 = vmatpush1.xpose.msra.mxu0 %v2011
        %2029 = vmatprep.subr.mxu0 0.0
        %2030 = vmatpush1.xpose.msra.mxu0 %v2013
        %2031 = vmatprep.subr.mxu0 0.0
        %2032 = vmatpush1.xpose.msra.mxu0 %v2015
        %2033 = vmatprep.subr.mxu0 0.0
        %2034 = vmatpush1.xpose.msra.mxu0 %v2017
        %2035 = vmatprep.subr.mxu0 0.0
        %2036 = vmatpush1.xpose.msra.mxu0 0.0
        %2037 = vmatprep.subr.mxu0 0.0
        %2038 = vmatpush1.xpose.msra.mxu0 0.0
        %2039 = vmatprep.subr.mxu0 0.0
        %2040 = vmatpush1.xpose.msra.mxu0 0.0
        %2041 = vmatprep.subr.mxu0 0.0
        %2042 = vmatpush1.xpose.msra.mxu0 0.0
        %2043 = vmatprep.subr.mxu0 0.0
        %2044 = vmatpush1.xpose.msra.mxu0 0.0
        %2045 = vmatprep.subr.mxu0 0.0
        %2046 = vmatpush1.xpose.msra.mxu0 0.0
        %2047 = vmatprep.subr.mxu0 0.0
        %2048 = vmatpush1.xpose.msra.mxu0 0.0
        %2049 = vmatprep.subr.mxu0 0.0
        %2050 = vmatpush1.xpose.msra.mxu0 0.0
        %2051 = vmatprep.subr.mxu0 0.0
        %2052 = vmatpush1.xpose.msra.mxu0 0.0
        %2053 = vmatprep.subr.mxu0 0.0
        %2054 = vmatpush1.xpose.msra.mxu0 0.0
        %2055 = vmatprep.subr.mxu0 0.0
        %2056 = vmatpush1.xpose.msra.mxu0 0.0
        %2057 = vmatprep.subr.mxu0 0.0
        %2058 = vmatpush1.xpose.msra.mxu0 0.0
        %2059 = vmatprep.subr.mxu0 0.0
        %2060 = vmatpush1.xpose.msra.mxu0 0.0
        %2061 = vmatprep.subr.mxu0 0.0
        %2062 = vmatpush1.xpose.msra.mxu0 0.0
        %2063 = vmatprep.subr.mxu0 0.0
        %2064 = vmatpush1.xpose.msra.mxu0 0.0
        %2065 = vmatprep.subr.mxu0 0.0
        %2066 = vmatpush1.xpose.msra.mxu0 0.0
        %2067 = vmatprep.subr.mxu0 0.0
        %2068 = vmatpush1.xpose.msra.mxu0 0.0
        %2069 = vmatprep.subr.mxu0 0.0
        %2070 = vmatpush1.xpose.msra.mxu0 0.0
        %2071 = vmatprep.subr.mxu0 0.0
        %2072 = vmatpush1.xpose.msra.mxu0 0.0
        %2073 = vmatprep.subr.mxu0 0.0
        %2074 = vmatpush1.xpose.msra.mxu0 0.0
        %2075 = vmatprep.subr.mxu0 0.0
        %2076 = vmatpush1.xpose.msra.mxu0 0.0
        %2077 = vmatprep.subr.mxu0 0.0
        %2078 = vmatpush1.xpose.msra.mxu0 0.0
        %2079 = vmatprep.subr.mxu0 0.0
        %2080 = vmatpush1.xpose.msra.mxu0 0.0
        %2081 = vmatprep.subr.mxu0 0.0
        %2082 = vmatpush1.xpose.msra.mxu0 0.0
        %2083 = vmatprep.mubr.f32.mxu0 0.0
        %2084 = vmatmul.mubr.f32.gmra.mrb[0].mxu0 %v1987
        %v2085 = vpop.f32.mrb[0].mxu0
        %v2086 = vadd.f32 0.0, %v2085
        %v2087 = vpop.f32.mrb[0].mxu0
        %2088 = vmatprep.mubr.f32.mxu0 0.0
        %2089 = vmatmul.mubr.f32.gmra.mrb[0].mxu0 %v1989
        %v2090 = vpop.f32.mrb[0].mxu0
        %v2091 = vadd.f32 0.0, %v2090
        %v2092 = vpop.f32.mrb[0].mxu0
        %2093 = vmatprep.mubr.f32.mxu0 0.0
        %2094 = vmatmul.mubr.f32.gmra.mrb[0].mxu0 %v1991
        %v2095 = vpop.f32.mrb[0].mxu0
        %v2096 = vadd.f32 0.0, %v2095
        %v2097 = vpop.f32.mrb[0].mxu0
        %2098 = vmatprep.mubr.f32.mxu0 0.0
        %2099 = vmatmul.mubr.f32.gmra.mrb[0].mxu0 %v1993
        %v2100 = vpop.f32.mrb[0].mxu0
        %v2101 = vadd.f32 0.0, %v2100
        %v2102 = vpop.f32.mrb[0].mxu0
        %2103 = vmatprep.mubr.f32.mxu0 0.0
        %2104 = vmatmul.mubr.f32.gmra.mrb[0].mxu0 %v1995
        %v2105 = vpop.f32.mrb[0].mxu0
        %v2106 = vadd.f32 0.0, %v2105
        %v2107 = vpop.f32.mrb[0].mxu0
        %2108 = vmatprep.mubr.f32.mxu0 0.0
        %2109 = vmatmul.mubr.f32.gmra.mrb[0].mxu0 %v1997
        %v2110 = vpop.f32.mrb[0].mxu0
        %v2111 = vadd.f32 0.0, %v2110
        %v2112 = vpop.f32.mrb[0].mxu0
        %2113 = vmatprep.mubr.f32.mxu0 0.0
        %2114 = vmatmul.mubr.f32.gmra.mrb[0].mxu0 %v1999
        %v2115 = vpop.f32.mrb[0].mxu0
        %v2116 = vadd.f32 0.0, %v2115
        %v2117 = vpop.f32.mrb[0].mxu0
        %2118 = vmatprep.mubr.f32.mxu0 0.0
        %2119 = vmatmul.mubr.f32.gmra.mrb[0].mxu0 %v2001
        %v2120 = vpop.f32.mrb[0].mxu0
        %v2121 = vadd.f32 0.0, %v2120
        %v2122 = vpop.f32.mrb[0].mxu0
        %2123 = vdwg.mxu0
        %v2124 = vmul.f32 %v2086, 0.35355338
        %v2125 = vmul.f32 %v2091, 0.35355338
        %v2126 = vmul.f32 %v2096, 0.35355338
        %v2127 = vmul.f32 %v2101, 0.35355338
        %v2128 = vmul.f32 %v2106, 0.35355338
        %v2129 = vmul.f32 %v2111, 0.35355338
        %v2130 = vmul.f32 %v2116, 0.35355338
        %v2131 = vmul.f32 %v2121, 0.35355338
        %v2132 = vsel %vm1262, %v2124, -inf
        %2133 = vmax.xlane.f32.xlu0 %v2132
        %v2134 = vpop.xlane.xlu0 %2133
        %v2135 = vsel %vm1262, %v2125, -inf
        %2136 = vmax.xlane.f32.xlu0 %v2135
        %v2137 = vpop.xlane.xlu0 %2136
        %v2138 = vsel %vm1262, %v2126, -inf
        %2139 = vmax.xlane.f32.xlu0 %v2138
        %v2140 = vpop.xlane.xlu0 %2139
        %v2141 = vsel %vm1262, %v2127, -inf
        %2142 = vmax.xlane.f32.xlu0 %v2141
        %v2143 = vpop.xlane.xlu0 %2142
        %v2144 = vsel %vm1262, %v2128, -inf
        %2145 = vmax.xlane.f32.xlu0 %v2144
        %v2146 = vpop.xlane.xlu0 %2145
        %v2147 = vsel %vm1262, %v2129, -inf
        %2148 = vmax.xlane.f32.xlu0 %v2147
        %v2149 = vpop.xlane.xlu0 %2148
        %v2150 = vsel %vm1262, %v2130, -inf
        %2151 = vmax.xlane.f32.xlu0 %v2150
        %v2152 = vpop.xlane.xlu0 %2151
        %v2153 = vsel %vm1262, %v2131, -inf
        %2154 = vmax.xlane.f32.xlu0 %v2153
        %v2155 = vpop.xlane.xlu0 %2154
        %v2156 = vsub.f32 %v2124, %v2134
        %v2157 = vsub.f32 %v2125, %v2137
        %v2158 = vsub.f32 %v2126, %v2140
        %v2159 = vsub.f32 %v2127, %v2143
        %v2160 = vsub.f32 %v2128, %v2146
        %v2161 = vsub.f32 %v2129, %v2149
        %v2162 = vsub.f32 %v2130, %v2152
        %v2163 = vsub.f32 %v2131, %v2155
        %v2164 = vmul.f32 %v2156, 1.442695
        %v2165 = vpow.pop %v2164
        %v2166 = vmul.f32 %v2157, 1.442695
        %v2167 = vpow.pop %v2166
        %v2168 = vmul.f32 %v2158, 1.442695
        %v2169 = vpow.pop %v2168
        %v2170 = vmul.f32 %v2159, 1.442695
        %v2171 = vpow.pop %v2170
        %v2172 = vmul.f32 %v2160, 1.442695
        %v2173 = vpow.pop %v2172
        %v2174 = vmul.f32 %v2161, 1.442695
        %v2175 = vpow.pop %v2174
        %v2176 = vmul.f32 %v2162, 1.442695
        %v2177 = vpow.pop %v2176
        %v2178 = vmul.f32 %v2163, 1.442695
        %v2179 = vpow.pop %v2178
        %v2180 = vsel %vm1262, %v2165, 0.0
        %2181 = vadd.xlane.f32.xlu0 %v2180
        %v2182 = vpop.xlane.xlu0 %2181
        %v2183 = vsel %vm1262, %v2167, 0.0
        %2184 = vadd.xlane.f32.xlu0 %v2183
        %v2185 = vpop.xlane.xlu0 %2184
        %v2186 = vsel %vm1262, %v2169, 0.0
        %2187 = vadd.xlane.f32.xlu0 %v2186
        %v2188 = vpop.xlane.xlu0 %2187
        %v2189 = vsel %vm1262, %v2171, 0.0
        %2190 = vadd.xlane.f32.xlu0 %v2189
        %v2191 = vpop.xlane.xlu0 %2190
        %v2192 = vsel %vm1262, %v2173, 0.0
        %2193 = vadd.xlane.f32.xlu0 %v2192
        %v2194 = vpop.xlane.xlu0 %2193
        %v2195 = vsel %vm1262, %v2175, 0.0
        %2196 = vadd.xlane.f32.xlu0 %v2195
        %v2197 = vpop.xlane.xlu0 %2196
        %v2198 = vsel %vm1262, %v2177, 0.0
        %2199 = vadd.xlane.f32.xlu0 %v2198
        %v2200 = vpop.xlane.xlu0 %2199
        %v2201 = vsel %vm1262, %v2179, 0.0
        %2202 = vadd.xlane.f32.xlu0 %v2201
        %v2203 = vpop.xlane.xlu0 %2202
        %v2204 = vrcp.pop %v2182
        %v2205 = vrcp.pop %v2185
        %v2206 = vrcp.pop %v2188
        %v2207 = vrcp.pop %v2191
        %v2208 = vrcp.pop %v2194
        %v2209 = vrcp.pop %v2197
        %v2210 = vrcp.pop %v2200
        %v2211 = vrcp.pop %v2203
        %v2212 = vmul.f32 %v2165, %v2204
        %v2213 = vmul.f32 %v2167, %v2205
        %v2214 = vmul.f32 %v2169, %v2206
        %v2215 = vmul.f32 %v2171, %v2207
        %v2216 = vmul.f32 %v2173, %v2208
        %v2217 = vmul.f32 %v2175, %v2209
        %v2218 = vmul.f32 %v2177, %v2210
        %v2219 = vmul.f32 %v2179, %v2211
        %2220 = vrot.lane.b32.xlu0 %v1062, 112
        %v2221 = vpop.permute.xlu0 %2220
        %2222 = vrot.lane.b32.xlu0 %v1067, 112
        %v2223 = vpop.permute.xlu0 %2222
        %2224 = vrot.lane.b32.xlu0 %v1072, 112
        %v2225 = vpop.permute.xlu0 %2224
        %2226 = vrot.lane.b32.xlu0 %v1077, 112
        %v2227 = vpop.permute.xlu0 %2226
        %2228 = vrot.lane.b32.xlu0 %v1082, 112
        %v2229 = vpop.permute.xlu0 %2228
        %2230 = vrot.lane.b32.xlu0 %v1087, 112
        %v2231 = vpop.permute.xlu0 %2230
        %2232 = vrot.lane.b32.xlu0 %v1092, 112
        %v2233 = vpop.permute.xlu0 %2232
        %2234 = vrot.lane.b32.xlu0 %v1097, 112
        %v2235 = vpop.permute.xlu0 %2234
        %v2245 = vsel %vm1262, %v2212, 0
        %v2248 = vsel %vm1262, %v2213, 0
        %v2251 = vsel %vm1262, %v2214, 0
        %v2254 = vsel %vm1262, %v2215, 0
        %v2257 = vsel %vm1262, %v2216, 0
        %v2260 = vsel %vm1262, %v2217, 0
        %v2263 = vsel %vm1262, %v2218, 0
        %v2266 = vsel %vm1262, %v2219, 0
        %2268 = vmatprep.subr.mxu0 0.0
        %2269 = vmatpush1.msra.mxu0 %v2221
        %2270 = vmatprep.subr.mxu0 0.0
        %2271 = vmatpush1.msra.mxu0 %v2223
        %2272 = vmatprep.subr.mxu0 0.0
        %2273 = vmatpush1.msra.mxu0 %v2225
        %2274 = vmatprep.subr.mxu0 0.0
        %2275 = vmatpush1.msra.mxu0 %v2227
        %2276 = vmatprep.subr.mxu0 0.0
        %2277 = vmatpush1.msra.mxu0 %v2229
        %2278 = vmatprep.subr.mxu0 0.0
        %2279 = vmatpush1.msra.mxu0 %v2231
        %2280 = vmatprep.subr.mxu0 0.0
        %2281 = vmatpush1.msra.mxu0 %v2233
        %2282 = vmatprep.subr.mxu0 0.0
        %2283 = vmatpush1.msra.mxu0 %v2235
        %2284 = vmatprep.subr.mxu0 0.0
        %2285 = vmatpush1.msra.mxu0 0.0
        %2286 = vmatprep.subr.mxu0 0.0
        %2287 = vmatpush1.msra.mxu0 0.0
        %2288 = vmatprep.subr.mxu0 0.0
        %2289 = vmatpush1.msra.mxu0 0.0
        %2290 = vmatprep.subr.mxu0 0.0
        %2291 = vmatpush1.msra.mxu0 0.0
        %2292 = vmatprep.subr.mxu0 0.0
        %2293 = vmatpush1.msra.mxu0 0.0
        %2294 = vmatprep.subr.mxu0 0.0
        %2295 = vmatpush1.msra.mxu0 0.0
        %2296 = vmatprep.subr.mxu0 0.0
        %2297 = vmatpush1.msra.mxu0 0.0
        %2298 = vmatprep.subr.mxu0 0.0
        %2299 = vmatpush1.msra.mxu0 0.0
        %2300 = vmatprep.subr.mxu0 0.0
        %2301 = vmatpush1.msra.mxu0 0.0
        %2302 = vmatprep.subr.mxu0 0.0
        %2303 = vmatpush1.msra.mxu0 0.0
        %2304 = vmatprep.subr.mxu0 0.0
        %2305 = vmatpush1.msra.mxu0 0.0
        %2306 = vmatprep.subr.mxu0 0.0
        %2307 = vmatpush1.msra.mxu0 0.0
        %2308 = vmatprep.subr.mxu0 0.0
        %2309 = vmatpush1.msra.mxu0 0.0
        %2310 = vmatprep.subr.mxu0 0.0
        %2311 = vmatpush1.msra.mxu0 0.0
        %2312 = vmatprep.subr.mxu0 0.0
        %2313 = vmatpush1.msra.mxu0 0.0
        %2314 = vmatprep.subr.mxu0 0.0
        %2315 = vmatpush1.msra.mxu0 0.0
        %2316 = vmatprep.subr.mxu0 0.0
        %2317 = vmatpush1.msra.mxu0 0.0
        %2318 = vmatprep.subr.mxu0 0.0
        %2319 = vmatpush1.msra.mxu0 0.0
        %2320 = vmatprep.subr.mxu0 0.0
        %2321 = vmatpush1.msra.mxu0 0.0
        %2322 = vmatprep.subr.mxu0 0.0
        %2323 = vmatpush1.msra.mxu0 0.0
        %2324 = vmatprep.subr.mxu0 0.0
        %2325 = vmatpush1.msra.mxu0 0.0
        %2326 = vmatprep.subr.mxu0 0.0
        %2327 = vmatpush1.msra.mxu0 0.0
        %2328 = vmatprep.subr.mxu0 0.0
        %2329 = vmatpush1.msra.mxu0 0.0
        %2330 = vmatprep.subr.mxu0 0.0
        %2331 = vmatpush1.msra.mxu0 0.0
        %2332 = vmatprep.mubr.f32.mxu0 0.0
        %2333 = vmatmul.mubr.f32.gmra.mrb[0].mxu0 %v2245
        %v2334 = vpop.f32.mrb[0].mxu0
        %v2335 = vadd.f32 0.0, %v2334
        %v2336 = vpop.f32.mrb[0].mxu0
        %2337 = vmatprep.mubr.f32.mxu0 0.0
        %2338 = vmatmul.mubr.f32.gmra.mrb[0].mxu0 %v2248
        %v2339 = vpop.f32.mrb[0].mxu0
        %v2340 = vadd.f32 0.0, %v2339
        %v2341 = vpop.f32.mrb[0].mxu0
        %2342 = vmatprep.mubr.f32.mxu0 0.0
        %2343 = vmatmul.mubr.f32.gmra.mrb[0].mxu0 %v2251
        %v2344 = vpop.f32.mrb[0].mxu0
        %v2345 = vadd.f32 0.0, %v2344
        %v2346 = vpop.f32.mrb[0].mxu0
        %2347 = vmatprep.mubr.f32.mxu0 0.0
        %2348 = vmatmul.mubr.f32.gmra.mrb[0].mxu0 %v2254
        %v2349 = vpop.f32.mrb[0].mxu0
        %v2350 = vadd.f32 0.0, %v2349
        %v2351 = vpop.f32.mrb[0].mxu0
        %2352 = vmatprep.mubr.f32.mxu0 0.0
        %2353 = vmatmul.mubr.f32.gmra.mrb[0].mxu0 %v2257
        %v2354 = vpop.f32.mrb[0].mxu0
        %v2355 = vadd.f32 0.0, %v2354
        %v2356 = vpop.f32.mrb[0].mxu0
        %2357 = vmatprep.mubr.f32.mxu0 0.0
        %2358 = vmatmul.mubr.f32.gmra.mrb[0].mxu0 %v2260
        %v2359 = vpop.f32.mrb[0].mxu0
        %v2360 = vadd.f32 0.0, %v2359
        %v2361 = vpop.f32.mrb[0].mxu0
        %2362 = vmatprep.mubr.f32.mxu0 0.0
        %2363 = vmatmul.mubr.f32.gmra.mrb[0].mxu0 %v2263
        %v2364 = vpop.f32.mrb[0].mxu0
        %v2365 = vadd.f32 0.0, %v2364
        %v2366 = vpop.f32.mrb[0].mxu0
        %2367 = vmatprep.mubr.f32.mxu0 0.0
        %2368 = vmatmul.mubr.f32.gmra.mrb[0].mxu0 %v2266
        %v2369 = vpop.f32.mrb[0].mxu0
        %v2370 = vadd.f32 0.0, %v2369
        %v2371 = vpop.f32.mrb[0].mxu0
        %2372 = vdwg.mxu0
        %2381 = vrot.lane.b32.xlu0 %v2335, 16
        %v2382 = vpop.permute.xlu0 %2381
        %2383 = vrot.lane.b32.xlu0 %v2340, 16
        %v2384 = vpop.permute.xlu0 %2383
        %2385 = vrot.lane.b32.xlu0 %v2345, 16
        %v2386 = vpop.permute.xlu0 %2385
        %2387 = vrot.lane.b32.xlu0 %v2350, 16
        %v2388 = vpop.permute.xlu0 %2387
        %2389 = vrot.lane.b32.xlu0 %v2355, 16
        %v2390 = vpop.permute.xlu0 %2389
        %2391 = vrot.lane.b32.xlu0 %v2360, 16
        %v2392 = vpop.permute.xlu0 %2391
        %2393 = vrot.lane.b32.xlu0 %v2365, 16
        %v2394 = vpop.permute.xlu0 %2393
        %2395 = vrot.lane.b32.xlu0 %v2370, 16
        %v2396 = vpop.permute.xlu0 %2395
        %vm2405 = vcmask 195712
        %2406 = vst.msk [vmem:[#allocation2] sm:$0xff] %vm2405, %v2382
        %2407 = vst.msk [vmem:[#allocation2 + $0x8] sm:$0xff] %vm2405, %v2384
        %2408 = vst.msk [vmem:[#allocation2 + $0x10] sm:$0xff] %vm2405, %v2386
        %2409 = vst.msk [vmem:[#allocation2 + $0x18] sm:$0xff] %vm2405, %v2388
        %2410 = vst.msk [vmem:[#allocation2 + $0x20] sm:$0xff] %vm2405, %v2390
        %2411 = vst.msk [vmem:[#allocation2 + $0x28] sm:$0xff] %vm2405, %v2392
        %2412 = vst.msk [vmem:[#allocation2 + $0x30] sm:$0xff] %vm2405, %v2394
        %2413 = vst.msk [vmem:[#allocation2 + $0x38] sm:$0xff] %vm2405, %v2396
        %2414 = vrot.lane.b32.xlu0 %v788, 104
        %v2415 = vpop.permute.xlu0 %2414
        %2416 = vrot.lane.b32.xlu0 %v793, 104
        %v2417 = vpop.permute.xlu0 %2416
        %2418 = vrot.lane.b32.xlu0 %v798, 104
        %v2419 = vpop.permute.xlu0 %2418
        %2420 = vrot.lane.b32.xlu0 %v803, 104
        %v2421 = vpop.permute.xlu0 %2420
        %2422 = vrot.lane.b32.xlu0 %v808, 104
        %v2423 = vpop.permute.xlu0 %2422
        %2424 = vrot.lane.b32.xlu0 %v813, 104
        %v2425 = vpop.permute.xlu0 %2424
        %2426 = vrot.lane.b32.xlu0 %v818, 104
        %v2427 = vpop.permute.xlu0 %2426
        %2428 = vrot.lane.b32.xlu0 %v823, 104
        %v2429 = vpop.permute.xlu0 %2428
        %2430 = vrot.lane.b32.xlu0 %v929, 104
        %v2431 = vpop.permute.xlu0 %2430
        %2432 = vrot.lane.b32.xlu0 %v934, 104
        %v2433 = vpop.permute.xlu0 %2432
        %2434 = vrot.lane.b32.xlu0 %v939, 104
        %v2435 = vpop.permute.xlu0 %2434
        %2436 = vrot.lane.b32.xlu0 %v944, 104
        %v2437 = vpop.permute.xlu0 %2436
        %2438 = vrot.lane.b32.xlu0 %v949, 104
        %v2439 = vpop.permute.xlu0 %2438
        %2440 = vrot.lane.b32.xlu0 %v954, 104
        %v2441 = vpop.permute.xlu0 %2440
        %2442 = vrot.lane.b32.xlu0 %v959, 104
        %v2443 = vpop.permute.xlu0 %2442
        %2444 = vrot.lane.b32.xlu0 %v964, 104
        %v2445 = vpop.permute.xlu0 %2444
        %v2446 = vsel %vm1100, %v2415, 0
        %v2448 = vsel %vm1100, %v2417, 0
        %v2450 = vsel %vm1100, %v2419, 0
        %v2452 = vsel %vm1100, %v2421, 0
        %v2454 = vsel %vm1100, %v2423, 0
        %v2456 = vsel %vm1100, %v2425, 0
        %v2458 = vsel %vm1100, %v2427, 0
        %v2460 = vsel %vm1100, %v2429, 0
        %v2462 = vsel %vm1100, %v2431, 0
        %v2464 = vsel %vm1100, %v2433, 0
        %v2466 = vsel %vm1100, %v2435, 0
        %v2468 = vsel %vm1100, %v2437, 0
        %v2470 = vsel %vm1100, %v2439, 0
        %v2472 = vsel %vm1100, %v2441, 0
        %v2474 = vsel %vm1100, %v2443, 0
        %v2476 = vsel %vm1100, %v2445, 0
        %2478 = vmatprep.subr.mxu0 0.0
        %2479 = vmatpush1.xpose.msra.mxu0 %v2462
        %2480 = vmatprep.subr.mxu0 0.0
        %2481 = vmatpush1.xpose.msra.mxu0 %v2464
        %2482 = vmatprep.subr.mxu0 0.0
        %2483 = vmatpush1.xpose.msra.mxu0 %v2466
        %2484 = vmatprep.subr.mxu0 0.0
        %2485 = vmatpush1.xpose.msra.mxu0 %v2468
        %2486 = vmatprep.subr.mxu0 0.0
        %2487 = vmatpush1.xpose.msra.mxu0 %v2470
        %2488 = vmatprep.subr.mxu0 0.0
        %2489 = vmatpush1.xpose.msra.mxu0 %v2472
        %2490 = vmatprep.subr.mxu0 0.0
        %2491 = vmatpush1.xpose.msra.mxu0 %v2474
        %2492 = vmatprep.subr.mxu0 0.0
        %2493 = vmatpush1.xpose.msra.mxu0 %v2476
        %2494 = vmatprep.subr.mxu0 0.0
        %2495 = vmatpush1.xpose.msra.mxu0 0.0
        %2496 = vmatprep.subr.mxu0 0.0
        %2497 = vmatpush1.xpose.msra.mxu0 0.0
        %2498 = vmatprep.subr.mxu0 0.0
        %2499 = vmatpush1.xpose.msra.mxu0 0.0
        %2500 = vmatprep.subr.mxu0 0.0
        %2501 = vmatpush1.xpose.msra.mxu0 0.0
        %2502 = vmatprep.subr.mxu0 0.0
        %2503 = vmatpush1.xpose.msra.mxu0 0.0
        %2504 = vmatprep.subr.mxu0 0.0
        %2505 = vmatpush1.xpose.msra.mxu0 0.0
        %2506 = vmatprep.subr.mxu0 0.0
        %2507 = vmatpush1.xpose.msra.mxu0 0.0
        %2508 = vmatprep.subr.mxu0 0.0
        %2509 = vmatpush1.xpose.msra.mxu0 0.0
        %2510 = vmatprep.subr.mxu0 0.0
        %2511 = vmatpush1.xpose.msra.mxu0 0.0
        %2512 = vmatprep.subr.mxu0 0.0
        %2513 = vmatpush1.xpose.msra.mxu0 0.0
        %2514 = vmatprep.subr.mxu0 0.0
        %2515 = vmatpush1.xpose.msra.mxu0 0.0
        %2516 = vmatprep.subr.mxu0 0.0
        %2517 = vmatpush1.xpose.msra.mxu0 0.0
        %2518 = vmatprep.subr.mxu0 0.0
        %2519 = vmatpush1.xpose.msra.mxu0 0.0
        %2520 = vmatprep.subr.mxu0 0.0
        %2521 = vmatpush1.xpose.msra.mxu0 0.0
        %2522 = vmatprep.subr.mxu0 0.0
        %2523 = vmatpush1.xpose.msra.mxu0 0.0
        %2524 = vmatprep.subr.mxu0 0.0
        %2525 = vmatpush1.xpose.msra.mxu0 0.0
        %2526 = vmatprep.subr.mxu0 0.0
        %2527 = vmatpush1.xpose.msra.mxu0 0.0
        %2528 = vmatprep.subr.mxu0 0.0
        %2529 = vmatpush1.xpose.msra.mxu0 0.0
        %2530 = vmatprep.subr.mxu0 0.0
        %2531 = vmatpush1.xpose.msra.mxu0 0.0
        %2532 = vmatprep.subr.mxu0 0.0
        %2533 = vmatpush1.xpose.msra.mxu0 0.0
        %2534 = vmatprep.subr.mxu0 0.0
        %2535 = vmatpush1.xpose.msra.mxu0 0.0
        %2536 = vmatprep.subr.mxu0 0.0
        %2537 = vmatpush1.xpose.msra.mxu0 0.0
        %2538 = vmatprep.subr.mxu0 0.0
        %2539 = vmatpush1.xpose.msra.mxu0 0.0
        %2540 = vmatprep.subr.mxu0 0.0
        %2541 = vmatpush1.xpose.msra.mxu0 0.0
        %2542 = vmatprep.mubr.f32.mxu0 0.0
        %2543 = vmatmul.mubr.f32.gmra.mrb[0].mxu0 %v2446
        %v2544 = vpop.f32.mrb[0].mxu0
        %v2545 = vadd.f32 0.0, %v2544
        %v2546 = vpop.f32.mrb[0].mxu0
        %2547 = vmatprep.mubr.f32.mxu0 0.0
        %2548 = vmatmul.mubr.f32.gmra.mrb[0].mxu0 %v2448
        %v2549 = vpop.f32.mrb[0].mxu0
        %v2550 = vadd.f32 0.0, %v2549
        %v2551 = vpop.f32.mrb[0].mxu0
        %2552 = vmatprep.mubr.f32.mxu0 0.0
        %2553 = vmatmul.mubr.f32.gmra.mrb[0].mxu0 %v2450
        %v2554 = vpop.f32.mrb[0].mxu0
        %v2555 = vadd.f32 0.0, %v2554
        %v2556 = vpop.f32.mrb[0].mxu0
        %2557 = vmatprep.mubr.f32.mxu0 0.0
        %2558 = vmatmul.mubr.f32.gmra.mrb[0].mxu0 %v2452
        %v2559 = vpop.f32.mrb[0].mxu0
        %v2560 = vadd.f32 0.0, %v2559
        %v2561 = vpop.f32.mrb[0].mxu0
        %2562 = vmatprep.mubr.f32.mxu0 0.0
        %2563 = vmatmul.mubr.f32.gmra.mrb[0].mxu0 %v2454
        %v2564 = vpop.f32.mrb[0].mxu0
        %v2565 = vadd.f32 0.0, %v2564
        %v2566 = vpop.f32.mrb[0].mxu0
        %2567 = vmatprep.mubr.f32.mxu0 0.0
        %2568 = vmatmul.mubr.f32.gmra.mrb[0].mxu0 %v2456
        %v2569 = vpop.f32.mrb[0].mxu0
        %v2570 = vadd.f32 0.0, %v2569
        %v2571 = vpop.f32.mrb[0].mxu0
        %2572 = vmatprep.mubr.f32.mxu0 0.0
        %2573 = vmatmul.mubr.f32.gmra.mrb[0].mxu0 %v2458
        %v2574 = vpop.f32.mrb[0].mxu0
        %v2575 = vadd.f32 0.0, %v2574
        %v2576 = vpop.f32.mrb[0].mxu0
        %2577 = vmatprep.mubr.f32.mxu0 0.0
        %2578 = vmatmul.mubr.f32.gmra.mrb[0].mxu0 %v2460
        %v2579 = vpop.f32.mrb[0].mxu0
        %v2580 = vadd.f32 0.0, %v2579
        %v2581 = vpop.f32.mrb[0].mxu0
        %2582 = vdwg.mxu0
        %v2583 = vmul.f32 %v2545, 0.35355338
        %v2584 = vmul.f32 %v2550, 0.35355338
        %v2585 = vmul.f32 %v2555, 0.35355338
        %v2586 = vmul.f32 %v2560, 0.35355338
        %v2587 = vmul.f32 %v2565, 0.35355338
        %v2588 = vmul.f32 %v2570, 0.35355338
        %v2589 = vmul.f32 %v2575, 0.35355338
        %v2590 = vmul.f32 %v2580, 0.35355338
        %v2591 = vsel %vm1262, %v2583, -inf
        %2592 = vmax.xlane.f32.xlu0 %v2591
        %v2593 = vpop.xlane.xlu0 %2592
        %v2594 = vsel %vm1262, %v2584, -inf
        %2595 = vmax.xlane.f32.xlu0 %v2594
        %v2596 = vpop.xlane.xlu0 %2595
        %v2597 = vsel %vm1262, %v2585, -inf
        %2598 = vmax.xlane.f32.xlu0 %v2597
        %v2599 = vpop.xlane.xlu0 %2598
        %v2600 = vsel %vm1262, %v2586, -inf
        %2601 = vmax.xlane.f32.xlu0 %v2600
        %v2602 = vpop.xlane.xlu0 %2601
        %v2603 = vsel %vm1262, %v2587, -inf
        %2604 = vmax.xlane.f32.xlu0 %v2603
        %v2605 = vpop.xlane.xlu0 %2604
        %v2606 = vsel %vm1262, %v2588, -inf
        %2607 = vmax.xlane.f32.xlu0 %v2606
        %v2608 = vpop.xlane.xlu0 %2607
        %v2609 = vsel %vm1262, %v2589, -inf
        %2610 = vmax.xlane.f32.xlu0 %v2609
        %v2611 = vpop.xlane.xlu0 %2610
        %v2612 = vsel %vm1262, %v2590, -inf
        %2613 = vmax.xlane.f32.xlu0 %v2612
        %v2614 = vpop.xlane.xlu0 %2613
        %v2615 = vsub.f32 %v2583, %v2593
        %v2616 = vsub.f32 %v2584, %v2596
        %v2617 = vsub.f32 %v2585, %v2599
        %v2618 = vsub.f32 %v2586, %v2602
        %v2619 = vsub.f32 %v2587, %v2605
        %v2620 = vsub.f32 %v2588, %v2608
        %v2621 = vsub.f32 %v2589, %v2611
        %v2622 = vsub.f32 %v2590, %v2614
        %v2623 = vmul.f32 %v2615, 1.442695
        %v2624 = vpow.pop %v2623
        %v2625 = vmul.f32 %v2616, 1.442695
        %v2626 = vpow.pop %v2625
        %v2627 = vmul.f32 %v2617, 1.442695
        %v2628 = vpow.pop %v2627
        %v2629 = vmul.f32 %v2618, 1.442695
        %v2630 = vpow.pop %v2629
        %v2631 = vmul.f32 %v2619, 1.442695
        %v2632 = vpow.pop %v2631
        %v2633 = vmul.f32 %v2620, 1.442695
        %v2634 = vpow.pop %v2633
        %v2635 = vmul.f32 %v2621, 1.442695
        %v2636 = vpow.pop %v2635
        %v2637 = vmul.f32 %v2622, 1.442695
        %v2638 = vpow.pop %v2637
        %v2639 = vsel %vm1262, %v2624, 0.0
        %2640 = vadd.xlane.f32.xlu0 %v2639
        %v2641 = vpop.xlane.xlu0 %2640
        %v2642 = vsel %vm1262, %v2626, 0.0
        %2643 = vadd.xlane.f32.xlu0 %v2642
        %v2644 = vpop.xlane.xlu0 %2643
        %v2645 = vsel %vm1262, %v2628, 0.0
        %2646 = vadd.xlane.f32.xlu0 %v2645
        %v2647 = vpop.xlane.xlu0 %2646
        %v2648 = vsel %vm1262, %v2630, 0.0
        %2649 = vadd.xlane.f32.xlu0 %v2648
        %v2650 = vpop.xlane.xlu0 %2649
        %v2651 = vsel %vm1262, %v2632, 0.0
        %2652 = vadd.xlane.f32.xlu0 %v2651
        %v2653 = vpop.xlane.xlu0 %2652
        %v2654 = vsel %vm1262, %v2634, 0.0
        %2655 = vadd.xlane.f32.xlu0 %v2654
        %v2656 = vpop.xlane.xlu0 %2655
        %v2657 = vsel %vm1262, %v2636, 0.0
        %2658 = vadd.xlane.f32.xlu0 %v2657
        %v2659 = vpop.xlane.xlu0 %2658
        %v2660 = vsel %vm1262, %v2638, 0.0
        %2661 = vadd.xlane.f32.xlu0 %v2660
        %v2662 = vpop.xlane.xlu0 %2661
        %v2663 = vrcp.pop %v2641
        %v2664 = vrcp.pop %v2644
        %v2665 = vrcp.pop %v2647
        %v2666 = vrcp.pop %v2650
        %v2667 = vrcp.pop %v2653
        %v2668 = vrcp.pop %v2656
        %v2669 = vrcp.pop %v2659
        %v2670 = vrcp.pop %v2662
        %v2671 = vmul.f32 %v2624, %v2663
        %v2672 = vmul.f32 %v2626, %v2664
        %v2673 = vmul.f32 %v2628, %v2665
        %v2674 = vmul.f32 %v2630, %v2666
        %v2675 = vmul.f32 %v2632, %v2667
        %v2676 = vmul.f32 %v2634, %v2668
        %v2677 = vmul.f32 %v2636, %v2669
        %v2678 = vmul.f32 %v2638, %v2670
        %2679 = vrot.lane.b32.xlu0 %v1062, 104
        %v2680 = vpop.permute.xlu0 %2679
        %2681 = vrot.lane.b32.xlu0 %v1067, 104
        %v2682 = vpop.permute.xlu0 %2681
        %2683 = vrot.lane.b32.xlu0 %v1072, 104
        %v2684 = vpop.permute.xlu0 %2683
        %2685 = vrot.lane.b32.xlu0 %v1077, 104
        %v2686 = vpop.permute.xlu0 %2685
        %2687 = vrot.lane.b32.xlu0 %v1082, 104
        %v2688 = vpop.permute.xlu0 %2687
        %2689 = vrot.lane.b32.xlu0 %v1087, 104
        %v2690 = vpop.permute.xlu0 %2689
        %2691 = vrot.lane.b32.xlu0 %v1092, 104
        %v2692 = vpop.permute.xlu0 %2691
        %2693 = vrot.lane.b32.xlu0 %v1097, 104
        %v2694 = vpop.permute.xlu0 %2693
        %v2704 = vsel %vm1262, %v2671, 0
        %v2707 = vsel %vm1262, %v2672, 0
        %v2710 = vsel %vm1262, %v2673, 0
        %v2713 = vsel %vm1262, %v2674, 0
        %v2716 = vsel %vm1262, %v2675, 0
        %v2719 = vsel %vm1262, %v2676, 0
        %v2722 = vsel %vm1262, %v2677, 0
        %v2725 = vsel %vm1262, %v2678, 0
        %2727 = vmatprep.subr.mxu0 0.0
        %2728 = vmatpush1.msra.mxu0 %v2680
        %2729 = vmatprep.subr.mxu0 0.0
        %2730 = vmatpush1.msra.mxu0 %v2682
        %2731 = vmatprep.subr.mxu0 0.0
        %2732 = vmatpush1.msra.mxu0 %v2684
        %2733 = vmatprep.subr.mxu0 0.0
        %2734 = vmatpush1.msra.mxu0 %v2686
        %2735 = vmatprep.subr.mxu0 0.0
        %2736 = vmatpush1.msra.mxu0 %v2688
        %2737 = vmatprep.subr.mxu0 0.0
        %2738 = vmatpush1.msra.mxu0 %v2690
        %2739 = vmatprep.subr.mxu0 0.0
        %2740 = vmatpush1.msra.mxu0 %v2692
        %2741 = vmatprep.subr.mxu0 0.0
        %2742 = vmatpush1.msra.mxu0 %v2694
        %2743 = vmatprep.subr.mxu0 0.0
        %2744 = vmatpush1.msra.mxu0 0.0
        %2745 = vmatprep.subr.mxu0 0.0
        %2746 = vmatpush1.msra.mxu0 0.0
        %2747 = vmatprep.subr.mxu0 0.0
        %2748 = vmatpush1.msra.mxu0 0.0
        %2749 = vmatprep.subr.mxu0 0.0
        %2750 = vmatpush1.msra.mxu0 0.0
        %2751 = vmatprep.subr.mxu0 0.0
        %2752 = vmatpush1.msra.mxu0 0.0
        %2753 = vmatprep.subr.mxu0 0.0
        %2754 = vmatpush1.msra.mxu0 0.0
        %2755 = vmatprep.subr.mxu0 0.0
        %2756 = vmatpush1.msra.mxu0 0.0
        %2757 = vmatprep.subr.mxu0 0.0
        %2758 = vmatpush1.msra.mxu0 0.0
        %2759 = vmatprep.subr.mxu0 0.0
        %2760 = vmatpush1.msra.mxu0 0.0
        %2761 = vmatprep.subr.mxu0 0.0
        %2762 = vmatpush1.msra.mxu0 0.0
        %2763 = vmatprep.subr.mxu0 0.0
        %2764 = vmatpush1.msra.mxu0 0.0
        %2765 = vmatprep.subr.mxu0 0.0
        %2766 = vmatpush1.msra.mxu0 0.0
        %2767 = vmatprep.subr.mxu0 0.0
        %2768 = vmatpush1.msra.mxu0 0.0
        %2769 = vmatprep.subr.mxu0 0.0
        %2770 = vmatpush1.msra.mxu0 0.0
        %2771 = vmatprep.subr.mxu0 0.0
        %2772 = vmatpush1.msra.mxu0 0.0
        %2773 = vmatprep.subr.mxu0 0.0
        %2774 = vmatpush1.msra.mxu0 0.0
        %2775 = vmatprep.subr.mxu0 0.0
        %2776 = vmatpush1.msra.mxu0 0.0
        %2777 = vmatprep.subr.mxu0 0.0
        %2778 = vmatpush1.msra.mxu0 0.0
        %2779 = vmatprep.subr.mxu0 0.0
        %2780 = vmatpush1.msra.mxu0 0.0
        %2781 = vmatprep.subr.mxu0 0.0
        %2782 = vmatpush1.msra.mxu0 0.0
        %2783 = vmatprep.subr.mxu0 0.0
        %2784 = vmatpush1.msra.mxu0 0.0
        %2785 = vmatprep.subr.mxu0 0.0
        %2786 = vmatpush1.msra.mxu0 0.0
        %2787 = vmatprep.subr.mxu0 0.0
        %2788 = vmatpush1.msra.mxu0 0.0
        %2789 = vmatprep.subr.mxu0 0.0
        %2790 = vmatpush1.msra.mxu0 0.0
        %2791 = vmatprep.mubr.f32.mxu0 0.0
        %2792 = vmatmul.mubr.f32.gmra.mrb[0].mxu0 %v2704
        %v2793 = vpop.f32.mrb[0].mxu0
        %v2794 = vadd.f32 0.0, %v2793
        %v2795 = vpop.f32.mrb[0].mxu0
        %2796 = vmatprep.mubr.f32.mxu0 0.0
        %2797 = vmatmul.mubr.f32.gmra.mrb[0].mxu0 %v2707
        %v2798 = vpop.f32.mrb[0].mxu0
        %v2799 = vadd.f32 0.0, %v2798
        %v2800 = vpop.f32.mrb[0].mxu0
        %2801 = vmatprep.mubr.f32.mxu0 0.0
        %2802 = vmatmul.mubr.f32.gmra.mrb[0].mxu0 %v2710
        %v2803 = vpop.f32.mrb[0].mxu0
        %v2804 = vadd.f32 0.0, %v2803
        %v2805 = vpop.f32.mrb[0].mxu0
        %2806 = vmatprep.mubr.f32.mxu0 0.0
        %2807 = vmatmul.mubr.f32.gmra.mrb[0].mxu0 %v2713
        %v2808 = vpop.f32.mrb[0].mxu0
        %v2809 = vadd.f32 0.0, %v2808
        %v2810 = vpop.f32.mrb[0].mxu0
        %2811 = vmatprep.mubr.f32.mxu0 0.0
        %2812 = vmatmul.mubr.f32.gmra.mrb[0].mxu0 %v2716
        %v2813 = vpop.f32.mrb[0].mxu0
        %v2814 = vadd.f32 0.0, %v2813
        %v2815 = vpop.f32.mrb[0].mxu0
        %2816 = vmatprep.mubr.f32.mxu0 0.0
        %2817 = vmatmul.mubr.f32.gmra.mrb[0].mxu0 %v2719
        %v2818 = vpop.f32.mrb[0].mxu0
        %v2819 = vadd.f32 0.0, %v2818
        %v2820 = vpop.f32.mrb[0].mxu0
        %2821 = vmatprep.mubr.f32.mxu0 0.0
        %2822 = vmatmul.mubr.f32.gmra.mrb[0].mxu0 %v2722
        %v2823 = vpop.f32.mrb[0].mxu0
        %v2824 = vadd.f32 0.0, %v2823
        %v2825 = vpop.f32.mrb[0].mxu0
        %2826 = vmatprep.mubr.f32.mxu0 0.0
        %2827 = vmatmul.mubr.f32.gmra.mrb[0].mxu0 %v2725
        %v2828 = vpop.f32.mrb[0].mxu0
        %v2829 = vadd.f32 0.0, %v2828
        %v2830 = vpop.f32.mrb[0].mxu0
        %2831 = vdwg.mxu0
        %2840 = vrot.lane.b32.xlu0 %v2794, 24
        %v2841 = vpop.permute.xlu0 %2840
        %2842 = vrot.lane.b32.xlu0 %v2799, 24
        %v2843 = vpop.permute.xlu0 %2842
        %2844 = vrot.lane.b32.xlu0 %v2804, 24
        %v2845 = vpop.permute.xlu0 %2844
        %2846 = vrot.lane.b32.xlu0 %v2809, 24
        %v2847 = vpop.permute.xlu0 %2846
        %2848 = vrot.lane.b32.xlu0 %v2814, 24
        %v2849 = vpop.permute.xlu0 %2848
        %2850 = vrot.lane.b32.xlu0 %v2819, 24
        %v2851 = vpop.permute.xlu0 %2850
        %2852 = vrot.lane.b32.xlu0 %v2824, 24
        %v2853 = vpop.permute.xlu0 %2852
        %2854 = vrot.lane.b32.xlu0 %v2829, 24
        %v2855 = vpop.permute.xlu0 %2854
        %vm2864 = vcmask 261312
        %2865 = vst.msk [vmem:[#allocation2] sm:$0xff] %vm2864, %v2841
        %2866 = vst.msk [vmem:[#allocation2 + $0x8] sm:$0xff] %vm2864, %v2843
        %2867 = vst.msk [vmem:[#allocation2 + $0x10] sm:$0xff] %vm2864, %v2845
        %2868 = vst.msk [vmem:[#allocation2 + $0x18] sm:$0xff] %vm2864, %v2847
        %2869 = vst.msk [vmem:[#allocation2 + $0x20] sm:$0xff] %vm2864, %v2849
        %2870 = vst.msk [vmem:[#allocation2 + $0x28] sm:$0xff] %vm2864, %v2851
        %2871 = vst.msk [vmem:[#allocation2 + $0x30] sm:$0xff] %vm2864, %v2853
        %2872 = vst.msk [vmem:[#allocation2 + $0x38] sm:$0xff] %vm2864, %v2855
        %v2873 = vld [vmem:[#allocation2] sm:$0xff]
        %v2874 = vld [vmem:[#allocation2 + $0x8] sm:$0xff]
        %v2875 = vld [vmem:[#allocation2 + $0x10] sm:$0xff]
        %v2876 = vld [vmem:[#allocation2 + $0x18] sm:$0xff]
        %v2877 = vld [vmem:[#allocation2 + $0x20] sm:$0xff]
        %v2878 = vld [vmem:[#allocation2 + $0x28] sm:$0xff]
        %v2879 = vld [vmem:[#allocation2 + $0x30] sm:$0xff]
        %v2880 = vld [vmem:[#allocation2 + $0x38] sm:$0xff]
        %v2881 = vlaneseq
        %v2882 = vshrl.u32 %v2881, 7
        %v2883 = vsub.s32 0, %v2882
        %v2884 = vrot.slane %v678, %v2883
        %v2886 = vsel %vm696, %v2873, 0
        %v2889 = vsel %vm696, %v2874, 0
        %v2892 = vsel %vm696, %v2875, 0
        %v2895 = vsel %vm696, %v2876, 0
        %v2898 = vsel %vm696, %v2877, 0
        %v2901 = vsel %vm696, %v2878, 0
        %v2904 = vsel %vm696, %v2879, 0
        %v2907 = vsel %vm696, %v2880, 0
        %2909 = vmatprep.subr.mxu0 0.0
        %2910 = vmatpush1.msra.mxu0 %v671
        %2911 = vmatprep.subr.mxu0 0.0
        %2912 = vmatpush1.msra.mxu0 %v672
        %2913 = vmatprep.subr.mxu0 0.0
        %2914 = vmatpush1.msra.mxu0 %v673
        %2915 = vmatprep.subr.mxu0 0.0
        %2916 = vmatpush1.msra.mxu0 %v674
        %2917 = vmatprep.subr.mxu0 0.0
        %2918 = vmatpush1.msra.mxu0 0.0
        %2919 = vmatprep.subr.mxu0 0.0
        %2920 = vmatpush1.msra.mxu0 0.0
        %2921 = vmatprep.subr.mxu0 0.0
        %2922 = vmatpush1.msra.mxu0 0.0
        %2923 = vmatprep.subr.mxu0 0.0
        %2924 = vmatpush1.msra.mxu0 0.0
        %2925 = vmatprep.subr.mxu0 0.0
        %2926 = vmatpush1.msra.mxu0 0.0
        %2927 = vmatprep.subr.mxu0 0.0
        %2928 = vmatpush1.msra.mxu0 0.0
        %2929 = vmatprep.subr.mxu0 0.0
        %2930 = vmatpush1.msra.mxu0 0.0
        %2931 = vmatprep.subr.mxu0 0.0
        %2932 = vmatpush1.msra.mxu0 0.0
        %2933 = vmatprep.subr.mxu0 0.0
        %2934 = vmatpush1.msra.mxu0 0.0
        %2935 = vmatprep.subr.mxu0 0.0
        %2936 = vmatpush1.msra.mxu0 0.0
        %2937 = vmatprep.subr.mxu0 0.0
        %2938 = vmatpush1.msra.mxu0 0.0
        %2939 = vmatprep.subr.mxu0 0.0
        %2940 = vmatpush1.msra.mxu0 0.0
        %2941 = vmatprep.subr.mxu0 0.0
        %2942 = vmatpush1.msra.mxu0 0.0
        %2943 = vmatprep.subr.mxu0 0.0
        %2944 = vmatpush1.msra.mxu0 0.0
        %2945 = vmatprep.subr.mxu0 0.0
        %2946 = vmatpush1.msra.mxu0 0.0
        %2947 = vmatprep.subr.mxu0 0.0
        %2948 = vmatpush1.msra.mxu0 0.0
        %2949 = vmatprep.subr.mxu0 0.0
        %2950 = vmatpush1.msra.mxu0 0.0
        %2951 = vmatprep.subr.mxu0 0.0
        %2952 = vmatpush1.msra.mxu0 0.0
        %2953 = vmatprep.subr.mxu0 0.0
        %2954 = vmatpush1.msra.mxu0 0.0
        %2955 = vmatprep.subr.mxu0 0.0
        %2956 = vmatpush1.msra.mxu0 0.0
        %2957 = vmatprep.subr.mxu0 0.0
        %2958 = vmatpush1.msra.mxu0 0.0
        %2959 = vmatprep.subr.mxu0 0.0
        %2960 = vmatpush1.msra.mxu0 0.0
        %2961 = vmatprep.subr.mxu0 0.0
        %2962 = vmatpush1.msra.mxu0 0.0
        %2963 = vmatprep.subr.mxu0 0.0
        %2964 = vmatpush1.msra.mxu0 0.0
        %2965 = vmatprep.subr.mxu0 0.0
        %2966 = vmatpush1.msra.mxu0 0.0
        %2967 = vmatprep.subr.mxu0 0.0
        %2968 = vmatpush1.msra.mxu0 0.0
        %2969 = vmatprep.subr.mxu0 0.0
        %2970 = vmatpush1.msra.mxu0 0.0
        %2971 = vmatprep.subr.mxu0 0.0
        %2972 = vmatpush1.msra.mxu0 0.0
        %2973 = vmatprep.mubr.f32.mxu0 0.0
        %2974 = vmatmul.mubr.f32.gmra.mrb[0].mxu0 %v2886
        %v2975 = vpop.f32.mrb[0].mxu0
        %v2976 = vadd.f32 %v2884, %v2975
        %v2977 = vpop.f32.mrb[0].mxu0
        %2978 = vmatprep.mubr.f32.mxu0 0.0
        %2979 = vmatmul.mubr.f32.gmra.mrb[0].mxu0 %v2889
        %v2980 = vpop.f32.mrb[0].mxu0
        %v2981 = vadd.f32 %v2884, %v2980
        %v2982 = vpop.f32.mrb[0].mxu0
        %2983 = vmatprep.mubr.f32.mxu0 0.0
        %2984 = vmatmul.mubr.f32.gmra.mrb[0].mxu0 %v2892
        %v2985 = vpop.f32.mrb[0].mxu0
        %v2986 = vadd.f32 %v2884, %v2985
        %v2987 = vpop.f32.mrb[0].mxu0
        %2988 = vmatprep.mubr.f32.mxu0 0.0
        %2989 = vmatmul.mubr.f32.gmra.mrb[0].mxu0 %v2895
        %v2990 = vpop.f32.mrb[0].mxu0
        %v2991 = vadd.f32 %v2884, %v2990
        %v2992 = vpop.f32.mrb[0].mxu0
        %2993 = vmatprep.mubr.f32.mxu0 0.0
        %2994 = vmatmul.mubr.f32.gmra.mrb[0].mxu0 %v2898
        %v2995 = vpop.f32.mrb[0].mxu0
        %v2996 = vadd.f32 %v2884, %v2995
        %v2997 = vpop.f32.mrb[0].mxu0
        %2998 = vmatprep.mubr.f32.mxu0 0.0
        %2999 = vmatmul.mubr.f32.gmra.mrb[0].mxu0 %v2901
        %v3000 = vpop.f32.mrb[0].mxu0
        %v3001 = vadd.f32 %v2884, %v3000
        %v3002 = vpop.f32.mrb[0].mxu0
        %3003 = vmatprep.mubr.f32.mxu0 0.0
        %3004 = vmatmul.mubr.f32.gmra.mrb[0].mxu0 %v2904
        %v3005 = vpop.f32.mrb[0].mxu0
        %v3006 = vadd.f32 %v2884, %v3005
        %v3007 = vpop.f32.mrb[0].mxu0
        %3008 = vmatprep.mubr.f32.mxu0 0.0
        %3009 = vmatmul.mubr.f32.gmra.mrb[0].mxu0 %v2907
        %v3010 = vpop.f32.mrb[0].mxu0
        %v3011 = vadd.f32 %v2884, %v3010
        %v3012 = vpop.f32.mrb[0].mxu0
        %3013 = vdwg.mxu0
        %v3014 = vadd.f32 %v604, %v2976
        %v3015 = vadd.f32 %v605, %v2981
        %v3016 = vadd.f32 %v606, %v2986
        %v3017 = vadd.f32 %v607, %v2991
        %v3018 = vadd.f32 %v608, %v2996
        %v3019 = vadd.f32 %v609, %v3001
        %v3020 = vadd.f32 %v610, %v3006
        %v3021 = vadd.f32 %v611, %v3011
        %v3022 = vsel %vm696, %v3014, 0.0
        %3023 = vadd.xlane.f32.xlu0 %v3022
        %v3024 = vpop.xlane.xlu0 %3023
        %v3025 = vsel %vm696, %v3015, 0.0
        %3026 = vadd.xlane.f32.xlu0 %v3025
        %v3027 = vpop.xlane.xlu0 %3026
        %v3028 = vsel %vm696, %v3016, 0.0
        %3029 = vadd.xlane.f32.xlu0 %v3028
        %v3030 = vpop.xlane.xlu0 %3029
        %v3031 = vsel %vm696, %v3017, 0.0
        %3032 = vadd.xlane.f32.xlu0 %v3031
        %v3033 = vpop.xlane.xlu0 %3032
        %v3034 = vsel %vm696, %v3018, 0.0
        %3035 = vadd.xlane.f32.xlu0 %v3034
        %v3036 = vpop.xlane.xlu0 %3035
        %v3037 = vsel %vm696, %v3019, 0.0
        %3038 = vadd.xlane.f32.xlu0 %v3037
        %v3039 = vpop.xlane.xlu0 %3038
        %v3040 = vsel %vm696, %v3020, 0.0
        %3041 = vadd.xlane.f32.xlu0 %v3040
        %v3042 = vpop.xlane.xlu0 %3041
        %v3043 = vsel %vm696, %v3021, 0.0
        %3044 = vadd.xlane.f32.xlu0 %v3043
        %v3045 = vpop.xlane.xlu0 %3044
        %v3046 = vrcp.pop 32.0
        %v3047 = vmul.f32 %v3024, %v3046
        %v3048 = vmul.f32 %v3027, %v3046
        %v3049 = vmul.f32 %v3030, %v3046
        %v3050 = vmul.f32 %v3033, %v3046
        %v3051 = vmul.f32 %v3036, %v3046
        %v3052 = vmul.f32 %v3039, %v3046
        %v3053 = vmul.f32 %v3042, %v3046
        %v3054 = vmul.f32 %v3045, %v3046
        %v3055 = vsub.f32 %v3014, %v3047
        %v3056 = vsub.f32 %v3015, %v3048
        %v3057 = vsub.f32 %v3016, %v3049
        %v3058 = vsub.f32 %v3017, %v3050
        %v3059 = vsub.f32 %v3018, %v3051
        %v3060 = vsub.f32 %v3019, %v3052
        %v3061 = vsub.f32 %v3020, %v3053
        %v3062 = vsub.f32 %v3021, %v3054
        %v3063 = vmul.f32 %v3055, %v3055
        %v3064 = vmul.f32 %v3056, %v3056
        %v3065 = vmul.f32 %v3057, %v3057
        %v3066 = vmul.f32 %v3058, %v3058
        %v3067 = vmul.f32 %v3059, %v3059
        %v3068 = vmul.f32 %v3060, %v3060
        %v3069 = vmul.f32 %v3061, %v3061
        %v3070 = vmul.f32 %v3062, %v3062
        %v3071 = vsel %vm696, %v3063, 0.0
        %3072 = vadd.xlane.f32.xlu0 %v3071
        %v3073 = vpop.xlane.xlu0 %3072
        %v3074 = vsel %vm696, %v3064, 0.0
        %3075 = vadd.xlane.f32.xlu0 %v3074
        %v3076 = vpop.xlane.xlu0 %3075
        %v3077 = vsel %vm696, %v3065, 0.0
        %3078 = vadd.xlane.f32.xlu0 %v3077
        %v3079 = vpop.xlane.xlu0 %3078
        %v3080 = vsel %vm696, %v3066, 0.0
        %3081 = vadd.xlane.f32.xlu0 %v3080
        %v3082 = vpop.xlane.xlu0 %3081
        %v3083 = vsel %vm696, %v3067, 0.0
        %3084 = vadd.xlane.f32.xlu0 %v3083
        %v3085 = vpop.xlane.xlu0 %3084
        %v3086 = vsel %vm696, %v3068, 0.0
        %3087 = vadd.xlane.f32.xlu0 %v3086
        %v3088 = vpop.xlane.xlu0 %3087
        %v3089 = vsel %vm696, %v3069, 0.0
        %3090 = vadd.xlane.f32.xlu0 %v3089
        %v3091 = vpop.xlane.xlu0 %3090
        %v3092 = vsel %vm696, %v3070, 0.0
        %3093 = vadd.xlane.f32.xlu0 %v3092
        %v3094 = vpop.xlane.xlu0 %3093
        %v3095 = vmul.f32 %v3073, %v3046
        %v3096 = vmul.f32 %v3076, %v3046
        %v3097 = vmul.f32 %v3079, %v3046
        %v3098 = vmul.f32 %v3082, %v3046
        %v3099 = vmul.f32 %v3085, %v3046
        %v3100 = vmul.f32 %v3088, %v3046
        %v3101 = vmul.f32 %v3091, %v3046
        %v3102 = vmul.f32 %v3094, %v3046
        %v3103 = vadd.f32 %v3095, 1e-05
        %v3104 = vadd.f32 %v3096, 1e-05
        %v3105 = vadd.f32 %v3097, 1e-05
        %v3106 = vadd.f32 %v3098, 1e-05
        %v3107 = vadd.f32 %v3099, 1e-05
        %v3108 = vadd.f32 %v3100, 1e-05
        %v3109 = vadd.f32 %v3101, 1e-05
        %v3110 = vadd.f32 %v3102, 1e-05
        %v3111 = vrsqrt.pop %v3103
        %v3112 = vrsqrt.pop %v3104
        %v3113 = vrsqrt.pop %v3105
        %v3114 = vrsqrt.pop %v3106
        %v3115 = vrsqrt.pop %v3107
        %v3116 = vrsqrt.pop %v3108
        %v3117 = vrsqrt.pop %v3109
        %v3118 = vrsqrt.pop %v3110
        %v3119 = vmul.f32 %v3055, %v3111
        %v3120 = vmul.f32 %v3056, %v3112
        %v3121 = vmul.f32 %v3057, %v3113
        %v3122 = vmul.f32 %v3058, %v3114
        %v3123 = vmul.f32 %v3059, %v3115
        %v3124 = vmul.f32 %v3060, %v3116
        %v3125 = vmul.f32 %v3061, %v3117
        %v3126 = vmul.f32 %v3062, %v3118
        %v3127 = vlaneseq
        %v3128 = vshrl.u32 %v3127, 7
        %v3129 = vsub.s32 0, %v3128
        %v3130 = vrot.slane %v679, %v3129
        %v3131 = vmul.f32 %v3119, %v3130
        %v3132 = vmul.f32 %v3120, %v3130
        %v3133 = vmul.f32 %v3121, %v3130
        %v3134 = vmul.f32 %v3122, %v3130
        %v3135 = vmul.f32 %v3123, %v3130
        %v3136 = vmul.f32 %v3124, %v3130
        %v3137 = vmul.f32 %v3125, %v3130
        %v3138 = vmul.f32 %v3126, %v3130
        %v3139 = vlaneseq
        %v3140 = vshrl.u32 %v3139, 7
        %v3141 = vsub.s32 0, %v3140
        %v3142 = vrot.slane %v680, %v3141
        %v3143 = vadd.f32 %v3131, %v3142
        %v3144 = vadd.f32 %v3132, %v3142
        %v3145 = vadd.f32 %v3133, %v3142
        %v3146 = vadd.f32 %v3134, %v3142
        %v3147 = vadd.f32 %v3135, %v3142
        %v3148 = vadd.f32 %v3136, %v3142
        %v3149 = vadd.f32 %v3137, %v3142
        %v3150 = vadd.f32 %v3138, %v3142
        %v3151 = vld [vmem:[#allocation13] sm:$0xff]
        %v3152 = vld [vmem:[#allocation13 + $0x8] sm:$0xff]
        %v3153 = vld [vmem:[#allocation13 + $0x10] sm:$0xff]
        %v3154 = vld [vmem:[#allocation13 + $0x18] sm:$0xff]
        %v3155 = vld [vmem:[#allocation15] sm:$0x1]
        %v3157 = vlaneseq
        %v3158 = vshrl.u32 %v3157, 7
        %v3159 = vsub.s32 0, %v3158
        %v3160 = vrot.slane %v3155, %v3159
        %v3163 = vsel %vm696, %v3143, 0
        %v3166 = vsel %vm696, %v3144, 0
        %v3169 = vsel %vm696, %v3145, 0
        %v3172 = vsel %vm696, %v3146, 0
        %v3175 = vsel %vm696, %v3147, 0
        %v3178 = vsel %vm696, %v3148, 0
        %v3181 = vsel %vm696, %v3149, 0
        %v3184 = vsel %vm696, %v3150, 0
        %3186 = vmatprep.subr.mxu0 0.0
        %3187 = vmatpush1.msra.mxu0 %v3151
        %3188 = vmatprep.subr.mxu0 0.0
        %3189 = vmatpush1.msra.mxu0 %v3152
        %3190 = vmatprep.subr.mxu0 0.0
        %3191 = vmatpush1.msra.mxu0 %v3153
        %3192 = vmatprep.subr.mxu0 0.0
        %3193 = vmatpush1.msra.mxu0 %v3154
        %3194 = vmatprep.subr.mxu0 0.0
        %3195 = vmatpush1.msra.mxu0 0.0
        %3196 = vmatprep.subr.mxu0 0.0
        %3197 = vmatpush1.msra.mxu0 0.0
        %3198 = vmatprep.subr.mxu0 0.0
        %3199 = vmatpush1.msra.mxu0 0.0
        %3200 = vmatprep.subr.mxu0 0.0
        %3201 = vmatpush1.msra.mxu0 0.0
        %3202 = vmatprep.subr.mxu0 0.0
        %3203 = vmatpush1.msra.mxu0 0.0
        %3204 = vmatprep.subr.mxu0 0.0
        %3205 = vmatpush1.msra.mxu0 0.0
        %3206 = vmatprep.subr.mxu0 0.0
        %3207 = vmatpush1.msra.mxu0 0.0
        %3208 = vmatprep.subr.mxu0 0.0
        %3209 = vmatpush1.msra.mxu0 0.0
        %3210 = vmatprep.subr.mxu0 0.0
        %3211 = vmatpush1.msra.mxu0 0.0
        %3212 = vmatprep.subr.mxu0 0.0
        %3213 = vmatpush1.msra.mxu0 0.0
        %3214 = vmatprep.subr.mxu0 0.0
        %3215 = vmatpush1.msra.mxu0 0.0
        %3216 = vmatprep.subr.mxu0 0.0
        %3217 = vmatpush1.msra.mxu0 0.0
        %3218 = vmatprep.subr.mxu0 0.0
        %3219 = vmatpush1.msra.mxu0 0.0
        %3220 = vmatprep.subr.mxu0 0.0
        %3221 = vmatpush1.msra.mxu0 0.0
        %3222 = vmatprep.subr.mxu0 0.0
        %3223 = vmatpush1.msra.mxu0 0.0
        %3224 = vmatprep.subr.mxu0 0.0
        %3225 = vmatpush1.msra.mxu0 0.0
        %3226 = vmatprep.subr.mxu0 0.0
        %3227 = vmatpush1.msra.mxu0 0.0
        %3228 = vmatprep.subr.mxu0 0.0
        %3229 = vmatpush1.msra.mxu0 0.0
        %3230 = vmatprep.subr.mxu0 0.0
        %3231 = vmatpush1.msra.mxu0 0.0
        %3232 = vmatprep.subr.mxu0 0.0
        %3233 = vmatpush1.msra.mxu0 0.0
        %3234 = vmatprep.subr.mxu0 0.0
        %3235 = vmatpush1.msra.mxu0 0.0
        %3236 = vmatprep.subr.mxu0 0.0
        %3237 = vmatpush1.msra.mxu0 0.0
        %3238 = vmatprep.subr.mxu0 0.0
        %3239 = vmatpush1.msra.mxu0 0.0
        %3240 = vmatprep.subr.mxu0 0.0
        %3241 = vmatpush1.msra.mxu0 0.0
        %3242 = vmatprep.subr.mxu0 0.0
        %3243 = vmatpush1.msra.mxu0 0.0
        %3244 = vmatprep.subr.mxu0 0.0
        %3245 = vmatpush1.msra.mxu0 0.0
        %3246 = vmatprep.subr.mxu0 0.0
        %3247 = vmatpush1.msra.mxu0 0.0
        %3248 = vmatprep.subr.mxu0 0.0
        %3249 = vmatpush1.msra.mxu0 0.0
        %3250 = vmatprep.mubr.f32.mxu0 0.0
        %3251 = vmatmul.mubr.f32.gmra.mrb[0].mxu0 %v3163
        %v3252 = vpop.f32.mrb[0].mxu0
        %v3253 = vadd.f32 %v3160, %v3252
        %v3254 = vpop.f32.mrb[0].mxu0
        %3255 = vmatprep.mubr.f32.mxu0 0.0
        %3256 = vmatmul.mubr.f32.gmra.mrb[0].mxu0 %v3166
        %v3257 = vpop.f32.mrb[0].mxu0
        %v3258 = vadd.f32 %v3160, %v3257
        %v3259 = vpop.f32.mrb[0].mxu0
        %3260 = vmatprep.mubr.f32.mxu0 0.0
        %3261 = vmatmul.mubr.f32.gmra.mrb[0].mxu0 %v3169
        %v3262 = vpop.f32.mrb[0].mxu0
        %v3263 = vadd.f32 %v3160, %v3262
        %v3264 = vpop.f32.mrb[0].mxu0
        %3265 = vmatprep.mubr.f32.mxu0 0.0
        %3266 = vmatmul.mubr.f32.gmra.mrb[0].mxu0 %v3172
        %v3267 = vpop.f32.mrb[0].mxu0
        %v3268 = vadd.f32 %v3160, %v3267
        %v3269 = vpop.f32.mrb[0].mxu0
        %3270 = vmatprep.mubr.f32.mxu0 0.0
        %3271 = vmatmul.mubr.f32.gmra.mrb[0].mxu0 %v3175
        %v3272 = vpop.f32.mrb[0].mxu0
        %v3273 = vadd.f32 %v3160, %v3272
        %v3274 = vpop.f32.mrb[0].mxu0
        %3275 = vmatprep.mubr.f32.mxu0 0.0
        %3276 = vmatmul.mubr.f32.gmra.mrb[0].mxu0 %v3178
        %v3277 = vpop.f32.mrb[0].mxu0
        %v3278 = vadd.f32 %v3160, %v3277
        %v3279 = vpop.f32.mrb[0].mxu0
        %3280 = vmatprep.mubr.f32.mxu0 0.0
        %3281 = vmatmul.mubr.f32.gmra.mrb[0].mxu0 %v3181
        %v3282 = vpop.f32.mrb[0].mxu0
        %v3283 = vadd.f32 %v3160, %v3282
        %v3284 = vpop.f32.mrb[0].mxu0
        %3285 = vmatprep.mubr.f32.mxu0 0.0
        %3286 = vmatmul.mubr.f32.gmra.mrb[0].mxu0 %v3184
        %v3287 = vpop.f32.mrb[0].mxu0
        %v3288 = vadd.f32 %v3160, %v3287
        %v3289 = vpop.f32.mrb[0].mxu0
        %3290 = vdwg.mxu0
        %v3291 = vmax.f32 %v3253, 0.0
        %v3292 = vmax.f32 %v3258, 0.0
        %v3293 = vmax.f32 %v3263, 0.0
        %v3294 = vmax.f32 %v3268, 0.0
        %v3295 = vmax.f32 %v3273, 0.0
        %v3296 = vmax.f32 %v3278, 0.0
        %v3297 = vmax.f32 %v3283, 0.0
        %v3298 = vmax.f32 %v3288, 0.0
        %v3299 = vld [vmem:[#allocation16] sm:$0xff]
        %v3300 = vld [vmem:[#allocation16 + $0x8] sm:$0xff]
        %v3301 = vld [vmem:[#allocation16 + $0x10] sm:$0xff]
        %v3302 = vld [vmem:[#allocation16 + $0x18] sm:$0xff]
        %v3303 = vld [vmem:[#allocation16 + $0x20] sm:$0xff]
        %v3304 = vld [vmem:[#allocation16 + $0x28] sm:$0xff]
        %v3305 = vld [vmem:[#allocation16 + $0x30] sm:$0xff]
        %v3306 = vld [vmem:[#allocation16 + $0x38] sm:$0xff]
        %v3307 = vlaneseq
        %v3308 = vshrl.u32 %v3307, 7
        %v3309 = vsub.s32 0, %v3308
        %v3310 = vrot.slane %v681, %v3309
        %v3312 = vsel %vm1262, %v3291, 0
        %v3315 = vsel %vm1262, %v3292, 0
        %v3318 = vsel %vm1262, %v3293, 0
        %v3321 = vsel %vm1262, %v3294, 0
        %v3324 = vsel %vm1262, %v3295, 0
        %v3327 = vsel %vm1262, %v3296, 0
        %v3330 = vsel %vm1262, %v3297, 0
        %v3333 = vsel %vm1262, %v3298, 0
        %3335 = vmatprep.subr.mxu0 0.0
        %3336 = vmatpush1.msra.mxu0 %v3299
        %3337 = vmatprep.subr.mxu0 0.0
        %3338 = vmatpush1.msra.mxu0 %v3300
        %3339 = vmatprep.subr.mxu0 0.0
        %3340 = vmatpush1.msra.mxu0 %v3301
        %3341 = vmatprep.subr.mxu0 0.0
        %3342 = vmatpush1.msra.mxu0 %v3302
        %3343 = vmatprep.subr.mxu0 0.0
        %3344 = vmatpush1.msra.mxu0 %v3303
        %3345 = vmatprep.subr.mxu0 0.0
        %3346 = vmatpush1.msra.mxu0 %v3304
        %3347 = vmatprep.subr.mxu0 0.0
        %3348 = vmatpush1.msra.mxu0 %v3305
        %3349 = vmatprep.subr.mxu0 0.0
        %3350 = vmatpush1.msra.mxu0 %v3306
        %3351 = vmatprep.subr.mxu0 0.0
        %3352 = vmatpush1.msra.mxu0 0.0
        %3353 = vmatprep.subr.mxu0 0.0
        %3354 = vmatpush1.msra.mxu0 0.0
        %3355 = vmatprep.subr.mxu0 0.0
        %3356 = vmatpush1.msra.mxu0 0.0
        %3357 = vmatprep.subr.mxu0 0.0
        %3358 = vmatpush1.msra.mxu0 0.0
        %3359 = vmatprep.subr.mxu0 0.0
        %3360 = vmatpush1.msra.mxu0 0.0
        %3361 = vmatprep.subr.mxu0 0.0
        %3362 = vmatpush1.msra.mxu0 0.0
        %3363 = vmatprep.subr.mxu0 0.0
        %3364 = vmatpush1.msra.mxu0 0.0
        %3365 = vmatprep.subr.mxu0 0.0
        %3366 = vmatpush1.msra.mxu0 0.0
        %3367 = vmatprep.subr.mxu0 0.0
        %3368 = vmatpush1.msra.mxu0 0.0
        %3369 = vmatprep.subr.mxu0 0.0
        %3370 = vmatpush1.msra.mxu0 0.0
        %3371 = vmatprep.subr.mxu0 0.0
        %3372 = vmatpush1.msra.mxu0 0.0
        %3373 = vmatprep.subr.mxu0 0.0
        %3374 = vmatpush1.msra.mxu0 0.0
        %3375 = vmatprep.subr.mxu0 0.0
        %3376 = vmatpush1.msra.mxu0 0.0
        %3377 = vmatprep.subr.mxu0 0.0
        %3378 = vmatpush1.msra.mxu0 0.0
        %3379 = vmatprep.subr.mxu0 0.0
        %3380 = vmatpush1.msra.mxu0 0.0
        %3381 = vmatprep.subr.mxu0 0.0
        %3382 = vmatpush1.msra.mxu0 0.0
        %3383 = vmatprep.subr.mxu0 0.0
        %3384 = vmatpush1.msra.mxu0 0.0
        %3385 = vmatprep.subr.mxu0 0.0
        %3386 = vmatpush1.msra.mxu0 0.0
        %3387 = vmatprep.subr.mxu0 0.0
        %3388 = vmatpush1.msra.mxu0 0.0
        %3389 = vmatprep.subr.mxu0 0.0
        %3390 = vmatpush1.msra.mxu0 0.0
        %3391 = vmatprep.subr.mxu0 0.0
        %3392 = vmatpush1.msra.mxu0 0.0
        %3393 = vmatprep.subr.mxu0 0.0
        %3394 = vmatpush1.msra.mxu0 0.0
        %3395 = vmatprep.subr.mxu0 0.0
        %3396 = vmatpush1.msra.mxu0 0.0
        %3397 = vmatprep.subr.mxu0 0.0
        %3398 = vmatpush1.msra.mxu0 0.0
        %3399 = vmatprep.mubr.f32.mxu0 0.0
        %3400 = vmatmul.mubr.f32.gmra.mrb[0].mxu0 %v3312
        %v3401 = vpop.f32.mrb[0].mxu0
        %v3402 = vadd.f32 %v3310, %v3401
        %v3403 = vpop.f32.mrb[0].mxu0
        %3404 = vmatprep.mubr.f32.mxu0 0.0
        %3405 = vmatmul.mubr.f32.gmra.mrb[0].mxu0 %v3315
        %v3406 = vpop.f32.mrb[0].mxu0
        %v3407 = vadd.f32 %v3310, %v3406
        %v3408 = vpop.f32.mrb[0].mxu0
        %3409 = vmatprep.mubr.f32.mxu0 0.0
        %3410 = vmatmul.mubr.f32.gmra.mrb[0].mxu0 %v3318
        %v3411 = vpop.f32.mrb[0].mxu0
        %v3412 = vadd.f32 %v3310, %v3411
        %v3413 = vpop.f32.mrb[0].mxu0
        %3414 = vmatprep.mubr.f32.mxu0 0.0
        %3415 = vmatmul.mubr.f32.gmra.mrb[0].mxu0 %v3321
        %v3416 = vpop.f32.mrb[0].mxu0
        %v3417 = vadd.f32 %v3310, %v3416
        %v3418 = vpop.f32.mrb[0].mxu0
        %3419 = vmatprep.mubr.f32.mxu0 0.0
        %3420 = vmatmul.mubr.f32.gmra.mrb[0].mxu0 %v3324
        %v3421 = vpop.f32.mrb[0].mxu0
        %v3422 = vadd.f32 %v3310, %v3421
        %v3423 = vpop.f32.mrb[0].mxu0
        %3424 = vmatprep.mubr.f32.mxu0 0.0
        %3425 = vmatmul.mubr.f32.gmra.mrb[0].mxu0 %v3327
        %v3426 = vpop.f32.mrb[0].mxu0
        %v3427 = vadd.f32 %v3310, %v3426
        %v3428 = vpop.f32.mrb[0].mxu0
        %3429 = vmatprep.mubr.f32.mxu0 0.0
        %3430 = vmatmul.mubr.f32.gmra.mrb[0].mxu0 %v3330
        %v3431 = vpop.f32.mrb[0].mxu0
        %v3432 = vadd.f32 %v3310, %v3431
        %v3433 = vpop.f32.mrb[0].mxu0
        %3434 = vmatprep.mubr.f32.mxu0 0.0
        %3435 = vmatmul.mubr.f32.gmra.mrb[0].mxu0 %v3333
        %v3436 = vpop.f32.mrb[0].mxu0
        %v3437 = vadd.f32 %v3310, %v3436
        %v3438 = vpop.f32.mrb[0].mxu0
        %3439 = vdwg.mxu0
        %v3440 = vadd.f32 %v3143, %v3402
        %v3441 = vadd.f32 %v3144, %v3407
        %v3442 = vadd.f32 %v3145, %v3412
        %v3443 = vadd.f32 %v3146, %v3417
        %v3444 = vadd.f32 %v3147, %v3422
        %v3445 = vadd.f32 %v3148, %v3427
        %v3446 = vadd.f32 %v3149, %v3432
        %v3447 = vadd.f32 %v3150, %v3437
        %v3448 = vsel %vm696, %v3440, 0.0
        %3449 = vadd.xlane.f32.xlu0 %v3448
        %v3450 = vpop.xlane.xlu0 %3449
        %v3451 = vsel %vm696, %v3441, 0.0
        %3452 = vadd.xlane.f32.xlu0 %v3451
        %v3453 = vpop.xlane.xlu0 %3452
        %v3454 = vsel %vm696, %v3442, 0.0
        %3455 = vadd.xlane.f32.xlu0 %v3454
        %v3456 = vpop.xlane.xlu0 %3455
        %v3457 = vsel %vm696, %v3443, 0.0
        %3458 = vadd.xlane.f32.xlu0 %v3457
        %v3459 = vpop.xlane.xlu0 %3458
        %v3460 = vsel %vm696, %v3444, 0.0
        %3461 = vadd.xlane.f32.xlu0 %v3460
        %v3462 = vpop.xlane.xlu0 %3461
        %v3463 = vsel %vm696, %v3445, 0.0
        %3464 = vadd.xlane.f32.xlu0 %v3463
        %v3465 = vpop.xlane.xlu0 %3464
        %v3466 = vsel %vm696, %v3446, 0.0
        %3467 = vadd.xlane.f32.xlu0 %v3466
        %v3468 = vpop.xlane.xlu0 %3467
        %v3469 = vsel %vm696, %v3447, 0.0
        %3470 = vadd.xlane.f32.xlu0 %v3469
        %v3471 = vpop.xlane.xlu0 %3470
        %v3472 = vmul.f32 %v3450, %v3046
        %v3473 = vmul.f32 %v3453, %v3046
        %v3474 = vmul.f32 %v3456, %v3046
        %v3475 = vmul.f32 %v3459, %v3046
        %v3476 = vmul.f32 %v3462, %v3046
        %v3477 = vmul.f32 %v3465, %v3046
        %v3478 = vmul.f32 %v3468, %v3046
        %v3479 = vmul.f32 %v3471, %v3046
        %v3480 = vsub.f32 %v3440, %v3472
        %v3481 = vsub.f32 %v3441, %v3473
        %v3482 = vsub.f32 %v3442, %v3474
        %v3483 = vsub.f32 %v3443, %v3475
        %v3484 = vsub.f32 %v3444, %v3476
        %v3485 = vsub.f32 %v3445, %v3477
        %v3486 = vsub.f32 %v3446, %v3478
        %v3487 = vsub.f32 %v3447, %v3479
        %v3488 = vmul.f32 %v3480, %v3480
        %v3489 = vmul.f32 %v3481, %v3481
        %v3490 = vmul.f32 %v3482, %v3482
        %v3491 = vmul.f32 %v3483, %v3483
        %v3492 = vmul.f32 %v3484, %v3484
        %v3493 = vmul.f32 %v3485, %v3485
        %v3494 = vmul.f32 %v3486, %v3486
        %v3495 = vmul.f32 %v3487, %v3487
        %v3496 = vsel %vm696, %v3488, 0.0
        %3497 = vadd.xlane.f32.xlu0 %v3496
        %v3498 = vpop.xlane.xlu0 %3497
        %v3499 = vsel %vm696, %v3489, 0.0
        %3500 = vadd.xlane.f32.xlu0 %v3499
        %v3501 = vpop.xlane.xlu0 %3500
        %v3502 = vsel %vm696, %v3490, 0.0
        %3503 = vadd.xlane.f32.xlu0 %v3502
        %v3504 = vpop.xlane.xlu0 %3503
        %v3505 = vsel %vm696, %v3491, 0.0
        %3506 = vadd.xlane.f32.xlu0 %v3505
        %v3507 = vpop.xlane.xlu0 %3506
        %v3508 = vsel %vm696, %v3492, 0.0
        %3509 = vadd.xlane.f32.xlu0 %v3508
        %v3510 = vpop.xlane.xlu0 %3509
        %v3511 = vsel %vm696, %v3493, 0.0
        %3512 = vadd.xlane.f32.xlu0 %v3511
        %v3513 = vpop.xlane.xlu0 %3512
        %v3514 = vsel %vm696, %v3494, 0.0
        %3515 = vadd.xlane.f32.xlu0 %v3514
        %v3516 = vpop.xlane.xlu0 %3515
        %v3517 = vsel %vm696, %v3495, 0.0
        %3518 = vadd.xlane.f32.xlu0 %v3517
        %v3519 = vpop.xlane.xlu0 %3518
        %v3520 = vmul.f32 %v3498, %v3046
        %v3521 = vmul.f32 %v3501, %v3046
        %v3522 = vmul.f32 %v3504, %v3046
        %v3523 = vmul.f32 %v3507, %v3046
        %v3524 = vmul.f32 %v3510, %v3046
        %v3525 = vmul.f32 %v3513, %v3046
        %v3526 = vmul.f32 %v3516, %v3046
        %v3527 = vmul.f32 %v3519, %v3046
        %v3528 = vadd.f32 %v3520, 1e-05
        %v3529 = vadd.f32 %v3521, 1e-05
        %v3530 = vadd.f32 %v3522, 1e-05
        %v3531 = vadd.f32 %v3523, 1e-05
        %v3532 = vadd.f32 %v3524, 1e-05
        %v3533 = vadd.f32 %v3525, 1e-05
        %v3534 = vadd.f32 %v3526, 1e-05
        %v3535 = vadd.f32 %v3527, 1e-05
        %v3536 = vrsqrt.pop %v3528
        %v3537 = vrsqrt.pop %v3529
        %v3538 = vrsqrt.pop %v3530
        %v3539 = vrsqrt.pop %v3531
        %v3540 = vrsqrt.pop %v3532
        %v3541 = vrsqrt.pop %v3533
        %v3542 = vrsqrt.pop %v3534
        %v3543 = vrsqrt.pop %v3535
        %v3544 = vmul.f32 %v3480, %v3536
        %v3545 = vmul.f32 %v3481, %v3537
        %v3546 = vmul.f32 %v3482, %v3538
        %v3547 = vmul.f32 %v3483, %v3539
        %v3548 = vmul.f32 %v3484, %v3540
        %v3549 = vmul.f32 %v3485, %v3541
        %v3550 = vmul.f32 %v3486, %v3542
        %v3551 = vmul.f32 %v3487, %v3543
        %v3552 = vlaneseq
        %v3553 = vshrl.u32 %v3552, 7
        %v3554 = vsub.s32 0, %v3553
        %v3555 = vrot.slane %v682, %v3554
        %v3556 = vmul.f32 %v3544, %v3555
        %v3557 = vmul.f32 %v3545, %v3555
        %v3558 = vmul.f32 %v3546, %v3555
        %v3559 = vmul.f32 %v3547, %v3555
        %v3560 = vmul.f32 %v3548, %v3555
        %v3561 = vmul.f32 %v3549, %v3555
        %v3562 = vmul.f32 %v3550, %v3555
        %v3563 = vmul.f32 %v3551, %v3555
        %v3564 = vlaneseq
        %v3565 = vshrl.u32 %v3564, 7
        %v3566 = vsub.s32 0, %v3565
        %v3567 = vrot.slane %v683, %v3566
        %v3568 = vadd.f32 %v3556, %v3567
        %v3569 = vadd.f32 %v3557, %v3567
        %v3570 = vadd.f32 %v3558, %v3567
        %v3571 = vadd.f32 %v3559, %v3567
        %v3572 = vadd.f32 %v3560, %v3567
        %v3573 = vadd.f32 %v3561, %v3567
        %v3574 = vadd.f32 %v3562, %v3567
        %v3575 = vadd.f32 %v3563, %v3567
        %3576 = vxpose.xlu0.b32.start [1/16] %v3568, 128
        %3577 = vxpose.xlu0.b32.cont [2/16] %v3569, 128
        %3578 = vxpose.xlu0.b32.cont [3/16] %v3570, 128
        %3579 = vxpose.xlu0.b32.cont [4/16] %v3571, 128
        %3580 = vxpose.xlu0.b32.cont [5/16] %v3572, 128
        %3581 = vxpose.xlu0.b32.cont [6/16] %v3573, 128
        %3582 = vxpose.xlu0.b32.cont [7/16] %v3574, 128
        %3583 = vxpose.xlu0.b32.cont [8/16] %v3575, 128
        %3584 = vxpose.xlu0.b32.cont [9/16] 0.0, 128
        %3585 = vxpose.xlu0.b32.cont [10/16] 0.0, 128
        %3586 = vxpose.xlu0.b32.cont [11/16] 0.0, 128
        %3587 = vxpose.xlu0.b32.cont [12/16] 0.0, 128
        %3588 = vxpose.xlu0.b32.cont [13/16] 0.0, 128
        %3589 = vxpose.xlu0.b32.cont [14/16] 0.0, 128
        %3590 = vxpose.xlu0.b32.cont [15/16] 0.0, 128
        %3591 = vxpose.xlu0.b32.end [16/16] 0.0, 128
        %v3592 = vpop.trf.xlu0
        %v3593 = vpop.trf.xlu0
        %v3594 = vpop.trf.xlu0
        %v3595 = vpop.trf.xlu0
        %v3596 = vpop.trf.xlu0
        %v3597 = vpop.trf.xlu0
        %v3598 = vpop.trf.xlu0
        %v3599 = vpop.trf.xlu0
        %v3600 = vpop.trf.xlu0
        %v3601 = vpop.trf.xlu0
        %v3602 = vpop.trf.xlu0
        %v3603 = vpop.trf.xlu0
        %v3604 = vpop.trf.xlu0
        %v3605 = vpop.trf.xlu0
        %v3606 = vpop.trf.xlu0
        %v3607 = vpop.trf.xlu0
        %3608 = vst.msk [vmem:[%s511] sm:$0xff] %vm1262, %v3592
        %3609 = vst.msk [vmem:[%s511 + $0x8] sm:$0xff] %vm1262, %v3593
        %3610 = vst.msk [vmem:[%s511 + $0x10] sm:$0xff] %vm1262, %v3594
        %3611 = vst.msk [vmem:[%s511 + $0x18] sm:$0xff] %vm1262, %v3595
        %s3612 = sand.u32 %s258, 1
        %s3613 = scalar_lea.sflag [#allocation5], %s3612
        %s3614 = sand.u32 %s258, 1
        %s3615 = smul.addr %s3614, 32
        %s3616 = scalar_lea.vmem [#allocation18], %s3615
        // Predicated region
        $region93: #{tpu_custom_call.1} parent=55 // pred_check
          %p3617 = pneg %p268
        $region94: #{tpu_custom_call.1} parent=55 // pred_check_branch
          %3619 = sbr.rel (%p3617) target = $region96
        $region95: #{tpu_custom_call.1} parent=55 // pred_region
          %s3621 = ssub.s32 512, 512
          %3622 = vsyncadd %s3613, %s3621
          %s3623 = smul.addr %s34, 4
          %s3624 = sadd.s32 %s35, %s3623
          %s3625 = smul.addr %s3624, 128
          %s3626 = scalar_lea.hbm %s9, %s3625
          %s3627 = sshll.u32 %s3616, 4
          %s3628 = int_to_ptr.vmem [resolvable:$true] %s3627
          %3633 = dma.vmem_to_hbm [thread:$0]  %s3628, 512, %s3626, %s3613, 128, 128, 8
        $region96: #{tpu_custom_call.1} parent=55 // pred_fallthru
          _
      $region56: #{tpu_custom_call.1} parent=5 // pred_fallthru
        _
      %p3634 = scmp.le.s32.totalorder 2, %s25
      // Predicated region
      $region97: #{tpu_custom_call.1} parent=5 // pred_check
        %p3635 = pneg %p3634
      $region98: #{tpu_custom_call.1} parent=5 // pred_check_branch
        %3637 = sbr.rel (%p3635) target = $region100
      $region99: #{tpu_custom_call.1} parent=5 // pred_region
        %s3638 = ssub.s32 %s25, 2
        // Predicated region
        $region101: #{tpu_custom_call.1} parent=99 // pred_check
          %p3639 = pneg %p274
        $region102: #{tpu_custom_call.1} parent=99 // pred_check_branch
          %3641 = sbr.rel (%p3639) target = $region104
        $region103: #{tpu_custom_call.1} parent=99 // pred_region
          %s3642 = sand.u32 %s259, 1
          %s3643 = scalar_lea.sflag [#allocation5], %s3642
          %s3644 = sand.u32 %s259, 1
          %s3645 = smul.addr %s3644, 32
          %s3646 = scalar_lea.vmem [#allocation18], %s3645
          %3647 = dma.done %s3643, 512
        $region104: #{tpu_custom_call.1} parent=99 // pred_fallthru
          _
      $region100: #{tpu_custom_call.1} parent=5 // pred_fallthru
        _
    $region6: #{tpu_custom_call.1} parent=1 // loop_footer
      %s29 = sadd.s32 1, %s25
    $region7: #{tpu_custom_call.1} parent=1 // loop_footer_branch
      %24 = sbr.rel target = $region3
    $region8: #{tpu_custom_call.1} parent=1 // loop_exit
      _
    %3648 = vsyncpa [#allocation4], 1
    %s3649 = scalar_lea.sflag [#allocation4], 1
    %3650 = vsyncpa %s3649, 1
    %3651 = vsyncpa [#allocation7], 1
    %3652 = vsyncpa [#allocation11], 1
    %3653 = vsyncpa [#allocation14], 1
    %3654 = vsyncpa [#allocation17], 1
    %3655 = vsyncpa [#allocation5], 1
    %s3656 = scalar_lea.sflag [#allocation5], 1
    %3657 = vsyncpa %s3656, 1

</llo_original>
